<compile_context>
chip_gen: v7x
topology: tpu7x:2x2x1
jax: 0.10.0
libtpu: 0.0.40
codegen_flags: <defaults>
</compile_context>

<pallas_src>
import functools

import jax
import jax.numpy as jnp
import numpy as np
from jax.experimental import pallas as pl
from jax.experimental.pallas import tpu as pltpu

_LANE = 128  # vreg/MXU lane width: output channels are lane-padded to this


def _round_up(x, m):
    return (x + m - 1) // m * m


def _conv_rowtile_kernel(x_ref, w_ref, b_ref, o_ref, tap_ref, *,
                         KH, KW, Cout, th, Wout, stride, dilation, apply_relu):
    """One (batch element, output-row-tile) step of conv + bias (+ ReLU).

    x_ref:   (1, Hp, Wp, Cin)  bf16  whole padded image of this batch element;
                                     index_map is invariant over the row-tile
                                     axis, so it is DMA'd from HBM once/image.
    w_ref:   (KH*KW, Cin, Np)  bf16  tap-major weights (grid-invariant).
    b_ref:   (1, Np)           f32   bias, lane-padded with zeros.
    o_ref:   (1, th*Wout, Cout)      output rows [r*th, (r+1)*th), channels
                                     stored UNPADDED in the final dtype.
    tap_ref: (th*Wout, Cin)    bf16  VMEM scratch: one tap's im2col rows.
    """
    r = pl.program_id(1)
    row0 = pl.multiple_of(r * (th * stride), th * stride)
    Np = w_ref.shape[-1]

    acc = jnp.zeros((th * Wout, Np), jnp.float32)
    for kh in range(KH):
        for kw in range(KW):
            h0 = kh * dilation
            w0 = kw * dilation
            wsl = pl.ds(w0, Wout) if stride == 1 else pl.ds(w0, Wout, stride)
            # Build this tap's (th*Wout, Cin) im2col rows in VMEM (no HBM traffic).
            for i in range(th):
                tap_ref[pl.ds(i * Wout, Wout), :] = x_ref[
                    0, row0 + h0 + i * stride, wsl, :]
            acc = acc + jnp.dot(tap_ref[...], w_ref[kh * KW + kw],
                                preferred_element_type=jnp.float32)

    acc = acc + b_ref[...]                 # f32 epilogue (v5e: no bf16 VALU)
    if apply_relu:
        acc = jnp.maximum(acc, 0.0)
    # TODO(synk): NL='prelu' (learned slope) and bn=True (BatchNorm2d) branches
    # of the module are not instantiated here (module defaults: relu, bn=False).
    o_ref[0, :, :] = acc[:, :Cout].astype(o_ref.dtype)


def _pick_row_tile(Hout, Wout, B, Np, *, acc_budget_bytes=6 << 20,
                   target_steps=4, min_rows_per_step=64):
    """Output rows computed per grid step (th | Hout; (th*Wout)%8==0 or th==Hout)."""
    def legal(t):
        return t >= 1 and Hout % t == 0 and (t == Hout or (t * Wout) % 8 == 0)

    th = Hout
    # (a) bound the live f32 accumulator (th*Wout, Np)
    while th > 1 and th * Wout * Np * 4 > acc_budget_bytes:
        smaller = next((c for c in range(th // 2, 0, -1) if legal(c)), None)
        if smaller is None:
            break
        th = smaller
    # (b) expose >= target_steps grid steps for 2-TC megacore (v7x) when cheap
    while (B * (Hout // th) < target_steps and th % 2 == 0 and legal(th // 2)
           and (th // 2) * Wout >= min_rows_per_step):
        th //= 2
    return th


def _pallas_vmem_limit(Hp, Wp, Cin, T, Np, th, Wout, Cout, out_bytes):
    """vmem_limit_bytes sized from the actual per-step footprint."""
    bf16 = 2
    est = (2 * Hp * Wp * Cin * bf16            # image block (double-buffered)
           + 2 * T * Cin * Np * bf16           # weights (invariant; x2 to be safe)
           + 2 * Np * 4                        # bias
           + 2 * th * Wout * Cout * out_bytes  # output block (double-buffered)
           + th * Wout * Np * 4                # f32 accumulator
           + th * Wout * Cin * bf16            # tap scratch
           + (1 << 20))                        # compiler scratch slack
    try:
        cap = int(pltpu.get_tpu_info().vmem_capacity_bytes * 3 // 4)
    except Exception:                          # info query unavailable
        cap = 48 * 1024 * 1024                 # safe on v7x (64 MiB physical)
    return int(min(cap, max(16 * 1024 * 1024, 2 * est)))


def conv2d_module_forward(x_nchw, weight_oihw, bias, *, stride=1, NL='relu',
                          same_padding=False, dilation=1,
                          compute_dtype=jnp.bfloat16):
    """Forward pass of the PyTorch Conv2d wrapper module (bn=False)."""
    B, Cin, H, W = x_nchw.shape
    Cout, Cin_w, KH, KW = weight_oihw.shape
    assert Cin == Cin_w

    # Padding exactly as the PyTorch module computes it (square kernel_size).
    if dilation == 1:
        pad = (KH - 1) // 2 if same_padding else 0
    else:
        pad = dilation
    Hout = (H + 2 * pad - dilation * (KH - 1) - 1) // stride + 1
    Wout = (W + 2 * pad - dilation * (KW - 1) - 1) // stride + 1
    Hp, Wp = H + 2 * pad, W + 2 * pad

    out_dtype = x_nchw.dtype
    Np = _round_up(Cout, _LANE)
    T = KH * KW

    # ---- wrapper glue (no im2col / no M padding in HBM) ----------------------
    # TODO(synk): keep activations NHWC end-to-end when the surrounding model
    # allows it; the two transposes here exist only because the module API is NCHW.
    x_pad = jnp.pad(jnp.transpose(x_nchw, (0, 2, 3, 1)).astype(compute_dtype),
                    ((0, 0), (pad, pad), (pad, pad), (0, 0)))        # (B,Hp,Wp,Cin)

    # weight OIHW -> (KH,KW,Cin,Cout) -> tap-major (T, Cin, Np), lane-padded Cout
    w_taps = jnp.transpose(weight_oihw, (2, 3, 1, 0)).reshape(T, Cin, Cout)
    w_taps = jnp.pad(w_taps, ((0, 0), (0, 0), (0, Np - Cout))).astype(compute_dtype)
    b2d = jnp.pad(bias, (0, Np - Cout)).reshape(1, Np).astype(jnp.float32)

    th = _pick_row_tile(Hout, Wout, B, Np)
    n_r = Hout // th

    kernel = functools.partial(
        _conv_rowtile_kernel, KH=KH, KW=KW, Cout=Cout, th=th, Wout=Wout,
        stride=stride, dilation=dilation, apply_relu=(NL == 'relu'))

    # NOTE: weight/bias index maps are constant -> fetched once across the grid;
    # they are still budgeted x2 in the VMEM estimate to stay conservative.
    # TODO(synk): for very large images, row-tile the input with manual halo DMA
    # (pl.ANY + pltpu.make_async_copy); for very large Cin/Cout (v7x 64 MiB VMEM),
    # add channel-block (K/N) grid axes with an f32 VMEM accumulator.
    out = pl.pallas_call(
        kernel,
        out_shape=jax.ShapeDtypeStruct((B, Hout * Wout, Cout), out_dtype),
        grid=(B, n_r),
        in_specs=[
            pl.BlockSpec((1, Hp, Wp, Cin), lambda b, r: (b, 0, 0, 0)),  # image
            pl.BlockSpec((T, Cin, Np), lambda b, r: (0, 0, 0)),         # weights
            pl.BlockSpec((1, Np), lambda b, r: (0, 0)),                 # bias
        ],
        out_specs=pl.BlockSpec((1, th * Wout, Cout), lambda b, r: (b, r, 0)),
        scratch_shapes=[pltpu.VMEM((th * Wout, Cin), compute_dtype)],
        compiler_params=pltpu.CompilerParams(
            dimension_semantics=("parallel", "parallel"),
            vmem_limit_bytes=_pallas_vmem_limit(
                Hp, Wp, Cin, T, Np, th, Wout, Cout,
                jnp.dtype(out_dtype).itemsize)),
    )(x_pad, w_taps, b2d)

    out = out.reshape(B, Hout, Wout, Cout)
    return jnp.transpose(out, (0, 3, 1, 2))                         # back to NCHW


if __name__ == "__main__":
    # Module config: Conv2d(in_channels=4, out_channels=8, kernel_size=3,
    #                       stride=1, NL='relu', same_padding=True, bn=False)
    B, Cin, H, W = 2, 4, 16, 16
    Cout, K = 8, 3

    key = jax.random.PRNGKey(0)
    kx, kw, kb = jax.random.split(key, 3)
    x = jax.random.normal(kx, (B, Cin, H, W), dtype=jnp.float32)
    fan_in = Cin * K * K
    bound = 1.0 / np.sqrt(fan_in)
    weight = jax.random.uniform(kw, (Cout, Cin, K, K), jnp.float32, -bound, bound)
    bias = jax.random.uniform(kb, (Cout,), jnp.float32, -bound, bound)

    y = conv2d_module_forward(x, weight, bias, stride=1, NL='relu',
                              same_padding=True, dilation=1)
    y = jax.block_until_ready(y)

    # Reference: f32 conv of the same bf16-rounded operands (kernel does bf16
    # products with f32 accumulation; differences are f32 summation order only).
    pad = (K - 1) // 2
    xr = x.astype(jnp.bfloat16).astype(jnp.float32)
    wr = weight.astype(jnp.bfloat16).astype(jnp.float32)
    y_ref = jax.lax.conv_general_dilated(
        xr, wr, window_strides=(1, 1), padding=((pad, pad), (pad, pad)),
        dimension_numbers=("NCHW", "OIHW", "NCHW"),
        precision=jax.lax.Precision.HIGHEST)
    y_ref = jnp.maximum(y_ref + bias[None, :, None, None], 0.0)
    np.testing.assert_allclose(np.asarray(y), np.asarray(y_ref),
                               rtol=1e-4, atol=1e-4)

    print("KERNEL_OK")
</pallas_src>

<mosaic_0001>
module attributes {stable_mosaic.version = 11 : i64} {
  func.func @_conv_rowtile_kernel(%arg0: i32, %arg1: i32, %arg2: memref<1x18x18x4xbf16, #tpu.memory_space<vmem>>, %arg3: memref<9x4x128xbf16, #tpu.memory_space<vmem>>, %arg4: memref<1x128xf32, #tpu.memory_space<vmem>>, %arg5: memref<1x128x8xf32, #tpu.memory_space<vmem>>, %arg6: memref<128x4xbf16, #tpu.memory_space<vmem>>) attributes {dimension_semantics = [#tpu.dimension_semantics<parallel>, #tpu.dimension_semantics<parallel>], iteration_bounds = array<i64: 2, 2>, scalar_prefetch = 0 : i64, scratch_operands = 1 : i64, tpu.core_type = #tpu.core_type<tc>, window_params = [{transform_indices = @transform_0, window_bounds = array<i64: 1, 18, 18, 4>}, {pipeline_mode = #tpu.pipeline_mode<synchronous>, transform_indices = @transform_1, window_bounds = array<i64: 9, 4, 128>}, {pipeline_mode = #tpu.pipeline_mode<synchronous>, transform_indices = @transform_2, window_bounds = array<i64: 1, 128>}, {transform_indices = @transform_3, window_bounds = array<i64: 1, 128, 8>}]} {
    %c8_i32 = arith.constant 8 : i32
    %0 = arith.muli %arg1, %c8_i32 : i32
    %1 = tpu.assume_multiple %0, 8 : i32
    %cst = arith.constant 0.000000e+00 : f32
    %2 = vector.broadcast %cst : f32 to vector<128x128xf32>
    %c0_i32 = arith.constant 0 : i32
    %3 = arith.addi %1, %c0_i32 : i32
    %c0_i32_0 = arith.constant 0 : i32
    %4 = arith.addi %3, %c0_i32_0 : i32
    %c0 = arith.constant 0 : index
    %5 = arith.index_cast %4 : i32 to index
    %c0_1 = arith.constant 0 : index
    %c0_2 = arith.constant 0 : index
    %6 = vector.load %arg2[%c0, %5, %c0_1, %c0_2] : memref<1x18x18x4xbf16, #tpu.memory_space<vmem>>, vector<1x1x16x4xbf16>
    %7 = vector.shape_cast %6 : vector<1x1x16x4xbf16> to vector<16x4xbf16>
    %c0_3 = arith.constant 0 : index
    %c0_4 = arith.constant 0 : index
    %8 = vector.load %arg6[%c0_3, %c0_4] : memref<128x4xbf16, #tpu.memory_space<vmem>>, vector<16x4xbf16>
    tpu.vector_store %arg6[%c0_3, %c0_4], %7 {strides = array<i32>} : memref<128x4xbf16, #tpu.memory_space<vmem>>, vector<16x4xbf16>,
    %c0_i32_5 = arith.constant 0 : i32
    %9 = arith.addi %1, %c0_i32_5 : i32
    %c1_i32 = arith.constant 1 : i32
    %10 = arith.addi %9, %c1_i32 : i32
    %c0_6 = arith.constant 0 : index
    %11 = arith.index_cast %10 : i32 to index
    %c0_7 = arith.constant 0 : index
    %c0_8 = arith.constant 0 : index
    %12 = vector.load %arg2[%c0_6, %11, %c0_7, %c0_8] : memref<1x18x18x4xbf16, #tpu.memory_space<vmem>>, vector<1x1x16x4xbf16>
    %13 = vector.shape_cast %12 : vector<1x1x16x4xbf16> to vector<16x4xbf16>
    %c16 = arith.constant 16 : index
    %c0_9 = arith.constant 0 : index
    %14 = vector.load %arg6[%c16, %c0_9] : memref<128x4xbf16, #tpu.memory_space<vmem>>, vector<16x4xbf16>
    tpu.vector_store %arg6[%c16, %c0_9], %13 {strides = array<i32>} : memref<128x4xbf16, #tpu.memory_space<vmem>>, vector<16x4xbf16>,
    %c0_i32_10 = arith.constant 0 : i32
    %15 = arith.addi %1, %c0_i32_10 : i32
    %c2_i32 = arith.constant 2 : i32
    %16 = arith.addi %15, %c2_i32 : i32
    %c0_11 = arith.constant 0 : index
    %17 = arith.index_cast %16 : i32 to index
    %c0_12 = arith.constant 0 : index
    %c0_13 = arith.constant 0 : index
    %18 = vector.load %arg2[%c0_11, %17, %c0_12, %c0_13] : memref<1x18x18x4xbf16, #tpu.memory_space<vmem>>, vector<1x1x16x4xbf16>
    %19 = vector.shape_cast %18 : vector<1x1x16x4xbf16> to vector<16x4xbf16>
    %c32 = arith.constant 32 : index
    %c0_14 = arith.constant 0 : index
    %20 = vector.load %arg6[%c32, %c0_14] : memref<128x4xbf16, #tpu.memory_space<vmem>>, vector<16x4xbf16>
    tpu.vector_store %arg6[%c32, %c0_14], %19 {strides = array<i32>} : memref<128x4xbf16, #tpu.memory_space<vmem>>, vector<16x4xbf16>,
    %c0_i32_15 = arith.constant 0 : i32
    %21 = arith.addi %1, %c0_i32_15 : i32
    %c3_i32 = arith.constant 3 : i32
    %22 = arith.addi %21, %c3_i32 : i32
    %c0_16 = arith.constant 0 : index
    %23 = arith.index_cast %22 : i32 to index
    %c0_17 = arith.constant 0 : index
    %c0_18 = arith.constant 0 : index
    %24 = vector.load %arg2[%c0_16, %23, %c0_17, %c0_18] : memref<1x18x18x4xbf16, #tpu.memory_space<vmem>>, vector<1x1x16x4xbf16>
    %25 = vector.shape_cast %24 : vector<1x1x16x4xbf16> to vector<16x4xbf16>
    %c48 = arith.constant 48 : index
    %c0_19 = arith.constant 0 : index
    %26 = vector.load %arg6[%c48, %c0_19] : memref<128x4xbf16, #tpu.memory_space<vmem>>, vector<16x4xbf16>
    tpu.vector_store %arg6[%c48, %c0_19], %25 {strides = array<i32>} : memref<128x4xbf16, #tpu.memory_space<vmem>>, vector<16x4xbf16>,
    %c0_i32_20 = arith.constant 0 : i32
    %27 = arith.addi %1, %c0_i32_20 : i32
    %c4_i32 = arith.constant 4 : i32
    %28 = arith.addi %27, %c4_i32 : i32
    %c0_21 = arith.constant 0 : index
    %29 = arith.index_cast %28 : i32 to index
    %c0_22 = arith.constant 0 : index
    %c0_23 = arith.constant 0 : index
    %30 = vector.load %arg2[%c0_21, %29, %c0_22, %c0_23] : memref<1x18x18x4xbf16, #tpu.memory_space<vmem>>, vector<1x1x16x4xbf16>
    %31 = vector.shape_cast %30 : vector<1x1x16x4xbf16> to vector<16x4xbf16>
    %c64 = arith.constant 64 : index
    %c0_24 = arith.constant 0 : index
    %32 = vector.load %arg6[%c64, %c0_24] : memref<128x4xbf16, #tpu.memory_space<vmem>>, vector<16x4xbf16>
    tpu.vector_store %arg6[%c64, %c0_24], %31 {strides = array<i32>} : memref<128x4xbf16, #tpu.memory_space<vmem>>, vector<16x4xbf16>,
    %c0_i32_25 = arith.constant 0 : i32
    %33 = arith.addi %1, %c0_i32_25 : i32
    %c5_i32 = arith.constant 5 : i32
    %34 = arith.addi %33, %c5_i32 : i32
    %c0_26 = arith.constant 0 : index
    %35 = arith.index_cast %34 : i32 to index
    %c0_27 = arith.constant 0 : index
    %c0_28 = arith.constant 0 : index
    %36 = vector.load %arg2[%c0_26, %35, %c0_27, %c0_28] : memref<1x18x18x4xbf16, #tpu.memory_space<vmem>>, vector<1x1x16x4xbf16>
    %37 = vector.shape_cast %36 : vector<1x1x16x4xbf16> to vector<16x4xbf16>
    %c80 = arith.constant 80 : index
    %c0_29 = arith.constant 0 : index
    %38 = vector.load %arg6[%c80, %c0_29] : memref<128x4xbf16, #tpu.memory_space<vmem>>, vector<16x4xbf16>
    tpu.vector_store %arg6[%c80, %c0_29], %37 {strides = array<i32>} : memref<128x4xbf16, #tpu.memory_space<vmem>>, vector<16x4xbf16>,
    %c0_i32_30 = arith.constant 0 : i32
    %39 = arith.addi %1, %c0_i32_30 : i32
    %c6_i32 = arith.constant 6 : i32
    %40 = arith.addi %39, %c6_i32 : i32
    %c0_31 = arith.constant 0 : index
    %41 = arith.index_cast %40 : i32 to index
    %c0_32 = arith.constant 0 : index
    %c0_33 = arith.constant 0 : index
    %42 = vector.load %arg2[%c0_31, %41, %c0_32, %c0_33] : memref<1x18x18x4xbf16, #tpu.memory_space<vmem>>, vector<1x1x16x4xbf16>
    %43 = vector.shape_cast %42 : vector<1x1x16x4xbf16> to vector<16x4xbf16>
    %c96 = arith.constant 96 : index
    %c0_34 = arith.constant 0 : index
    %44 = vector.load %arg6[%c96, %c0_34] : memref<128x4xbf16, #tpu.memory_space<vmem>>, vector<16x4xbf16>
    tpu.vector_store %arg6[%c96, %c0_34], %43 {strides = array<i32>} : memref<128x4xbf16, #tpu.memory_space<vmem>>, vector<16x4xbf16>,
    %c0_i32_35 = arith.constant 0 : i32
    %45 = arith.addi %1, %c0_i32_35 : i32
    %c7_i32 = arith.constant 7 : i32
    %46 = arith.addi %45, %c7_i32 : i32
    %c0_36 = arith.constant 0 : index
    %47 = arith.index_cast %46 : i32 to index
    %c0_37 = arith.constant 0 : index
    %c0_38 = arith.constant 0 : index
    %48 = vector.load %arg2[%c0_36, %47, %c0_37, %c0_38] : memref<1x18x18x4xbf16, #tpu.memory_space<vmem>>, vector<1x1x16x4xbf16>
    %49 = vector.shape_cast %48 : vector<1x1x16x4xbf16> to vector<16x4xbf16>
    %c112 = arith.constant 112 : index
    %c0_39 = arith.constant 0 : index
    %50 = vector.load %arg6[%c112, %c0_39] : memref<128x4xbf16, #tpu.memory_space<vmem>>, vector<16x4xbf16>
    tpu.vector_store %arg6[%c112, %c0_39], %49 {strides = array<i32>} : memref<128x4xbf16, #tpu.memory_space<vmem>>, vector<16x4xbf16>,
    %c0_40 = arith.constant 0 : index
    %c0_41 = arith.constant 0 : index
    %51 = vector.load %arg6[%c0_40, %c0_41] : memref<128x4xbf16, #tpu.memory_space<vmem>>, vector<128x4xbf16>
    %c0_42 = arith.constant 0 : index
    %c0_43 = arith.constant 0 : index
    %c0_44 = arith.constant 0 : index
    %52 = vector.load %arg3[%c0_42, %c0_43, %c0_44] : memref<9x4x128xbf16, #tpu.memory_space<vmem>>, vector<1x4x128xbf16>
    %53 = vector.shape_cast %52 : vector<1x4x128xbf16> to vector<4x128xbf16>
    %cst_45 = arith.constant dense<0.000000e+00> : vector<128x128xf32>
    %54 = tpu.matmul %51, %53, %cst_45 {dimension_numbers = #tpu.dot_dimension_numbers<[1], [0], [0], [1], [0, 0, 1, 1], [], []>} : vector<128x4xbf16>, vector<4x128xbf16>, vector<128x128xf32> -> vector<128x128xf32>
    %55 = arith.addf %2, %54 : vector<128x128xf32>
    %c0_i32_46 = arith.constant 0 : i32
    %56 = arith.addi %1, %c0_i32_46 : i32
    %c0_i32_47 = arith.constant 0 : i32
    %57 = arith.addi %56, %c0_i32_47 : i32
    %c0_48 = arith.constant 0 : index
    %58 = arith.index_cast %57 : i32 to index
    %c1 = arith.constant 1 : index
    %c0_49 = arith.constant 0 : index
    %59 = vector.load %arg2[%c0_48, %58, %c1, %c0_49] : memref<1x18x18x4xbf16, #tpu.memory_space<vmem>>, vector<1x1x16x4xbf16>
    %60 = vector.shape_cast %59 : vector<1x1x16x4xbf16> to vector<16x4xbf16>
    %c0_50 = arith.constant 0 : index
    %c0_51 = arith.constant 0 : index
    %61 = vector.load %arg6[%c0_50, %c0_51] : memref<128x4xbf16, #tpu.memory_space<vmem>>, vector<16x4xbf16>
    tpu.vector_store %arg6[%c0_50, %c0_51], %60 {strides = array<i32>} : memref<128x4xbf16, #tpu.memory_space<vmem>>, vector<16x4xbf16>,
    %c0_i32_52 = arith.constant 0 : i32
    %62 = arith.addi %1, %c0_i32_52 : i32
    %c1_i32_53 = arith.constant 1 : i32
    %63 = arith.addi %62, %c1_i32_53 : i32
    %c0_54 = arith.constant 0 : index
    %64 = arith.index_cast %63 : i32 to index
    %c1_55 = arith.constant 1 : index
    %c0_56 = arith.constant 0 : index
    %65 = vector.load %arg2[%c0_54, %64, %c1_55, %c0_56] : memref<1x18x18x4xbf16, #tpu.memory_space<vmem>>, vector<1x1x16x4xbf16>
    %66 = vector.shape_cast %65 : vector<1x1x16x4xbf16> to vector<16x4xbf16>
    %c16_57 = arith.constant 16 : index
    %c0_58 = arith.constant 0 : index
    %67 = vector.load %arg6[%c16_57, %c0_58] : memref<128x4xbf16, #tpu.memory_space<vmem>>, vector<16x4xbf16>
    tpu.vector_store %arg6[%c16_57, %c0_58], %66 {strides = array<i32>} : memref<128x4xbf16, #tpu.memory_space<vmem>>, vector<16x4xbf16>,
    %c0_i32_59 = arith.constant 0 : i32
    %68 = arith.addi %1, %c0_i32_59 : i32
    %c2_i32_60 = arith.constant 2 : i32
    %69 = arith.addi %68, %c2_i32_60 : i32
    %c0_61 = arith.constant 0 : index
    %70 = arith.index_cast %69 : i32 to index
    %c1_62 = arith.constant 1 : index
    %c0_63 = arith.constant 0 : index
    %71 = vector.load %arg2[%c0_61, %70, %c1_62, %c0_63] : memref<1x18x18x4xbf16, #tpu.memory_space<vmem>>, vector<1x1x16x4xbf16>
    %72 = vector.shape_cast %71 : vector<1x1x16x4xbf16> to vector<16x4xbf16>
    %c32_64 = arith.constant 32 : index
    %c0_65 = arith.constant 0 : index
    %73 = vector.load %arg6[%c32_64, %c0_65] : memref<128x4xbf16, #tpu.memory_space<vmem>>, vector<16x4xbf16>
    tpu.vector_store %arg6[%c32_64, %c0_65], %72 {strides = array<i32>} : memref<128x4xbf16, #tpu.memory_space<vmem>>, vector<16x4xbf16>,
    %c0_i32_66 = arith.constant 0 : i32
    %74 = arith.addi %1, %c0_i32_66 : i32
    %c3_i32_67 = arith.constant 3 : i32
    %75 = arith.addi %74, %c3_i32_67 : i32
    %c0_68 = arith.constant 0 : index
    %76 = arith.index_cast %75 : i32 to index
    %c1_69 = arith.constant 1 : index
    %c0_70 = arith.constant 0 : index
    %77 = vector.load %arg2[%c0_68, %76, %c1_69, %c0_70] : memref<1x18x18x4xbf16, #tpu.memory_space<vmem>>, vector<1x1x16x4xbf16>
    %78 = vector.shape_cast %77 : vector<1x1x16x4xbf16> to vector<16x4xbf16>
    %c48_71 = arith.constant 48 : index
    %c0_72 = arith.constant 0 : index
    %79 = vector.load %arg6[%c48_71, %c0_72] : memref<128x4xbf16, #tpu.memory_space<vmem>>, vector<16x4xbf16>
    tpu.vector_store %arg6[%c48_71, %c0_72], %78 {strides = array<i32>} : memref<128x4xbf16, #tpu.memory_space<vmem>>, vector<16x4xbf16>,
    %c0_i32_73 = arith.constant 0 : i32
    %80 = arith.addi %1, %c0_i32_73 : i32
    %c4_i32_74 = arith.constant 4 : i32
    %81 = arith.addi %80, %c4_i32_74 : i32
    %c0_75 = arith.constant 0 : index
    %82 = arith.index_cast %81 : i32 to index
    %c1_76 = arith.constant 1 : index
    %c0_77 = arith.constant 0 : index
    %83 = vector.load %arg2[%c0_75, %82, %c1_76, %c0_77] : memref<1x18x18x4xbf16, #tpu.memory_space<vmem>>, vector<1x1x16x4xbf16>
    %84 = vector.shape_cast %83 : vector<1x1x16x4xbf16> to vector<16x4xbf16>
    %c64_78 = arith.constant 64 : index
    %c0_79 = arith.constant 0 : index
    %85 = vector.load %arg6[%c64_78, %c0_79] : memref<128x4xbf16, #tpu.memory_space<vmem>>, vector<16x4xbf16>
    tpu.vector_store %arg6[%c64_78, %c0_79], %84 {strides = array<i32>} : memref<128x4xbf16, #tpu.memory_space<vmem>>, vector<16x4xbf16>,
    %c0_i32_80 = arith.constant 0 : i32
    %86 = arith.addi %1, %c0_i32_80 : i32
    %c5_i32_81 = arith.constant 5 : i32
    %87 = arith.addi %86, %c5_i32_81 : i32
    %c0_82 = arith.constant 0 : index
    %88 = arith.index_cast %87 : i32 to index
    %c1_83 = arith.constant 1 : index
    %c0_84 = arith.constant 0 : index
    %89 = vector.load %arg2[%c0_82, %88, %c1_83, %c0_84] : memref<1x18x18x4xbf16, #tpu.memory_space<vmem>>, vector<1x1x16x4xbf16>
    %90 = vector.shape_cast %89 : vector<1x1x16x4xbf16> to vector<16x4xbf16>
    %c80_85 = arith.constant 80 : index
    %c0_86 = arith.constant 0 : index
    %91 = vector.load %arg6[%c80_85, %c0_86] : memref<128x4xbf16, #tpu.memory_space<vmem>>, vector<16x4xbf16>
    tpu.vector_store %arg6[%c80_85, %c0_86], %90 {strides = array<i32>} : memref<128x4xbf16, #tpu.memory_space<vmem>>, vector<16x4xbf16>,
    %c0_i32_87 = arith.constant 0 : i32
    %92 = arith.addi %1, %c0_i32_87 : i32
    %c6_i32_88 = arith.constant 6 : i32
    %93 = arith.addi %92, %c6_i32_88 : i32
    %c0_89 = arith.constant 0 : index
    %94 = arith.index_cast %93 : i32 to index
    %c1_90 = arith.constant 1 : index
    %c0_91 = arith.constant 0 : index
    %95 = vector.load %arg2[%c0_89, %94, %c1_90, %c0_91] : memref<1x18x18x4xbf16, #tpu.memory_space<vmem>>, vector<1x1x16x4xbf16>
    %96 = vector.shape_cast %95 : vector<1x1x16x4xbf16> to vector<16x4xbf16>
    %c96_92 = arith.constant 96 : index
    %c0_93 = arith.constant 0 : index
    %97 = vector.load %arg6[%c96_92, %c0_93] : memref<128x4xbf16, #tpu.memory_space<vmem>>, vector<16x4xbf16>
    tpu.vector_store %arg6[%c96_92, %c0_93], %96 {strides = array<i32>} : memref<128x4xbf16, #tpu.memory_space<vmem>>, vector<16x4xbf16>,
    %c0_i32_94 = arith.constant 0 : i32
    %98 = arith.addi %1, %c0_i32_94 : i32
    %c7_i32_95 = arith.constant 7 : i32
    %99 = arith.addi %98, %c7_i32_95 : i32
    %c0_96 = arith.constant 0 : index
    %100 = arith.index_cast %99 : i32 to index
    %c1_97 = arith.constant 1 : index
    %c0_98 = arith.constant 0 : index
    %101 = vector.load %arg2[%c0_96, %100, %c1_97, %c0_98] : memref<1x18x18x4xbf16, #tpu.memory_space<vmem>>, vector<1x1x16x4xbf16>
    %102 = vector.shape_cast %101 : vector<1x1x16x4xbf16> to vector<16x4xbf16>
    %c112_99 = arith.constant 112 : index
    %c0_100 = arith.constant 0 : index
    %103 = vector.load %arg6[%c112_99, %c0_100] : memref<128x4xbf16, #tpu.memory_space<vmem>>, vector<16x4xbf16>
    tpu.vector_store %arg6[%c112_99, %c0_100], %102 {strides = array<i32>} : memref<128x4xbf16, #tpu.memory_space<vmem>>, vector<16x4xbf16>,
    %c0_101 = arith.constant 0 : index
    %c0_102 = arith.constant 0 : index
    %104 = vector.load %arg6[%c0_101, %c0_102] : memref<128x4xbf16, #tpu.memory_space<vmem>>, vector<128x4xbf16>
    %c1_103 = arith.constant 1 : index
    %c0_104 = arith.constant 0 : index
    %c0_105 = arith.constant 0 : index
    %105 = vector.load %arg3[%c1_103, %c0_104, %c0_105] : memref<9x4x128xbf16, #tpu.memory_space<vmem>>, vector<1x4x128xbf16>
    %106 = vector.shape_cast %105 : vector<1x4x128xbf16> to vector<4x128xbf16>
    %cst_106 = arith.constant dense<0.000000e+00> : vector<128x128xf32>
    %107 = tpu.matmul %104, %106, %cst_106 {dimension_numbers = #tpu.dot_dimension_numbers<[1], [0], [0], [1], [0, 0, 1, 1], [], []>} : vector<128x4xbf16>, vector<4x128xbf16>, vector<128x128xf32> -> vector<128x128xf32>
    %108 = arith.addf %55, %107 : vector<128x128xf32>
    %c0_i32_107 = arith.constant 0 : i32
    %109 = arith.addi %1, %c0_i32_107 : i32
    %c0_i32_108 = arith.constant 0 : i32
    %110 = arith.addi %109, %c0_i32_108 : i32
    %c0_109 = arith.constant 0 : index
    %111 = arith.index_cast %110 : i32 to index
    %c2 = arith.constant 2 : index
    %c0_110 = arith.constant 0 : index
    %112 = vector.load %arg2[%c0_109, %111, %c2, %c0_110] : memref<1x18x18x4xbf16, #tpu.memory_space<vmem>>, vector<1x1x16x4xbf16>
    %113 = vector.shape_cast %112 : vector<1x1x16x4xbf16> to vector<16x4xbf16>
    %c0_111 = arith.constant 0 : index
    %c0_112 = arith.constant 0 : index
    %114 = vector.load %arg6[%c0_111, %c0_112] : memref<128x4xbf16, #tpu.memory_space<vmem>>, vector<16x4xbf16>
    tpu.vector_store %arg6[%c0_111, %c0_112], %113 {strides = array<i32>} : memref<128x4xbf16, #tpu.memory_space<vmem>>, vector<16x4xbf16>,
    %c0_i32_113 = arith.constant 0 : i32
    %115 = arith.addi %1, %c0_i32_113 : i32
    %c1_i32_114 = arith.constant 1 : i32
    %116 = arith.addi %115, %c1_i32_114 : i32
    %c0_115 = arith.constant 0 : index
    %117 = arith.index_cast %116 : i32 to index
    %c2_116 = arith.constant 2 : index
    %c0_117 = arith.constant 0 : index
    %118 = vector.load %arg2[%c0_115, %117, %c2_116, %c0_117] : memref<1x18x18x4xbf16, #tpu.memory_space<vmem>>, vector<1x1x16x4xbf16>
    %119 = vector.shape_cast %118 : vector<1x1x16x4xbf16> to vector<16x4xbf16>
    %c16_118 = arith.constant 16 : index
    %c0_119 = arith.constant 0 : index
    %120 = vector.load %arg6[%c16_118, %c0_119] : memref<128x4xbf16, #tpu.memory_space<vmem>>, vector<16x4xbf16>
    tpu.vector_store %arg6[%c16_118, %c0_119], %119 {strides = array<i32>} : memref<128x4xbf16, #tpu.memory_space<vmem>>, vector<16x4xbf16>,
    %c0_i32_120 = arith.constant 0 : i32
    %121 = arith.addi %1, %c0_i32_120 : i32
    %c2_i32_121 = arith.constant 2 : i32
    %122 = arith.addi %121, %c2_i32_121 : i32
    %c0_122 = arith.constant 0 : index
    %123 = arith.index_cast %122 : i32 to index
    %c2_123 = arith.constant 2 : index
    %c0_124 = arith.constant 0 : index
    %124 = vector.load %arg2[%c0_122, %123, %c2_123, %c0_124] : memref<1x18x18x4xbf16, #tpu.memory_space<vmem>>, vector<1x1x16x4xbf16>
    %125 = vector.shape_cast %124 : vector<1x1x16x4xbf16> to vector<16x4xbf16>
    %c32_125 = arith.constant 32 : index
    %c0_126 = arith.constant 0 : index
    %126 = vector.load %arg6[%c32_125, %c0_126] : memref<128x4xbf16, #tpu.memory_space<vmem>>, vector<16x4xbf16>
    tpu.vector_store %arg6[%c32_125, %c0_126], %125 {strides = array<i32>} : memref<128x4xbf16, #tpu.memory_space<vmem>>, vector<16x4xbf16>,
    %c0_i32_127 = arith.constant 0 : i32
    %127 = arith.addi %1, %c0_i32_127 : i32
    %c3_i32_128 = arith.constant 3 : i32
    %128 = arith.addi %127, %c3_i32_128 : i32
    %c0_129 = arith.constant 0 : index
    %129 = arith.index_cast %128 : i32 to index
    %c2_130 = arith.constant 2 : index
    %c0_131 = arith.constant 0 : index
    %130 = vector.load %arg2[%c0_129, %129, %c2_130, %c0_131] : memref<1x18x18x4xbf16, #tpu.memory_space<vmem>>, vector<1x1x16x4xbf16>
    %131 = vector.shape_cast %130 : vector<1x1x16x4xbf16> to vector<16x4xbf16>
    %c48_132 = arith.constant 48 : index
    %c0_133 = arith.constant 0 : index
    %132 = vector.load %arg6[%c48_132, %c0_133] : memref<128x4xbf16, #tpu.memory_space<vmem>>, vector<16x4xbf16>
    tpu.vector_store %arg6[%c48_132, %c0_133], %131 {strides = array<i32>} : memref<128x4xbf16, #tpu.memory_space<vmem>>, vector<16x4xbf16>,
    %c0_i32_134 = arith.constant 0 : i32
    %133 = arith.addi %1, %c0_i32_134 : i32
    %c4_i32_135 = arith.constant 4 : i32
    %134 = arith.addi %133, %c4_i32_135 : i32
    %c0_136 = arith.constant 0 : index
    %135 = arith.index_cast %134 : i32 to index
    %c2_137 = arith.constant 2 : index
    %c0_138 = arith.constant 0 : index
    %136 = vector.load %arg2[%c0_136, %135, %c2_137, %c0_138] : memref<1x18x18x4xbf16, #tpu.memory_space<vmem>>, vector<1x1x16x4xbf16>
    %137 = vector.shape_cast %136 : vector<1x1x16x4xbf16> to vector<16x4xbf16>
    %c64_139 = arith.constant 64 : index
    %c0_140 = arith.constant 0 : index
    %138 = vector.load %arg6[%c64_139, %c0_140] : memref<128x4xbf16, #tpu.memory_space<vmem>>, vector<16x4xbf16>
    tpu.vector_store %arg6[%c64_139, %c0_140], %137 {strides = array<i32>} : memref<128x4xbf16, #tpu.memory_space<vmem>>, vector<16x4xbf16>,
    %c0_i32_141 = arith.constant 0 : i32
    %139 = arith.addi %1, %c0_i32_141 : i32
    %c5_i32_142 = arith.constant 5 : i32
    %140 = arith.addi %139, %c5_i32_142 : i32
    %c0_143 = arith.constant 0 : index
    %141 = arith.index_cast %140 : i32 to index
    %c2_144 = arith.constant 2 : index
    %c0_145 = arith.constant 0 : index
    %142 = vector.load %arg2[%c0_143, %141, %c2_144, %c0_145] : memref<1x18x18x4xbf16, #tpu.memory_space<vmem>>, vector<1x1x16x4xbf16>
    %143 = vector.shape_cast %142 : vector<1x1x16x4xbf16> to vector<16x4xbf16>
    %c80_146 = arith.constant 80 : index
    %c0_147 = arith.constant 0 : index
    %144 = vector.load %arg6[%c80_146, %c0_147] : memref<128x4xbf16, #tpu.memory_space<vmem>>, vector<16x4xbf16>
    tpu.vector_store %arg6[%c80_146, %c0_147], %143 {strides = array<i32>} : memref<128x4xbf16, #tpu.memory_space<vmem>>, vector<16x4xbf16>,
    %c0_i32_148 = arith.constant 0 : i32
    %145 = arith.addi %1, %c0_i32_148 : i32
    %c6_i32_149 = arith.constant 6 : i32
    %146 = arith.addi %145, %c6_i32_149 : i32
    %c0_150 = arith.constant 0 : index
    %147 = arith.index_cast %146 : i32 to index
    %c2_151 = arith.constant 2 : index
    %c0_152 = arith.constant 0 : index
    %148 = vector.load %arg2[%c0_150, %147, %c2_151, %c0_152] : memref<1x18x18x4xbf16, #tpu.memory_space<vmem>>, vector<1x1x16x4xbf16>
    %149 = vector.shape_cast %148 : vector<1x1x16x4xbf16> to vector<16x4xbf16>
    %c96_153 = arith.constant 96 : index
    %c0_154 = arith.constant 0 : index
    %150 = vector.load %arg6[%c96_153, %c0_154] : memref<128x4xbf16, #tpu.memory_space<vmem>>, vector<16x4xbf16>
    tpu.vector_store %arg6[%c96_153, %c0_154], %149 {strides = array<i32>} : memref<128x4xbf16, #tpu.memory_space<vmem>>, vector<16x4xbf16>,
    %c0_i32_155 = arith.constant 0 : i32
    %151 = arith.addi %1, %c0_i32_155 : i32
    %c7_i32_156 = arith.constant 7 : i32
    %152 = arith.addi %151, %c7_i32_156 : i32
    %c0_157 = arith.constant 0 : index
    %153 = arith.index_cast %152 : i32 to index
    %c2_158 = arith.constant 2 : index
    %c0_159 = arith.constant 0 : index
    %154 = vector.load %arg2[%c0_157, %153, %c2_158, %c0_159] : memref<1x18x18x4xbf16, #tpu.memory_space<vmem>>, vector<1x1x16x4xbf16>
    %155 = vector.shape_cast %154 : vector<1x1x16x4xbf16> to vector<16x4xbf16>
    %c112_160 = arith.constant 112 : index
    %c0_161 = arith.constant 0 : index
    %156 = vector.load %arg6[%c112_160, %c0_161] : memref<128x4xbf16, #tpu.memory_space<vmem>>, vector<16x4xbf16>
    tpu.vector_store %arg6[%c112_160, %c0_161], %155 {strides = array<i32>} : memref<128x4xbf16, #tpu.memory_space<vmem>>, vector<16x4xbf16>,
    %c0_162 = arith.constant 0 : index
    %c0_163 = arith.constant 0 : index
    %157 = vector.load %arg6[%c0_162, %c0_163] : memref<128x4xbf16, #tpu.memory_space<vmem>>, vector<128x4xbf16>
    %c2_164 = arith.constant 2 : index
    %c0_165 = arith.constant 0 : index
    %c0_166 = arith.constant 0 : index
    %158 = vector.load %arg3[%c2_164, %c0_165, %c0_166] : memref<9x4x128xbf16, #tpu.memory_space<vmem>>, vector<1x4x128xbf16>
    %159 = vector.shape_cast %158 : vector<1x4x128xbf16> to vector<4x128xbf16>
    %cst_167 = arith.constant dense<0.000000e+00> : vector<128x128xf32>
    %160 = tpu.matmul %157, %159, %cst_167 {dimension_numbers = #tpu.dot_dimension_numbers<[1], [0], [0], [1], [0, 0, 1, 1], [], []>} : vector<128x4xbf16>, vector<4x128xbf16>, vector<128x128xf32> -> vector<128x128xf32>
    %161 = arith.addf %108, %160 : vector<128x128xf32>
    %c1_i32_168 = arith.constant 1 : i32
    %162 = arith.addi %1, %c1_i32_168 : i32
    %c0_i32_169 = arith.constant 0 : i32
    %163 = arith.addi %162, %c0_i32_169 : i32
    %c0_170 = arith.constant 0 : index
    %164 = arith.index_cast %163 : i32 to index
    %c0_171 = arith.constant 0 : index
    %c0_172 = arith.constant 0 : index
    %165 = vector.load %arg2[%c0_170, %164, %c0_171, %c0_172] : memref<1x18x18x4xbf16, #tpu.memory_space<vmem>>, vector<1x1x16x4xbf16>
    %166 = vector.shape_cast %165 : vector<1x1x16x4xbf16> to vector<16x4xbf16>
    %c0_173 = arith.constant 0 : index
    %c0_174 = arith.constant 0 : index
    %167 = vector.load %arg6[%c0_173, %c0_174] : memref<128x4xbf16, #tpu.memory_space<vmem>>, vector<16x4xbf16>
    tpu.vector_store %arg6[%c0_173, %c0_174], %166 {strides = array<i32>} : memref<128x4xbf16, #tpu.memory_space<vmem>>, vector<16x4xbf16>,
    %c1_i32_175 = arith.constant 1 : i32
    %168 = arith.addi %1, %c1_i32_175 : i32
    %c1_i32_176 = arith.constant 1 : i32
    %169 = arith.addi %168, %c1_i32_176 : i32
    %c0_177 = arith.constant 0 : index
    %170 = arith.index_cast %169 : i32 to index
    %c0_178 = arith.constant 0 : index
    %c0_179 = arith.constant 0 : index
    %171 = vector.load %arg2[%c0_177, %170, %c0_178, %c0_179] : memref<1x18x18x4xbf16, #tpu.memory_space<vmem>>, vector<1x1x16x4xbf16>
    %172 = vector.shape_cast %171 : vector<1x1x16x4xbf16> to vector<16x4xbf16>
    %c16_180 = arith.constant 16 : index
    %c0_181 = arith.constant 0 : index
    %173 = vector.load %arg6[%c16_180, %c0_181] : memref<128x4xbf16, #tpu.memory_space<vmem>>, vector<16x4xbf16>
    tpu.vector_store %arg6[%c16_180, %c0_181], %172 {strides = array<i32>} : memref<128x4xbf16, #tpu.memory_space<vmem>>, vector<16x4xbf16>,
    %c1_i32_182 = arith.constant 1 : i32
    %174 = arith.addi %1, %c1_i32_182 : i32
    %c2_i32_183 = arith.constant 2 : i32
    %175 = arith.addi %174, %c2_i32_183 : i32
    %c0_184 = arith.constant 0 : index
    %176 = arith.index_cast %175 : i32 to index
    %c0_185 = arith.constant 0 : index
    %c0_186 = arith.constant 0 : index
    %177 = vector.load %arg2[%c0_184, %176, %c0_185, %c0_186] : memref<1x18x18x4xbf16, #tpu.memory_space<vmem>>, vector<1x1x16x4xbf16>
    %178 = vector.shape_cast %177 : vector<1x1x16x4xbf16> to vector<16x4xbf16>
    %c32_187 = arith.constant 32 : index
    %c0_188 = arith.constant 0 : index
    %179 = vector.load %arg6[%c32_187, %c0_188] : memref<128x4xbf16, #tpu.memory_space<vmem>>, vector<16x4xbf16>
    tpu.vector_store %arg6[%c32_187, %c0_188], %178 {strides = array<i32>} : memref<128x4xbf16, #tpu.memory_space<vmem>>, vector<16x4xbf16>,
    %c1_i32_189 = arith.constant 1 : i32
    %180 = arith.addi %1, %c1_i32_189 : i32
    %c3_i32_190 = arith.constant 3 : i32
    %181 = arith.addi %180, %c3_i32_190 : i32
    %c0_191 = arith.constant 0 : index
    %182 = arith.index_cast %181 : i32 to index
    %c0_192 = arith.constant 0 : index
    %c0_193 = arith.constant 0 : index
    %183 = vector.load %arg2[%c0_191, %182, %c0_192, %c0_193] : memref<1x18x18x4xbf16, #tpu.memory_space<vmem>>, vector<1x1x16x4xbf16>
    %184 = vector.shape_cast %183 : vector<1x1x16x4xbf16> to vector<16x4xbf16>
    %c48_194 = arith.constant 48 : index
    %c0_195 = arith.constant 0 : index
    %185 = vector.load %arg6[%c48_194, %c0_195] : memref<128x4xbf16, #tpu.memory_space<vmem>>, vector<16x4xbf16>
    tpu.vector_store %arg6[%c48_194, %c0_195], %184 {strides = array<i32>} : memref<128x4xbf16, #tpu.memory_space<vmem>>, vector<16x4xbf16>,
    %c1_i32_196 = arith.constant 1 : i32
    %186 = arith.addi %1, %c1_i32_196 : i32
    %c4_i32_197 = arith.constant 4 : i32
    %187 = arith.addi %186, %c4_i32_197 : i32
    %c0_198 = arith.constant 0 : index
    %188 = arith.index_cast %187 : i32 to index
    %c0_199 = arith.constant 0 : index
    %c0_200 = arith.constant 0 : index
    %189 = vector.load %arg2[%c0_198, %188, %c0_199, %c0_200] : memref<1x18x18x4xbf16, #tpu.memory_space<vmem>>, vector<1x1x16x4xbf16>
    %190 = vector.shape_cast %189 : vector<1x1x16x4xbf16> to vector<16x4xbf16>
    %c64_201 = arith.constant 64 : index
    %c0_202 = arith.constant 0 : index
    %191 = vector.load %arg6[%c64_201, %c0_202] : memref<128x4xbf16, #tpu.memory_space<vmem>>, vector<16x4xbf16>
    tpu.vector_store %arg6[%c64_201, %c0_202], %190 {strides = array<i32>} : memref<128x4xbf16, #tpu.memory_space<vmem>>, vector<16x4xbf16>,
    %c1_i32_203 = arith.constant 1 : i32
    %192 = arith.addi %1, %c1_i32_203 : i32
    %c5_i32_204 = arith.constant 5 : i32
    %193 = arith.addi %192, %c5_i32_204 : i32
    %c0_205 = arith.constant 0 : index
    %194 = arith.index_cast %193 : i32 to index
    %c0_206 = arith.constant 0 : index
    %c0_207 = arith.constant 0 : index
    %195 = vector.load %arg2[%c0_205, %194, %c0_206, %c0_207] : memref<1x18x18x4xbf16, #tpu.memory_space<vmem>>, vector<1x1x16x4xbf16>
    %196 = vector.shape_cast %195 : vector<1x1x16x4xbf16> to vector<16x4xbf16>
    %c80_208 = arith.constant 80 : index
    %c0_209 = arith.constant 0 : index
    %197 = vector.load %arg6[%c80_208, %c0_209] : memref<128x4xbf16, #tpu.memory_space<vmem>>, vector<16x4xbf16>
    tpu.vector_store %arg6[%c80_208, %c0_209], %196 {strides = array<i32>} : memref<128x4xbf16, #tpu.memory_space<vmem>>, vector<16x4xbf16>,
    %c1_i32_210 = arith.constant 1 : i32
    %198 = arith.addi %1, %c1_i32_210 : i32
    %c6_i32_211 = arith.constant 6 : i32
    %199 = arith.addi %198, %c6_i32_211 : i32
    %c0_212 = arith.constant 0 : index
    %200 = arith.index_cast %199 : i32 to index
    %c0_213 = arith.constant 0 : index
    %c0_214 = arith.constant 0 : index
    %201 = vector.load %arg2[%c0_212, %200, %c0_213, %c0_214] : memref<1x18x18x4xbf16, #tpu.memory_space<vmem>>, vector<1x1x16x4xbf16>
    %202 = vector.shape_cast %201 : vector<1x1x16x4xbf16> to vector<16x4xbf16>
    %c96_215 = arith.constant 96 : index
    %c0_216 = arith.constant 0 : index
    %203 = vector.load %arg6[%c96_215, %c0_216] : memref<128x4xbf16, #tpu.memory_space<vmem>>, vector<16x4xbf16>
    tpu.vector_store %arg6[%c96_215, %c0_216], %202 {strides = array<i32>} : memref<128x4xbf16, #tpu.memory_space<vmem>>, vector<16x4xbf16>,
    %c1_i32_217 = arith.constant 1 : i32
    %204 = arith.addi %1, %c1_i32_217 : i32
    %c7_i32_218 = arith.constant 7 : i32
    %205 = arith.addi %204, %c7_i32_218 : i32
    %c0_219 = arith.constant 0 : index
    %206 = arith.index_cast %205 : i32 to index
    %c0_220 = arith.constant 0 : index
    %c0_221 = arith.constant 0 : index
    %207 = vector.load %arg2[%c0_219, %206, %c0_220, %c0_221] : memref<1x18x18x4xbf16, #tpu.memory_space<vmem>>, vector<1x1x16x4xbf16>
    %208 = vector.shape_cast %207 : vector<1x1x16x4xbf16> to vector<16x4xbf16>
    %c112_222 = arith.constant 112 : index
    %c0_223 = arith.constant 0 : index
    %209 = vector.load %arg6[%c112_222, %c0_223] : memref<128x4xbf16, #tpu.memory_space<vmem>>, vector<16x4xbf16>
    tpu.vector_store %arg6[%c112_222, %c0_223], %208 {strides = array<i32>} : memref<128x4xbf16, #tpu.memory_space<vmem>>, vector<16x4xbf16>,
    %c0_224 = arith.constant 0 : index
    %c0_225 = arith.constant 0 : index
    %210 = vector.load %arg6[%c0_224, %c0_225] : memref<128x4xbf16, #tpu.memory_space<vmem>>, vector<128x4xbf16>
    %c3 = arith.constant 3 : index
    %c0_226 = arith.constant 0 : index
    %c0_227 = arith.constant 0 : index
    %211 = vector.load %arg3[%c3, %c0_226, %c0_227] : memref<9x4x128xbf16, #tpu.memory_space<vmem>>, vector<1x4x128xbf16>
    %212 = vector.shape_cast %211 : vector<1x4x128xbf16> to vector<4x128xbf16>
    %cst_228 = arith.constant dense<0.000000e+00> : vector<128x128xf32>
    %213 = tpu.matmul %210, %212, %cst_228 {dimension_numbers = #tpu.dot_dimension_numbers<[1], [0], [0], [1], [0, 0, 1, 1], [], []>} : vector<128x4xbf16>, vector<4x128xbf16>, vector<128x128xf32> -> vector<128x128xf32>
    %214 = arith.addf %161, %213 : vector<128x128xf32>
    %c1_i32_229 = arith.constant 1 : i32
    %215 = arith.addi %1, %c1_i32_229 : i32
    %c0_i32_230 = arith.constant 0 : i32
    %216 = arith.addi %215, %c0_i32_230 : i32
    %c0_231 = arith.constant 0 : index
    %217 = arith.index_cast %216 : i32 to index
    %c1_232 = arith.constant 1 : index
    %c0_233 = arith.constant 0 : index
    %218 = vector.load %arg2[%c0_231, %217, %c1_232, %c0_233] : memref<1x18x18x4xbf16, #tpu.memory_space<vmem>>, vector<1x1x16x4xbf16>
    %219 = vector.shape_cast %218 : vector<1x1x16x4xbf16> to vector<16x4xbf16>
    %c0_234 = arith.constant 0 : index
    %c0_235 = arith.constant 0 : index
    %220 = vector.load %arg6[%c0_234, %c0_235] : memref<128x4xbf16, #tpu.memory_space<vmem>>, vector<16x4xbf16>
    tpu.vector_store %arg6[%c0_234, %c0_235], %219 {strides = array<i32>} : memref<128x4xbf16, #tpu.memory_space<vmem>>, vector<16x4xbf16>,
    %c1_i32_236 = arith.constant 1 : i32
    %221 = arith.addi %1, %c1_i32_236 : i32
    %c1_i32_237 = arith.constant 1 : i32
    %222 = arith.addi %221, %c1_i32_237 : i32
    %c0_238 = arith.constant 0 : index
    %223 = arith.index_cast %222 : i32 to index
    %c1_239 = arith.constant 1 : index
    %c0_240 = arith.constant 0 : index
    %224 = vector.load %arg2[%c0_238, %223, %c1_239, %c0_240] : memref<1x18x18x4xbf16, #tpu.memory_space<vmem>>, vector<1x1x16x4xbf16>
    %225 = vector.shape_cast %224 : vector<1x1x16x4xbf16> to vector<16x4xbf16>
    %c16_241 = arith.constant 16 : index
    %c0_242 = arith.constant 0 : index
    %226 = vector.load %arg6[%c16_241, %c0_242] : memref<128x4xbf16, #tpu.memory_space<vmem>>, vector<16x4xbf16>
    tpu.vector_store %arg6[%c16_241, %c0_242], %225 {strides = array<i32>} : memref<128x4xbf16, #tpu.memory_space<vmem>>, vector<16x4xbf16>,
    %c1_i32_243 = arith.constant 1 : i32
    %227 = arith.addi %1, %c1_i32_243 : i32
    %c2_i32_244 = arith.constant 2 : i32
    %228 = arith.addi %227, %c2_i32_244 : i32
    %c0_245 = arith.constant 0 : index
    %229 = arith.index_cast %228 : i32 to index
    %c1_246 = arith.constant 1 : index
    %c0_247 = arith.constant 0 : index
    %230 = vector.load %arg2[%c0_245, %229, %c1_246, %c0_247] : memref<1x18x18x4xbf16, #tpu.memory_space<vmem>>, vector<1x1x16x4xbf16>
    %231 = vector.shape_cast %230 : vector<1x1x16x4xbf16> to vector<16x4xbf16>
    %c32_248 = arith.constant 32 : index
    %c0_249 = arith.constant 0 : index
    %232 = vector.load %arg6[%c32_248, %c0_249] : memref<128x4xbf16, #tpu.memory_space<vmem>>, vector<16x4xbf16>
    tpu.vector_store %arg6[%c32_248, %c0_249], %231 {strides = array<i32>} : memref<128x4xbf16, #tpu.memory_space<vmem>>, vector<16x4xbf16>,
    %c1_i32_250 = arith.constant 1 : i32
    %233 = arith.addi %1, %c1_i32_250 : i32
    %c3_i32_251 = arith.constant 3 : i32
    %234 = arith.addi %233, %c3_i32_251 : i32
    %c0_252 = arith.constant 0 : index
    %235 = arith.index_cast %234 : i32 to index
    %c1_253 = arith.constant 1 : index
    %c0_254 = arith.constant 0 : index
    %236 = vector.load %arg2[%c0_252, %235, %c1_253, %c0_254] : memref<1x18x18x4xbf16, #tpu.memory_space<vmem>>, vector<1x1x16x4xbf16>
    %237 = vector.shape_cast %236 : vector<1x1x16x4xbf16> to vector<16x4xbf16>
    %c48_255 = arith.constant 48 : index
    %c0_256 = arith.constant 0 : index
    %238 = vector.load %arg6[%c48_255, %c0_256] : memref<128x4xbf16, #tpu.memory_space<vmem>>, vector<16x4xbf16>
    tpu.vector_store %arg6[%c48_255, %c0_256], %237 {strides = array<i32>} : memref<128x4xbf16, #tpu.memory_space<vmem>>, vector<16x4xbf16>,
    %c1_i32_257 = arith.constant 1 : i32
    %239 = arith.addi %1, %c1_i32_257 : i32
    %c4_i32_258 = arith.constant 4 : i32
    %240 = arith.addi %239, %c4_i32_258 : i32
    %c0_259 = arith.constant 0 : index
    %241 = arith.index_cast %240 : i32 to index
    %c1_260 = arith.constant 1 : index
    %c0_261 = arith.constant 0 : index
    %242 = vector.load %arg2[%c0_259, %241, %c1_260, %c0_261] : memref<1x18x18x4xbf16, #tpu.memory_space<vmem>>, vector<1x1x16x4xbf16>
    %243 = vector.shape_cast %242 : vector<1x1x16x4xbf16> to vector<16x4xbf16>
    %c64_262 = arith.constant 64 : index
    %c0_263 = arith.constant 0 : index
    %244 = vector.load %arg6[%c64_262, %c0_263] : memref<128x4xbf16, #tpu.memory_space<vmem>>, vector<16x4xbf16>
    tpu.vector_store %arg6[%c64_262, %c0_263], %243 {strides = array<i32>} : memref<128x4xbf16, #tpu.memory_space<vmem>>, vector<16x4xbf16>,
    %c1_i32_264 = arith.constant 1 : i32
    %245 = arith.addi %1, %c1_i32_264 : i32
    %c5_i32_265 = arith.constant 5 : i32
    %246 = arith.addi %245, %c5_i32_265 : i32
    %c0_266 = arith.constant 0 : index
    %247 = arith.index_cast %246 : i32 to index
    %c1_267 = arith.constant 1 : index
    %c0_268 = arith.constant 0 : index
    %248 = vector.load %arg2[%c0_266, %247, %c1_267, %c0_268] : memref<1x18x18x4xbf16, #tpu.memory_space<vmem>>, vector<1x1x16x4xbf16>
    %249 = vector.shape_cast %248 : vector<1x1x16x4xbf16> to vector<16x4xbf16>
    %c80_269 = arith.constant 80 : index
    %c0_270 = arith.constant 0 : index
    %250 = vector.load %arg6[%c80_269, %c0_270] : memref<128x4xbf16, #tpu.memory_space<vmem>>, vector<16x4xbf16>
    tpu.vector_store %arg6[%c80_269, %c0_270], %249 {strides = array<i32>} : memref<128x4xbf16, #tpu.memory_space<vmem>>, vector<16x4xbf16>,
    %c1_i32_271 = arith.constant 1 : i32
    %251 = arith.addi %1, %c1_i32_271 : i32
    %c6_i32_272 = arith.constant 6 : i32
    %252 = arith.addi %251, %c6_i32_272 : i32
    %c0_273 = arith.constant 0 : index
    %253 = arith.index_cast %252 : i32 to index
    %c1_274 = arith.constant 1 : index
    %c0_275 = arith.constant 0 : index
    %254 = vector.load %arg2[%c0_273, %253, %c1_274, %c0_275] : memref<1x18x18x4xbf16, #tpu.memory_space<vmem>>, vector<1x1x16x4xbf16>
    %255 = vector.shape_cast %254 : vector<1x1x16x4xbf16> to vector<16x4xbf16>
    %c96_276 = arith.constant 96 : index
    %c0_277 = arith.constant 0 : index
    %256 = vector.load %arg6[%c96_276, %c0_277] : memref<128x4xbf16, #tpu.memory_space<vmem>>, vector<16x4xbf16>
    tpu.vector_store %arg6[%c96_276, %c0_277], %255 {strides = array<i32>} : memref<128x4xbf16, #tpu.memory_space<vmem>>, vector<16x4xbf16>,
    %c1_i32_278 = arith.constant 1 : i32
    %257 = arith.addi %1, %c1_i32_278 : i32
    %c7_i32_279 = arith.constant 7 : i32
    %258 = arith.addi %257, %c7_i32_279 : i32
    %c0_280 = arith.constant 0 : index
    %259 = arith.index_cast %258 : i32 to index
    %c1_281 = arith.constant 1 : index
    %c0_282 = arith.constant 0 : index
    %260 = vector.load %arg2[%c0_280, %259, %c1_281, %c0_282] : memref<1x18x18x4xbf16, #tpu.memory_space<vmem>>, vector<1x1x16x4xbf16>
    %261 = vector.shape_cast %260 : vector<1x1x16x4xbf16> to vector<16x4xbf16>
    %c112_283 = arith.constant 112 : index
    %c0_284 = arith.constant 0 : index
    %262 = vector.load %arg6[%c112_283, %c0_284] : memref<128x4xbf16, #tpu.memory_space<vmem>>, vector<16x4xbf16>
    tpu.vector_store %arg6[%c112_283, %c0_284], %261 {strides = array<i32>} : memref<128x4xbf16, #tpu.memory_space<vmem>>, vector<16x4xbf16>,
    %c0_285 = arith.constant 0 : index
    %c0_286 = arith.constant 0 : index
    %263 = vector.load %arg6[%c0_285, %c0_286] : memref<128x4xbf16, #tpu.memory_space<vmem>>, vector<128x4xbf16>
    %c4 = arith.constant 4 : index
    %c0_287 = arith.constant 0 : index
    %c0_288 = arith.constant 0 : index
    %264 = vector.load %arg3[%c4, %c0_287, %c0_288] : memref<9x4x128xbf16, #tpu.memory_space<vmem>>, vector<1x4x128xbf16>
    %265 = vector.shape_cast %264 : vector<1x4x128xbf16> to vector<4x128xbf16>
    %cst_289 = arith.constant dense<0.000000e+00> : vector<128x128xf32>
    %266 = tpu.matmul %263, %265, %cst_289 {dimension_numbers = #tpu.dot_dimension_numbers<[1], [0], [0], [1], [0, 0, 1, 1], [], []>} : vector<128x4xbf16>, vector<4x128xbf16>, vector<128x128xf32> -> vector<128x128xf32>
    %267 = arith.addf %214, %266 : vector<128x128xf32>
    %c1_i32_290 = arith.constant 1 : i32
    %268 = arith.addi %1, %c1_i32_290 : i32
    %c0_i32_291 = arith.constant 0 : i32
    %269 = arith.addi %268, %c0_i32_291 : i32
    %c0_292 = arith.constant 0 : index
    %270 = arith.index_cast %269 : i32 to index
    %c2_293 = arith.constant 2 : index
    %c0_294 = arith.constant 0 : index
    %271 = vector.load %arg2[%c0_292, %270, %c2_293, %c0_294] : memref<1x18x18x4xbf16, #tpu.memory_space<vmem>>, vector<1x1x16x4xbf16>
    %272 = vector.shape_cast %271 : vector<1x1x16x4xbf16> to vector<16x4xbf16>
    %c0_295 = arith.constant 0 : index
    %c0_296 = arith.constant 0 : index
    %273 = vector.load %arg6[%c0_295, %c0_296] : memref<128x4xbf16, #tpu.memory_space<vmem>>, vector<16x4xbf16>
    tpu.vector_store %arg6[%c0_295, %c0_296], %272 {strides = array<i32>} : memref<128x4xbf16, #tpu.memory_space<vmem>>, vector<16x4xbf16>,
    %c1_i32_297 = arith.constant 1 : i32
    %274 = arith.addi %1, %c1_i32_297 : i32
    %c1_i32_298 = arith.constant 1 : i32
    %275 = arith.addi %274, %c1_i32_298 : i32
    %c0_299 = arith.constant 0 : index
    %276 = arith.index_cast %275 : i32 to index
    %c2_300 = arith.constant 2 : index
    %c0_301 = arith.constant 0 : index
    %277 = vector.load %arg2[%c0_299, %276, %c2_300, %c0_301] : memref<1x18x18x4xbf16, #tpu.memory_space<vmem>>, vector<1x1x16x4xbf16>
    %278 = vector.shape_cast %277 : vector<1x1x16x4xbf16> to vector<16x4xbf16>
    %c16_302 = arith.constant 16 : index
    %c0_303 = arith.constant 0 : index
    %279 = vector.load %arg6[%c16_302, %c0_303] : memref<128x4xbf16, #tpu.memory_space<vmem>>, vector<16x4xbf16>
    tpu.vector_store %arg6[%c16_302, %c0_303], %278 {strides = array<i32>} : memref<128x4xbf16, #tpu.memory_space<vmem>>, vector<16x4xbf16>,
    %c1_i32_304 = arith.constant 1 : i32
    %280 = arith.addi %1, %c1_i32_304 : i32
    %c2_i32_305 = arith.constant 2 : i32
    %281 = arith.addi %280, %c2_i32_305 : i32
    %c0_306 = arith.constant 0 : index
    %282 = arith.index_cast %281 : i32 to index
    %c2_307 = arith.constant 2 : index
    %c0_308 = arith.constant 0 : index
    %283 = vector.load %arg2[%c0_306, %282, %c2_307, %c0_308] : memref<1x18x18x4xbf16, #tpu.memory_space<vmem>>, vector<1x1x16x4xbf16>
    %284 = vector.shape_cast %283 : vector<1x1x16x4xbf16> to vector<16x4xbf16>
    %c32_309 = arith.constant 32 : index
    %c0_310 = arith.constant 0 : index
    %285 = vector.load %arg6[%c32_309, %c0_310] : memref<128x4xbf16, #tpu.memory_space<vmem>>, vector<16x4xbf16>
    tpu.vector_store %arg6[%c32_309, %c0_310], %284 {strides = array<i32>} : memref<128x4xbf16, #tpu.memory_space<vmem>>, vector<16x4xbf16>,
    %c1_i32_311 = arith.constant 1 : i32
    %286 = arith.addi %1, %c1_i32_311 : i32
    %c3_i32_312 = arith.constant 3 : i32
    %287 = arith.addi %286, %c3_i32_312 : i32
    %c0_313 = arith.constant 0 : index
    %288 = arith.index_cast %287 : i32 to index
    %c2_314 = arith.constant 2 : index
    %c0_315 = arith.constant 0 : index
    %289 = vector.load %arg2[%c0_313, %288, %c2_314, %c0_315] : memref<1x18x18x4xbf16, #tpu.memory_space<vmem>>, vector<1x1x16x4xbf16>
    %290 = vector.shape_cast %289 : vector<1x1x16x4xbf16> to vector<16x4xbf16>
    %c48_316 = arith.constant 48 : index
    %c0_317 = arith.constant 0 : index
    %291 = vector.load %arg6[%c48_316, %c0_317] : memref<128x4xbf16, #tpu.memory_space<vmem>>, vector<16x4xbf16>
    tpu.vector_store %arg6[%c48_316, %c0_317], %290 {strides = array<i32>} : memref<128x4xbf16, #tpu.memory_space<vmem>>, vector<16x4xbf16>,
    %c1_i32_318 = arith.constant 1 : i32
    %292 = arith.addi %1, %c1_i32_318 : i32
    %c4_i32_319 = arith.constant 4 : i32
    %293 = arith.addi %292, %c4_i32_319 : i32
    %c0_320 = arith.constant 0 : index
    %294 = arith.index_cast %293 : i32 to index
    %c2_321 = arith.constant 2 : index
    %c0_322 = arith.constant 0 : index
    %295 = vector.load %arg2[%c0_320, %294, %c2_321, %c0_322] : memref<1x18x18x4xbf16, #tpu.memory_space<vmem>>, vector<1x1x16x4xbf16>
    %296 = vector.shape_cast %295 : vector<1x1x16x4xbf16> to vector<16x4xbf16>
    %c64_323 = arith.constant 64 : index
    %c0_324 = arith.constant 0 : index
    %297 = vector.load %arg6[%c64_323, %c0_324] : memref<128x4xbf16, #tpu.memory_space<vmem>>, vector<16x4xbf16>
    tpu.vector_store %arg6[%c64_323, %c0_324], %296 {strides = array<i32>} : memref<128x4xbf16, #tpu.memory_space<vmem>>, vector<16x4xbf16>,
    %c1_i32_325 = arith.constant 1 : i32
    %298 = arith.addi %1, %c1_i32_325 : i32
    %c5_i32_326 = arith.constant 5 : i32
    %299 = arith.addi %298, %c5_i32_326 : i32
    %c0_327 = arith.constant 0 : index
    %300 = arith.index_cast %299 : i32 to index
    %c2_328 = arith.constant 2 : index
    %c0_329 = arith.constant 0 : index
    %301 = vector.load %arg2[%c0_327, %300, %c2_328, %c0_329] : memref<1x18x18x4xbf16, #tpu.memory_space<vmem>>, vector<1x1x16x4xbf16>
    %302 = vector.shape_cast %301 : vector<1x1x16x4xbf16> to vector<16x4xbf16>
    %c80_330 = arith.constant 80 : index
    %c0_331 = arith.constant 0 : index
    %303 = vector.load %arg6[%c80_330, %c0_331] : memref<128x4xbf16, #tpu.memory_space<vmem>>, vector<16x4xbf16>
    tpu.vector_store %arg6[%c80_330, %c0_331], %302 {strides = array<i32>} : memref<128x4xbf16, #tpu.memory_space<vmem>>, vector<16x4xbf16>,
    %c1_i32_332 = arith.constant 1 : i32
    %304 = arith.addi %1, %c1_i32_332 : i32
    %c6_i32_333 = arith.constant 6 : i32
    %305 = arith.addi %304, %c6_i32_333 : i32
    %c0_334 = arith.constant 0 : index
    %306 = arith.index_cast %305 : i32 to index
    %c2_335 = arith.constant 2 : index
    %c0_336 = arith.constant 0 : index
    %307 = vector.load %arg2[%c0_334, %306, %c2_335, %c0_336] : memref<1x18x18x4xbf16, #tpu.memory_space<vmem>>, vector<1x1x16x4xbf16>
    %308 = vector.shape_cast %307 : vector<1x1x16x4xbf16> to vector<16x4xbf16>
    %c96_337 = arith.constant 96 : index
    %c0_338 = arith.constant 0 : index
    %309 = vector.load %arg6[%c96_337, %c0_338] : memref<128x4xbf16, #tpu.memory_space<vmem>>, vector<16x4xbf16>
    tpu.vector_store %arg6[%c96_337, %c0_338], %308 {strides = array<i32>} : memref<128x4xbf16, #tpu.memory_space<vmem>>, vector<16x4xbf16>,
    %c1_i32_339 = arith.constant 1 : i32
    %310 = arith.addi %1, %c1_i32_339 : i32
    %c7_i32_340 = arith.constant 7 : i32
    %311 = arith.addi %310, %c7_i32_340 : i32
    %c0_341 = arith.constant 0 : index
    %312 = arith.index_cast %311 : i32 to index
    %c2_342 = arith.constant 2 : index
    %c0_343 = arith.constant 0 : index
    %313 = vector.load %arg2[%c0_341, %312, %c2_342, %c0_343] : memref<1x18x18x4xbf16, #tpu.memory_space<vmem>>, vector<1x1x16x4xbf16>
    %314 = vector.shape_cast %313 : vector<1x1x16x4xbf16> to vector<16x4xbf16>
    %c112_344 = arith.constant 112 : index
    %c0_345 = arith.constant 0 : index
    %315 = vector.load %arg6[%c112_344, %c0_345] : memref<128x4xbf16, #tpu.memory_space<vmem>>, vector<16x4xbf16>
    tpu.vector_store %arg6[%c112_344, %c0_345], %314 {strides = array<i32>} : memref<128x4xbf16, #tpu.memory_space<vmem>>, vector<16x4xbf16>,
    %c0_346 = arith.constant 0 : index
    %c0_347 = arith.constant 0 : index
    %316 = vector.load %arg6[%c0_346, %c0_347] : memref<128x4xbf16, #tpu.memory_space<vmem>>, vector<128x4xbf16>
    %c5 = arith.constant 5 : index
    %c0_348 = arith.constant 0 : index
    %c0_349 = arith.constant 0 : index
    %317 = vector.load %arg3[%c5, %c0_348, %c0_349] : memref<9x4x128xbf16, #tpu.memory_space<vmem>>, vector<1x4x128xbf16>
    %318 = vector.shape_cast %317 : vector<1x4x128xbf16> to vector<4x128xbf16>
    %cst_350 = arith.constant dense<0.000000e+00> : vector<128x128xf32>
    %319 = tpu.matmul %316, %318, %cst_350 {dimension_numbers = #tpu.dot_dimension_numbers<[1], [0], [0], [1], [0, 0, 1, 1], [], []>} : vector<128x4xbf16>, vector<4x128xbf16>, vector<128x128xf32> -> vector<128x128xf32>
    %320 = arith.addf %267, %319 : vector<128x128xf32>
    %c2_i32_351 = arith.constant 2 : i32
    %321 = arith.addi %1, %c2_i32_351 : i32
    %c0_i32_352 = arith.constant 0 : i32
    %322 = arith.addi %321, %c0_i32_352 : i32
    %c0_353 = arith.constant 0 : index
    %323 = arith.index_cast %322 : i32 to index
    %c0_354 = arith.constant 0 : index
    %c0_355 = arith.constant 0 : index
    %324 = vector.load %arg2[%c0_353, %323, %c0_354, %c0_355] : memref<1x18x18x4xbf16, #tpu.memory_space<vmem>>, vector<1x1x16x4xbf16>
    %325 = vector.shape_cast %324 : vector<1x1x16x4xbf16> to vector<16x4xbf16>
    %c0_356 = arith.constant 0 : index
    %c0_357 = arith.constant 0 : index
    %326 = vector.load %arg6[%c0_356, %c0_357] : memref<128x4xbf16, #tpu.memory_space<vmem>>, vector<16x4xbf16>
    tpu.vector_store %arg6[%c0_356, %c0_357], %325 {strides = array<i32>} : memref<128x4xbf16, #tpu.memory_space<vmem>>, vector<16x4xbf16>,
    %c2_i32_358 = arith.constant 2 : i32
    %327 = arith.addi %1, %c2_i32_358 : i32
    %c1_i32_359 = arith.constant 1 : i32
    %328 = arith.addi %327, %c1_i32_359 : i32
    %c0_360 = arith.constant 0 : index
    %329 = arith.index_cast %328 : i32 to index
    %c0_361 = arith.constant 0 : index
    %c0_362 = arith.constant 0 : index
    %330 = vector.load %arg2[%c0_360, %329, %c0_361, %c0_362] : memref<1x18x18x4xbf16, #tpu.memory_space<vmem>>, vector<1x1x16x4xbf16>
    %331 = vector.shape_cast %330 : vector<1x1x16x4xbf16> to vector<16x4xbf16>
    %c16_363 = arith.constant 16 : index
    %c0_364 = arith.constant 0 : index
    %332 = vector.load %arg6[%c16_363, %c0_364] : memref<128x4xbf16, #tpu.memory_space<vmem>>, vector<16x4xbf16>
    tpu.vector_store %arg6[%c16_363, %c0_364], %331 {strides = array<i32>} : memref<128x4xbf16, #tpu.memory_space<vmem>>, vector<16x4xbf16>,
    %c2_i32_365 = arith.constant 2 : i32
    %333 = arith.addi %1, %c2_i32_365 : i32
    %c2_i32_366 = arith.constant 2 : i32
    %334 = arith.addi %333, %c2_i32_366 : i32
    %c0_367 = arith.constant 0 : index
    %335 = arith.index_cast %334 : i32 to index
    %c0_368 = arith.constant 0 : index
    %c0_369 = arith.constant 0 : index
    %336 = vector.load %arg2[%c0_367, %335, %c0_368, %c0_369] : memref<1x18x18x4xbf16, #tpu.memory_space<vmem>>, vector<1x1x16x4xbf16>
    %337 = vector.shape_cast %336 : vector<1x1x16x4xbf16> to vector<16x4xbf16>
    %c32_370 = arith.constant 32 : index
    %c0_371 = arith.constant 0 : index
    %338 = vector.load %arg6[%c32_370, %c0_371] : memref<128x4xbf16, #tpu.memory_space<vmem>>, vector<16x4xbf16>
    tpu.vector_store %arg6[%c32_370, %c0_371], %337 {strides = array<i32>} : memref<128x4xbf16, #tpu.memory_space<vmem>>, vector<16x4xbf16>,
    %c2_i32_372 = arith.constant 2 : i32
    %339 = arith.addi %1, %c2_i32_372 : i32
    %c3_i32_373 = arith.constant 3 : i32
    %340 = arith.addi %339, %c3_i32_373 : i32
    %c0_374 = arith.constant 0 : index
    %341 = arith.index_cast %340 : i32 to index
    %c0_375 = arith.constant 0 : index
    %c0_376 = arith.constant 0 : index
    %342 = vector.load %arg2[%c0_374, %341, %c0_375, %c0_376] : memref<1x18x18x4xbf16, #tpu.memory_space<vmem>>, vector<1x1x16x4xbf16>
    %343 = vector.shape_cast %342 : vector<1x1x16x4xbf16> to vector<16x4xbf16>
    %c48_377 = arith.constant 48 : index
    %c0_378 = arith.constant 0 : index
    %344 = vector.load %arg6[%c48_377, %c0_378] : memref<128x4xbf16, #tpu.memory_space<vmem>>, vector<16x4xbf16>
    tpu.vector_store %arg6[%c48_377, %c0_378], %343 {strides = array<i32>} : memref<128x4xbf16, #tpu.memory_space<vmem>>, vector<16x4xbf16>,
    %c2_i32_379 = arith.constant 2 : i32
    %345 = arith.addi %1, %c2_i32_379 : i32
    %c4_i32_380 = arith.constant 4 : i32
    %346 = arith.addi %345, %c4_i32_380 : i32
    %c0_381 = arith.constant 0 : index
    %347 = arith.index_cast %346 : i32 to index
    %c0_382 = arith.constant 0 : index
    %c0_383 = arith.constant 0 : index
    %348 = vector.load %arg2[%c0_381, %347, %c0_382, %c0_383] : memref<1x18x18x4xbf16, #tpu.memory_space<vmem>>, vector<1x1x16x4xbf16>
    %349 = vector.shape_cast %348 : vector<1x1x16x4xbf16> to vector<16x4xbf16>
    %c64_384 = arith.constant 64 : index
    %c0_385 = arith.constant 0 : index
    %350 = vector.load %arg6[%c64_384, %c0_385] : memref<128x4xbf16, #tpu.memory_space<vmem>>, vector<16x4xbf16>
    tpu.vector_store %arg6[%c64_384, %c0_385], %349 {strides = array<i32>} : memref<128x4xbf16, #tpu.memory_space<vmem>>, vector<16x4xbf16>,
    %c2_i32_386 = arith.constant 2 : i32
    %351 = arith.addi %1, %c2_i32_386 : i32
    %c5_i32_387 = arith.constant 5 : i32
    %352 = arith.addi %351, %c5_i32_387 : i32
    %c0_388 = arith.constant 0 : index
    %353 = arith.index_cast %352 : i32 to index
    %c0_389 = arith.constant 0 : index
    %c0_390 = arith.constant 0 : index
    %354 = vector.load %arg2[%c0_388, %353, %c0_389, %c0_390] : memref<1x18x18x4xbf16, #tpu.memory_space<vmem>>, vector<1x1x16x4xbf16>
    %355 = vector.shape_cast %354 : vector<1x1x16x4xbf16> to vector<16x4xbf16>
    %c80_391 = arith.constant 80 : index
    %c0_392 = arith.constant 0 : index
    %356 = vector.load %arg6[%c80_391, %c0_392] : memref<128x4xbf16, #tpu.memory_space<vmem>>, vector<16x4xbf16>
    tpu.vector_store %arg6[%c80_391, %c0_392], %355 {strides = array<i32>} : memref<128x4xbf16, #tpu.memory_space<vmem>>, vector<16x4xbf16>,
    %c2_i32_393 = arith.constant 2 : i32
    %357 = arith.addi %1, %c2_i32_393 : i32
    %c6_i32_394 = arith.constant 6 : i32
    %358 = arith.addi %357, %c6_i32_394 : i32
    %c0_395 = arith.constant 0 : index
    %359 = arith.index_cast %358 : i32 to index
    %c0_396 = arith.constant 0 : index
    %c0_397 = arith.constant 0 : index
    %360 = vector.load %arg2[%c0_395, %359, %c0_396, %c0_397] : memref<1x18x18x4xbf16, #tpu.memory_space<vmem>>, vector<1x1x16x4xbf16>
    %361 = vector.shape_cast %360 : vector<1x1x16x4xbf16> to vector<16x4xbf16>
    %c96_398 = arith.constant 96 : index
    %c0_399 = arith.constant 0 : index
    %362 = vector.load %arg6[%c96_398, %c0_399] : memref<128x4xbf16, #tpu.memory_space<vmem>>, vector<16x4xbf16>
    tpu.vector_store %arg6[%c96_398, %c0_399], %361 {strides = array<i32>} : memref<128x4xbf16, #tpu.memory_space<vmem>>, vector<16x4xbf16>,
    %c2_i32_400 = arith.constant 2 : i32
    %363 = arith.addi %1, %c2_i32_400 : i32
    %c7_i32_401 = arith.constant 7 : i32
    %364 = arith.addi %363, %c7_i32_401 : i32
    %c0_402 = arith.constant 0 : index
    %365 = arith.index_cast %364 : i32 to index
    %c0_403 = arith.constant 0 : index
    %c0_404 = arith.constant 0 : index
    %366 = vector.load %arg2[%c0_402, %365, %c0_403, %c0_404] : memref<1x18x18x4xbf16, #tpu.memory_space<vmem>>, vector<1x1x16x4xbf16>
    %367 = vector.shape_cast %366 : vector<1x1x16x4xbf16> to vector<16x4xbf16>
    %c112_405 = arith.constant 112 : index
    %c0_406 = arith.constant 0 : index
    %368 = vector.load %arg6[%c112_405, %c0_406] : memref<128x4xbf16, #tpu.memory_space<vmem>>, vector<16x4xbf16>
    tpu.vector_store %arg6[%c112_405, %c0_406], %367 {strides = array<i32>} : memref<128x4xbf16, #tpu.memory_space<vmem>>, vector<16x4xbf16>,
    %c0_407 = arith.constant 0 : index
    %c0_408 = arith.constant 0 : index
    %369 = vector.load %arg6[%c0_407, %c0_408] : memref<128x4xbf16, #tpu.memory_space<vmem>>, vector<128x4xbf16>
    %c6 = arith.constant 6 : index
    %c0_409 = arith.constant 0 : index
    %c0_410 = arith.constant 0 : index
    %370 = vector.load %arg3[%c6, %c0_409, %c0_410] : memref<9x4x128xbf16, #tpu.memory_space<vmem>>, vector<1x4x128xbf16>
    %371 = vector.shape_cast %370 : vector<1x4x128xbf16> to vector<4x128xbf16>
    %cst_411 = arith.constant dense<0.000000e+00> : vector<128x128xf32>
    %372 = tpu.matmul %369, %371, %cst_411 {dimension_numbers = #tpu.dot_dimension_numbers<[1], [0], [0], [1], [0, 0, 1, 1], [], []>} : vector<128x4xbf16>, vector<4x128xbf16>, vector<128x128xf32> -> vector<128x128xf32>
    %373 = arith.addf %320, %372 : vector<128x128xf32>
    %c2_i32_412 = arith.constant 2 : i32
    %374 = arith.addi %1, %c2_i32_412 : i32
    %c0_i32_413 = arith.constant 0 : i32
    %375 = arith.addi %374, %c0_i32_413 : i32
    %c0_414 = arith.constant 0 : index
    %376 = arith.index_cast %375 : i32 to index
    %c1_415 = arith.constant 1 : index
    %c0_416 = arith.constant 0 : index
    %377 = vector.load %arg2[%c0_414, %376, %c1_415, %c0_416] : memref<1x18x18x4xbf16, #tpu.memory_space<vmem>>, vector<1x1x16x4xbf16>
    %378 = vector.shape_cast %377 : vector<1x1x16x4xbf16> to vector<16x4xbf16>
    %c0_417 = arith.constant 0 : index
    %c0_418 = arith.constant 0 : index
    %379 = vector.load %arg6[%c0_417, %c0_418] : memref<128x4xbf16, #tpu.memory_space<vmem>>, vector<16x4xbf16>
    tpu.vector_store %arg6[%c0_417, %c0_418], %378 {strides = array<i32>} : memref<128x4xbf16, #tpu.memory_space<vmem>>, vector<16x4xbf16>,
    %c2_i32_419 = arith.constant 2 : i32
    %380 = arith.addi %1, %c2_i32_419 : i32
    %c1_i32_420 = arith.constant 1 : i32
    %381 = arith.addi %380, %c1_i32_420 : i32
    %c0_421 = arith.constant 0 : index
    %382 = arith.index_cast %381 : i32 to index
    %c1_422 = arith.constant 1 : index
    %c0_423 = arith.constant 0 : index
    %383 = vector.load %arg2[%c0_421, %382, %c1_422, %c0_423] : memref<1x18x18x4xbf16, #tpu.memory_space<vmem>>, vector<1x1x16x4xbf16>
    %384 = vector.shape_cast %383 : vector<1x1x16x4xbf16> to vector<16x4xbf16>
    %c16_424 = arith.constant 16 : index
    %c0_425 = arith.constant 0 : index
    %385 = vector.load %arg6[%c16_424, %c0_425] : memref<128x4xbf16, #tpu.memory_space<vmem>>, vector<16x4xbf16>
    tpu.vector_store %arg6[%c16_424, %c0_425], %384 {strides = array<i32>} : memref<128x4xbf16, #tpu.memory_space<vmem>>, vector<16x4xbf16>,
    %c2_i32_426 = arith.constant 2 : i32
    %386 = arith.addi %1, %c2_i32_426 : i32
    %c2_i32_427 = arith.constant 2 : i32
    %387 = arith.addi %386, %c2_i32_427 : i32
    %c0_428 = arith.constant 0 : index
    %388 = arith.index_cast %387 : i32 to index
    %c1_429 = arith.constant 1 : index
    %c0_430 = arith.constant 0 : index
    %389 = vector.load %arg2[%c0_428, %388, %c1_429, %c0_430] : memref<1x18x18x4xbf16, #tpu.memory_space<vmem>>, vector<1x1x16x4xbf16>
    %390 = vector.shape_cast %389 : vector<1x1x16x4xbf16> to vector<16x4xbf16>
    %c32_431 = arith.constant 32 : index
    %c0_432 = arith.constant 0 : index
    %391 = vector.load %arg6[%c32_431, %c0_432] : memref<128x4xbf16, #tpu.memory_space<vmem>>, vector<16x4xbf16>
    tpu.vector_store %arg6[%c32_431, %c0_432], %390 {strides = array<i32>} : memref<128x4xbf16, #tpu.memory_space<vmem>>, vector<16x4xbf16>,
    %c2_i32_433 = arith.constant 2 : i32
    %392 = arith.addi %1, %c2_i32_433 : i32
    %c3_i32_434 = arith.constant 3 : i32
    %393 = arith.addi %392, %c3_i32_434 : i32
    %c0_435 = arith.constant 0 : index
    %394 = arith.index_cast %393 : i32 to index
    %c1_436 = arith.constant 1 : index
    %c0_437 = arith.constant 0 : index
    %395 = vector.load %arg2[%c0_435, %394, %c1_436, %c0_437] : memref<1x18x18x4xbf16, #tpu.memory_space<vmem>>, vector<1x1x16x4xbf16>
    %396 = vector.shape_cast %395 : vector<1x1x16x4xbf16> to vector<16x4xbf16>
    %c48_438 = arith.constant 48 : index
    %c0_439 = arith.constant 0 : index
    %397 = vector.load %arg6[%c48_438, %c0_439] : memref<128x4xbf16, #tpu.memory_space<vmem>>, vector<16x4xbf16>
    tpu.vector_store %arg6[%c48_438, %c0_439], %396 {strides = array<i32>} : memref<128x4xbf16, #tpu.memory_space<vmem>>, vector<16x4xbf16>,
    %c2_i32_440 = arith.constant 2 : i32
    %398 = arith.addi %1, %c2_i32_440 : i32
    %c4_i32_441 = arith.constant 4 : i32
    %399 = arith.addi %398, %c4_i32_441 : i32
    %c0_442 = arith.constant 0 : index
    %400 = arith.index_cast %399 : i32 to index
    %c1_443 = arith.constant 1 : index
    %c0_444 = arith.constant 0 : index
    %401 = vector.load %arg2[%c0_442, %400, %c1_443, %c0_444] : memref<1x18x18x4xbf16, #tpu.memory_space<vmem>>, vector<1x1x16x4xbf16>
    %402 = vector.shape_cast %401 : vector<1x1x16x4xbf16> to vector<16x4xbf16>
    %c64_445 = arith.constant 64 : index
    %c0_446 = arith.constant 0 : index
    %403 = vector.load %arg6[%c64_445, %c0_446] : memref<128x4xbf16, #tpu.memory_space<vmem>>, vector<16x4xbf16>
    tpu.vector_store %arg6[%c64_445, %c0_446], %402 {strides = array<i32>} : memref<128x4xbf16, #tpu.memory_space<vmem>>, vector<16x4xbf16>,
    %c2_i32_447 = arith.constant 2 : i32
    %404 = arith.addi %1, %c2_i32_447 : i32
    %c5_i32_448 = arith.constant 5 : i32
    %405 = arith.addi %404, %c5_i32_448 : i32
    %c0_449 = arith.constant 0 : index
    %406 = arith.index_cast %405 : i32 to index
    %c1_450 = arith.constant 1 : index
    %c0_451 = arith.constant 0 : index
    %407 = vector.load %arg2[%c0_449, %406, %c1_450, %c0_451] : memref<1x18x18x4xbf16, #tpu.memory_space<vmem>>, vector<1x1x16x4xbf16>
    %408 = vector.shape_cast %407 : vector<1x1x16x4xbf16> to vector<16x4xbf16>
    %c80_452 = arith.constant 80 : index
    %c0_453 = arith.constant 0 : index
    %409 = vector.load %arg6[%c80_452, %c0_453] : memref<128x4xbf16, #tpu.memory_space<vmem>>, vector<16x4xbf16>
    tpu.vector_store %arg6[%c80_452, %c0_453], %408 {strides = array<i32>} : memref<128x4xbf16, #tpu.memory_space<vmem>>, vector<16x4xbf16>,
    %c2_i32_454 = arith.constant 2 : i32
    %410 = arith.addi %1, %c2_i32_454 : i32
    %c6_i32_455 = arith.constant 6 : i32
    %411 = arith.addi %410, %c6_i32_455 : i32
    %c0_456 = arith.constant 0 : index
    %412 = arith.index_cast %411 : i32 to index
    %c1_457 = arith.constant 1 : index
    %c0_458 = arith.constant 0 : index
    %413 = vector.load %arg2[%c0_456, %412, %c1_457, %c0_458] : memref<1x18x18x4xbf16, #tpu.memory_space<vmem>>, vector<1x1x16x4xbf16>
    %414 = vector.shape_cast %413 : vector<1x1x16x4xbf16> to vector<16x4xbf16>
    %c96_459 = arith.constant 96 : index
    %c0_460 = arith.constant 0 : index
    %415 = vector.load %arg6[%c96_459, %c0_460] : memref<128x4xbf16, #tpu.memory_space<vmem>>, vector<16x4xbf16>
    tpu.vector_store %arg6[%c96_459, %c0_460], %414 {strides = array<i32>} : memref<128x4xbf16, #tpu.memory_space<vmem>>, vector<16x4xbf16>,
    %c2_i32_461 = arith.constant 2 : i32
    %416 = arith.addi %1, %c2_i32_461 : i32
    %c7_i32_462 = arith.constant 7 : i32
    %417 = arith.addi %416, %c7_i32_462 : i32
    %c0_463 = arith.constant 0 : index
    %418 = arith.index_cast %417 : i32 to index
    %c1_464 = arith.constant 1 : index
    %c0_465 = arith.constant 0 : index
    %419 = vector.load %arg2[%c0_463, %418, %c1_464, %c0_465] : memref<1x18x18x4xbf16, #tpu.memory_space<vmem>>, vector<1x1x16x4xbf16>
    %420 = vector.shape_cast %419 : vector<1x1x16x4xbf16> to vector<16x4xbf16>
    %c112_466 = arith.constant 112 : index
    %c0_467 = arith.constant 0 : index
    %421 = vector.load %arg6[%c112_466, %c0_467] : memref<128x4xbf16, #tpu.memory_space<vmem>>, vector<16x4xbf16>
    tpu.vector_store %arg6[%c112_466, %c0_467], %420 {strides = array<i32>} : memref<128x4xbf16, #tpu.memory_space<vmem>>, vector<16x4xbf16>,
    %c0_468 = arith.constant 0 : index
    %c0_469 = arith.constant 0 : index
    %422 = vector.load %arg6[%c0_468, %c0_469] : memref<128x4xbf16, #tpu.memory_space<vmem>>, vector<128x4xbf16>
    %c7 = arith.constant 7 : index
    %c0_470 = arith.constant 0 : index
    %c0_471 = arith.constant 0 : index
    %423 = vector.load %arg3[%c7, %c0_470, %c0_471] : memref<9x4x128xbf16, #tpu.memory_space<vmem>>, vector<1x4x128xbf16>
    %424 = vector.shape_cast %423 : vector<1x4x128xbf16> to vector<4x128xbf16>
    %cst_472 = arith.constant dense<0.000000e+00> : vector<128x128xf32>
    %425 = tpu.matmul %422, %424, %cst_472 {dimension_numbers = #tpu.dot_dimension_numbers<[1], [0], [0], [1], [0, 0, 1, 1], [], []>} : vector<128x4xbf16>, vector<4x128xbf16>, vector<128x128xf32> -> vector<128x128xf32>
    %426 = arith.addf %373, %425 : vector<128x128xf32>
    %c2_i32_473 = arith.constant 2 : i32
    %427 = arith.addi %1, %c2_i32_473 : i32
    %c0_i32_474 = arith.constant 0 : i32
    %428 = arith.addi %427, %c0_i32_474 : i32
    %c0_475 = arith.constant 0 : index
    %429 = arith.index_cast %428 : i32 to index
    %c2_476 = arith.constant 2 : index
    %c0_477 = arith.constant 0 : index
    %430 = vector.load %arg2[%c0_475, %429, %c2_476, %c0_477] : memref<1x18x18x4xbf16, #tpu.memory_space<vmem>>, vector<1x1x16x4xbf16>
    %431 = vector.shape_cast %430 : vector<1x1x16x4xbf16> to vector<16x4xbf16>
    %c0_478 = arith.constant 0 : index
    %c0_479 = arith.constant 0 : index
    %432 = vector.load %arg6[%c0_478, %c0_479] : memref<128x4xbf16, #tpu.memory_space<vmem>>, vector<16x4xbf16>
    tpu.vector_store %arg6[%c0_478, %c0_479], %431 {strides = array<i32>} : memref<128x4xbf16, #tpu.memory_space<vmem>>, vector<16x4xbf16>,
    %c2_i32_480 = arith.constant 2 : i32
    %433 = arith.addi %1, %c2_i32_480 : i32
    %c1_i32_481 = arith.constant 1 : i32
    %434 = arith.addi %433, %c1_i32_481 : i32
    %c0_482 = arith.constant 0 : index
    %435 = arith.index_cast %434 : i32 to index
    %c2_483 = arith.constant 2 : index
    %c0_484 = arith.constant 0 : index
    %436 = vector.load %arg2[%c0_482, %435, %c2_483, %c0_484] : memref<1x18x18x4xbf16, #tpu.memory_space<vmem>>, vector<1x1x16x4xbf16>
    %437 = vector.shape_cast %436 : vector<1x1x16x4xbf16> to vector<16x4xbf16>
    %c16_485 = arith.constant 16 : index
    %c0_486 = arith.constant 0 : index
    %438 = vector.load %arg6[%c16_485, %c0_486] : memref<128x4xbf16, #tpu.memory_space<vmem>>, vector<16x4xbf16>
    tpu.vector_store %arg6[%c16_485, %c0_486], %437 {strides = array<i32>} : memref<128x4xbf16, #tpu.memory_space<vmem>>, vector<16x4xbf16>,
    %c2_i32_487 = arith.constant 2 : i32
    %439 = arith.addi %1, %c2_i32_487 : i32
    %c2_i32_488 = arith.constant 2 : i32
    %440 = arith.addi %439, %c2_i32_488 : i32
    %c0_489 = arith.constant 0 : index
    %441 = arith.index_cast %440 : i32 to index
    %c2_490 = arith.constant 2 : index
    %c0_491 = arith.constant 0 : index
    %442 = vector.load %arg2[%c0_489, %441, %c2_490, %c0_491] : memref<1x18x18x4xbf16, #tpu.memory_space<vmem>>, vector<1x1x16x4xbf16>
    %443 = vector.shape_cast %442 : vector<1x1x16x4xbf16> to vector<16x4xbf16>
    %c32_492 = arith.constant 32 : index
    %c0_493 = arith.constant 0 : index
    %444 = vector.load %arg6[%c32_492, %c0_493] : memref<128x4xbf16, #tpu.memory_space<vmem>>, vector<16x4xbf16>
    tpu.vector_store %arg6[%c32_492, %c0_493], %443 {strides = array<i32>} : memref<128x4xbf16, #tpu.memory_space<vmem>>, vector<16x4xbf16>,
    %c2_i32_494 = arith.constant 2 : i32
    %445 = arith.addi %1, %c2_i32_494 : i32
    %c3_i32_495 = arith.constant 3 : i32
    %446 = arith.addi %445, %c3_i32_495 : i32
    %c0_496 = arith.constant 0 : index
    %447 = arith.index_cast %446 : i32 to index
    %c2_497 = arith.constant 2 : index
    %c0_498 = arith.constant 0 : index
    %448 = vector.load %arg2[%c0_496, %447, %c2_497, %c0_498] : memref<1x18x18x4xbf16, #tpu.memory_space<vmem>>, vector<1x1x16x4xbf16>
    %449 = vector.shape_cast %448 : vector<1x1x16x4xbf16> to vector<16x4xbf16>
    %c48_499 = arith.constant 48 : index
    %c0_500 = arith.constant 0 : index
    %450 = vector.load %arg6[%c48_499, %c0_500] : memref<128x4xbf16, #tpu.memory_space<vmem>>, vector<16x4xbf16>
    tpu.vector_store %arg6[%c48_499, %c0_500], %449 {strides = array<i32>} : memref<128x4xbf16, #tpu.memory_space<vmem>>, vector<16x4xbf16>,
    %c2_i32_501 = arith.constant 2 : i32
    %451 = arith.addi %1, %c2_i32_501 : i32
    %c4_i32_502 = arith.constant 4 : i32
    %452 = arith.addi %451, %c4_i32_502 : i32
    %c0_503 = arith.constant 0 : index
    %453 = arith.index_cast %452 : i32 to index
    %c2_504 = arith.constant 2 : index
    %c0_505 = arith.constant 0 : index
    %454 = vector.load %arg2[%c0_503, %453, %c2_504, %c0_505] : memref<1x18x18x4xbf16, #tpu.memory_space<vmem>>, vector<1x1x16x4xbf16>
    %455 = vector.shape_cast %454 : vector<1x1x16x4xbf16> to vector<16x4xbf16>
    %c64_506 = arith.constant 64 : index
    %c0_507 = arith.constant 0 : index
    %456 = vector.load %arg6[%c64_506, %c0_507] : memref<128x4xbf16, #tpu.memory_space<vmem>>, vector<16x4xbf16>
    tpu.vector_store %arg6[%c64_506, %c0_507], %455 {strides = array<i32>} : memref<128x4xbf16, #tpu.memory_space<vmem>>, vector<16x4xbf16>,
    %c2_i32_508 = arith.constant 2 : i32
    %457 = arith.addi %1, %c2_i32_508 : i32
    %c5_i32_509 = arith.constant 5 : i32
    %458 = arith.addi %457, %c5_i32_509 : i32
    %c0_510 = arith.constant 0 : index
    %459 = arith.index_cast %458 : i32 to index
    %c2_511 = arith.constant 2 : index
    %c0_512 = arith.constant 0 : index
    %460 = vector.load %arg2[%c0_510, %459, %c2_511, %c0_512] : memref<1x18x18x4xbf16, #tpu.memory_space<vmem>>, vector<1x1x16x4xbf16>
    %461 = vector.shape_cast %460 : vector<1x1x16x4xbf16> to vector<16x4xbf16>
    %c80_513 = arith.constant 80 : index
    %c0_514 = arith.constant 0 : index
    %462 = vector.load %arg6[%c80_513, %c0_514] : memref<128x4xbf16, #tpu.memory_space<vmem>>, vector<16x4xbf16>
    tpu.vector_store %arg6[%c80_513, %c0_514], %461 {strides = array<i32>} : memref<128x4xbf16, #tpu.memory_space<vmem>>, vector<16x4xbf16>,
    %c2_i32_515 = arith.constant 2 : i32
    %463 = arith.addi %1, %c2_i32_515 : i32
    %c6_i32_516 = arith.constant 6 : i32
    %464 = arith.addi %463, %c6_i32_516 : i32
    %c0_517 = arith.constant 0 : index
    %465 = arith.index_cast %464 : i32 to index
    %c2_518 = arith.constant 2 : index
    %c0_519 = arith.constant 0 : index
    %466 = vector.load %arg2[%c0_517, %465, %c2_518, %c0_519] : memref<1x18x18x4xbf16, #tpu.memory_space<vmem>>, vector<1x1x16x4xbf16>
    %467 = vector.shape_cast %466 : vector<1x1x16x4xbf16> to vector<16x4xbf16>
    %c96_520 = arith.constant 96 : index
    %c0_521 = arith.constant 0 : index
    %468 = vector.load %arg6[%c96_520, %c0_521] : memref<128x4xbf16, #tpu.memory_space<vmem>>, vector<16x4xbf16>
    tpu.vector_store %arg6[%c96_520, %c0_521], %467 {strides = array<i32>} : memref<128x4xbf16, #tpu.memory_space<vmem>>, vector<16x4xbf16>,
    %c2_i32_522 = arith.constant 2 : i32
    %469 = arith.addi %1, %c2_i32_522 : i32
    %c7_i32_523 = arith.constant 7 : i32
    %470 = arith.addi %469, %c7_i32_523 : i32
    %c0_524 = arith.constant 0 : index
    %471 = arith.index_cast %470 : i32 to index
    %c2_525 = arith.constant 2 : index
    %c0_526 = arith.constant 0 : index
    %472 = vector.load %arg2[%c0_524, %471, %c2_525, %c0_526] : memref<1x18x18x4xbf16, #tpu.memory_space<vmem>>, vector<1x1x16x4xbf16>
    %473 = vector.shape_cast %472 : vector<1x1x16x4xbf16> to vector<16x4xbf16>
    %c112_527 = arith.constant 112 : index
    %c0_528 = arith.constant 0 : index
    %474 = vector.load %arg6[%c112_527, %c0_528] : memref<128x4xbf16, #tpu.memory_space<vmem>>, vector<16x4xbf16>
    tpu.vector_store %arg6[%c112_527, %c0_528], %473 {strides = array<i32>} : memref<128x4xbf16, #tpu.memory_space<vmem>>, vector<16x4xbf16>,
    %c0_529 = arith.constant 0 : index
    %c0_530 = arith.constant 0 : index
    %475 = vector.load %arg6[%c0_529, %c0_530] : memref<128x4xbf16, #tpu.memory_space<vmem>>, vector<128x4xbf16>
    %c8 = arith.constant 8 : index
    %c0_531 = arith.constant 0 : index
    %c0_532 = arith.constant 0 : index
    %476 = vector.load %arg3[%c8, %c0_531, %c0_532] : memref<9x4x128xbf16, #tpu.memory_space<vmem>>, vector<1x4x128xbf16>
    %477 = vector.shape_cast %476 : vector<1x4x128xbf16> to vector<4x128xbf16>
    %cst_533 = arith.constant dense<0.000000e+00> : vector<128x128xf32>
    %478 = tpu.matmul %475, %477, %cst_533 {dimension_numbers = #tpu.dot_dimension_numbers<[1], [0], [0], [1], [0, 0, 1, 1], [], []>} : vector<128x4xbf16>, vector<4x128xbf16>, vector<128x128xf32> -> vector<128x128xf32>
    %479 = arith.addf %426, %478 : vector<128x128xf32>
    %c0_534 = arith.constant 0 : index
    %c0_535 = arith.constant 0 : index
    %480 = vector.load %arg4[%c0_534, %c0_535] : memref<1x128xf32, #tpu.memory_space<vmem>>, vector<1x128xf32>
    %481 = vector.broadcast %480 : vector<1x128xf32> to vector<128x128xf32>
    %482 = arith.addf %479, %481 : vector<128x128xf32>
    %cst_536 = arith.constant 0.000000e+00 : f32
    %483 = vector.broadcast %cst_536 : f32 to vector<128x128xf32>
    %484 = arith.maximumf %482, %483 : vector<128x128xf32>
    %485 = vector.extract_strided_slice %484 {offsets = [0, 0], sizes = [128, 8], strides = [1, 1]} : vector<128x128xf32> to vector<128x8xf32>
    %c0_537 = arith.constant 0 : index
    %c0_538 = arith.constant 0 : index
    %c0_539 = arith.constant 0 : index
    %486 = vector.load %arg5[%c0_537, %c0_538, %c0_539] : memref<1x128x8xf32, #tpu.memory_space<vmem>>, vector<1x128x8xf32>
    %487 = vector.shape_cast %486 : vector<1x128x8xf32> to vector<128x8xf32>
    %488 = vector.shape_cast %485 : vector<128x8xf32> to vector<1x128x8xf32>
    tpu.vector_store %arg5[%c0_537, %c0_538, %c0_539], %488 {strides = array<i32>} : memref<1x128x8xf32, #tpu.memory_space<vmem>>, vector<1x128x8xf32>,
    return
  }
  func.func @transform_0(%arg0: i32, %arg1: i32) -> (i32, i32, i32, i32) {
    %c0_i32 = arith.constant 0 : i32
    %c0_i32_0 = arith.constant 0 : i32
    %c0_i32_1 = arith.constant 0 : i32
    %c0_i32_2 = arith.constant 0 : i32
    return %arg0, %c0_i32, %c0_i32_0, %c0_i32_1 : i32, i32, i32, i32
  }
  func.func @transform_1(%arg0: i32, %arg1: i32) -> (i32, i32, i32) {
    %c0_i32 = arith.constant 0 : i32
    %c0_i32_0 = arith.constant 0 : i32
    %c0_i32_1 = arith.constant 0 : i32
    %c0_i32_2 = arith.constant 0 : i32
    return %c0_i32, %c0_i32_0, %c0_i32_1 : i32, i32, i32
  }
  func.func @transform_2(%arg0: i32, %arg1: i32) -> (i32, i32) {
    %c0_i32 = arith.constant 0 : i32
    %c0_i32_0 = arith.constant 0 : i32
    %c0_i32_1 = arith.constant 0 : i32
    return %c0_i32, %c0_i32_0 : i32, i32
  }
  func.func @transform_3(%arg0: i32, %arg1: i32) -> (i32, i32, i32) {
    %c0_i32 = arith.constant 0 : i32
    %c0_i32_0 = arith.constant 0 : i32
    return %arg0, %arg1, %c0_i32 : i32, i32, i32
  }
}

</mosaic_0001>

<llo_original>
// kernel: tpu_custom_call.1
$region0: #{tpu_custom_call.1}
  #allocation0 [shape = 'u32[]', space=smem, size = 0x4, offset = 0x4, fixed_abs, tag = 'smem constant byte address 0x4 - core index']
  #allocation1 [shape = 'u32[144,128]{1,0:T(1,128)}', space=vmem, size = 0x12000, scoped, tag = 'internal scratch']
  #allocation2 [shape = 'bf16[128,4]{1,0:T(16,128)(2,1)}', space=vmem, size = 0x8000, scoped, tag = 'scratch operand']
  %s0 = inlined_call_operand.vmem [shape: bf16[2,18,18,4], index: 0, kind: input, shape index: {}]
  %s1 = inlined_call_operand.vmem [shape: bf16[9,4,128], index: 1, kind: input, shape index: {}]
  %s2 = inlined_call_operand.vmem [shape: f32[1,128], index: 2, kind: input, shape index: {}]
  %s3 = inlined_call_operand.vmem [shape: f32[2,256,8], index: 3, kind: output, shape index: {}]
  %s4 = sld [smem:[#allocation0]]
  $region45: #{tpu_custom_call.1} parent=0
    _
  %s6 = ssub.s32 1, %s4
  %s7 = scalar_select 0, %s6, %s4
  loop: start=0, step=1, limit=6
  $region2: #{tpu_custom_call.1} parent=0 // loop_pre_header
    _
  $region3: #{tpu_custom_call.1} parent=0 // loop_header
    %s9 = sphi 0, %s13
    %p10 = scmp.ge.s32.totalorder %s9, 6
    %s16 = sphi 0, %s28
    %s17 = sphi 0, %s24
    %s18 = sphi 0, %s16
    %s19 = sphi 0, %s17
    %s20 = sphi 0, %s18
    %s21 = sphi 0, %s19
    %s31 = sphi 0, %s33
    %s34 = sphi 0, %s31
    %s35 = sphi 0, %s34
    %s51 = sphi 0, %s35
    %s55 = sphi 0, %s55
    %s57 = sphi 0, %s55
    %s58 = sphi 0, %s57
    %s72 = sphi 0, %s58
    %s76 = sphi 0, %s76
    %s78 = sphi 0, %s76
    %s79 = sphi 0, %s78
    %s93 = sphi 0, %s79
    %s101 = sphi 0, %s103
    %s104 = sphi 0, %s101
    %s105 = sphi 0, %s104
    %s121 = sphi 0, %s105
  $region4: #{tpu_custom_call.1} parent=0 // loop_header_branch
    %12 = sbr.rel (%p10) target = $region8
  $region5: #{tpu_custom_call.1} parent=0 // loop_body
    %s14 = ssub.s32 %s9, 1
    %s15 = ssub.s32 %s9, 2
    %s22 = sadd.s32 1, %s17
    %p23 = scmp.ge.s32.totalorder %s22, 2
    %s24 = scalar_select %p23, 0, %s22
    %s25 = sadd.s32 1, %s16
    %s26 = scalar_select %p23, %s25, %s16
    %p27 = scmp.ge.s32.totalorder %s26, 2
    %s28 = scalar_select %p27, 0, %s26
    %s29 = ssub.s32 %s16, %s28
    %p30 = scmp.eq.s32.totalorder %s29, 0
    %s32 = sadd.s32 %s31, 1
    %s33 = scalar_select %p30, %s31, %s32
    %p36 = pneg %p30
    %p37 = scmp.eq.s32.totalorder %s9, 3
    %p38 = por %p36, %p37
    %p39 = scmp.ne.s32.totalorder %s31, %s34
    %p40 = scmp.eq.s32.totalorder %s9, 0
    %p41 = por %p39, %p40
    %p42 = scmp.ne.s32.totalorder %s31, %s34
    %p43 = scmp.eq.s32.totalorder %s14, 3
    %p44 = por %p42, %p43
    %p45 = scmp.ne.s32.totalorder %s34, %s35
    %p46 = scmp.eq.s32.totalorder %s14, 0
    %p47 = por %p45, %p46
    %p48 = scmp.ne.s32.totalorder %s34, %s35
    %p49 = scmp.eq.s32.totalorder %s15, 3
    %p50 = por %p48, %p49
    %p52 = scmp.ne.s32.totalorder %s35, %s51
    %p53 = scmp.eq.s32.totalorder %s15, 0
    %p54 = por %p52, %p53
    %s56 = sadd.s32 %s55, 1
    %p59 = scmp.eq.s32.totalorder %s9, 3
    %p60 = scmp.ne.s32.totalorder %s55, %s57
    %p61 = scmp.eq.s32.totalorder %s9, 0
    %p62 = por %p60, %p61
    %p63 = scmp.ne.s32.totalorder %s55, %s57
    %p64 = scmp.eq.s32.totalorder %s14, 3
    %p65 = por %p63, %p64
    %p66 = scmp.ne.s32.totalorder %s57, %s58
    %p67 = scmp.eq.s32.totalorder %s14, 0
    %p68 = por %p66, %p67
    %p69 = scmp.ne.s32.totalorder %s57, %s58
    %p70 = scmp.eq.s32.totalorder %s15, 3
    %p71 = por %p69, %p70
    %p73 = scmp.ne.s32.totalorder %s58, %s72
    %p74 = scmp.eq.s32.totalorder %s15, 0
    %p75 = por %p73, %p74
    %s77 = sadd.s32 %s76, 1
    %p80 = scmp.eq.s32.totalorder %s9, 3
    %p81 = scmp.ne.s32.totalorder %s76, %s78
    %p82 = scmp.eq.s32.totalorder %s9, 0
    %p83 = por %p81, %p82
    %p84 = scmp.ne.s32.totalorder %s76, %s78
    %p85 = scmp.eq.s32.totalorder %s14, 3
    %p86 = por %p84, %p85
    %p87 = scmp.ne.s32.totalorder %s78, %s79
    %p88 = scmp.eq.s32.totalorder %s14, 0
    %p89 = por %p87, %p88
    %p90 = scmp.ne.s32.totalorder %s78, %s79
    %p91 = scmp.eq.s32.totalorder %s15, 3
    %p92 = por %p90, %p91
    %p94 = scmp.ne.s32.totalorder %s79, %s93
    %p95 = scmp.eq.s32.totalorder %s15, 0
    %p96 = por %p94, %p95
    %s97 = ssub.s32 %s16, %s28
    %s98 = ssub.s32 %s17, %s24
    %s99 = sor.u32 %s97, %s98
    %p100 = scmp.eq.s32.totalorder %s99, 0
    %s102 = sadd.s32 %s101, 1
    %s103 = scalar_select %p100, %s101, %s102
    %p106 = pneg %p100
    %p107 = scmp.eq.s32.totalorder %s9, 3
    %p108 = por %p106, %p107
    %p109 = scmp.ne.s32.totalorder %s101, %s104
    %p110 = scmp.eq.s32.totalorder %s9, 0
    %p111 = por %p109, %p110
    %p112 = scmp.ne.s32.totalorder %s101, %s104
    %p113 = scmp.eq.s32.totalorder %s14, 3
    %p114 = por %p112, %p113
    %p115 = scmp.ne.s32.totalorder %s104, %s105
    %p116 = scmp.eq.s32.totalorder %s14, 0
    %p117 = por %p115, %p116
    %p118 = scmp.ne.s32.totalorder %s104, %s105
    %p119 = scmp.eq.s32.totalorder %s15, 3
    %p120 = por %p118, %p119
    %p122 = scmp.ne.s32.totalorder %s105, %s121
    %p123 = scmp.eq.s32.totalorder %s15, 0
    %p124 = por %p122, %p123
    %p125 = scmp.le.s32.totalorder 1, %s9
    %p126 = scmp.lt.s32.totalorder %s9, 5
    %p127 = pnand %p125, %p126
    %p128 = pneg %p127
    // Predicated region
    $region9: #{tpu_custom_call.1} parent=5 // pred_check
      _
    $region10: #{tpu_custom_call.1} parent=5 // pred_check_branch
      %130 = sbr.rel (%p127) target = $region12
    $region11: #{tpu_custom_call.1} parent=5 // pred_region
      %s131 = ssub.s32 %s9, 1
      // Predicated region
      $region13: #{tpu_custom_call.1} parent=11 // pred_check
        %p132 = pneg %p68
      $region14: #{tpu_custom_call.1} parent=11 // pred_check_branch
        %134 = sbr.rel (%p132) target = $region16
      $region15: #{tpu_custom_call.1} parent=11 // pred_region
        _
      $region16: #{tpu_custom_call.1} parent=11 // pred_fallthru
        _
      // Predicated region
      $region17: #{tpu_custom_call.1} parent=11 // pred_check
        %p135 = pneg %p89
      $region18: #{tpu_custom_call.1} parent=11 // pred_check_branch
        %137 = sbr.rel (%p135) target = $region20
      $region19: #{tpu_custom_call.1} parent=11 // pred_region
        _
      $region20: #{tpu_custom_call.1} parent=11 // pred_fallthru
        _
    $region12: #{tpu_custom_call.1} parent=5 // pred_fallthru
      _
    %p138 = scmp.lt.s32.totalorder %s9, 4
    // Predicated region
    $region21: #{tpu_custom_call.1} parent=5 // pred_check
      %p139 = pneg %p138
    $region22: #{tpu_custom_call.1} parent=5 // pred_check_branch
      %141 = sbr.rel (%p139) target = $region24
    $region23: #{tpu_custom_call.1} parent=5 // pred_region
      // Predicated region
      $region25: #{tpu_custom_call.1} parent=23 // pred_check
        %p142 = pneg %p41
      $region26: #{tpu_custom_call.1} parent=23 // pred_check_branch
        %144 = sbr.rel (%p142) target = $region28
      $region27: #{tpu_custom_call.1} parent=23 // pred_region
        %p145 = scmp.lt.s32.totalorder %s16, 1
        %s146 = scalar_select %p145, %s16, 1
        %s147 = smul.addr %s146, 54
        %s148 = smul.addr %s147, 4
        %s149 = scalar_lea.vmem %s0, %s148
      $region28: #{tpu_custom_call.1} parent=23 // pred_fallthru
        _
    $region24: #{tpu_custom_call.1} parent=5 // pred_fallthru
      _
    %p150 = scmp.le.s32.totalorder 1, %s9
    %p151 = scmp.lt.s32.totalorder %s9, 5
    %p152 = pnand %p150, %p151
    %p153 = pneg %p152
    // Predicated region
    $region29: #{tpu_custom_call.1} parent=5 // pred_check
      _
    $region30: #{tpu_custom_call.1} parent=5 // pred_check_branch
      %155 = sbr.rel (%p152) target = $region32
    $region31: #{tpu_custom_call.1} parent=5 // pred_region
      %s156 = ssub.s32 %s9, 1
      %p157 = scmp.lt.s32.totalorder %s18, 1
      %s158 = scalar_select %p157, %s18, 1
      %s159 = smul.addr %s158, 54
      %s160 = smul.addr %s159, 4
      %s161 = scalar_lea.vmem %s0, %s160
      %p162 = pneg %p47
      %p163 = pneg %p44
      %p164 = pneg %p68
      %p165 = pneg %p65
      %p166 = pneg %p89
      %p167 = pneg %p86
      %p168 = pneg %p117
      %p169 = pneg %p114
      %s170 = smul.u32 16, %s19
      %p171 = scmp.lt.s32.totalorder %s18, 1
      %s172 = scalar_select %p171, %s18, 1
      %p173 = scmp.lt.s32.totalorder %s170, 31
      %s174 = scalar_select %p173, %s170, 31
      %s175 = smul.addr %s172, 32
      %s176 = sadd.s32 %s174, %s175
      %s177 = smul.addr %s176, 8
      %s178 = scalar_lea.vmem %s3, %s177
      %p179 = scmp.lt.s32.totalorder %s18, 1
      %s180 = scalar_select %p179, %s18, 1
      %s181 = smul.addr %s180, 54
      %s182 = smul.addr %s181, 4
      %s183 = scalar_lea.vmem %s0, %s182
      %s184 = smul.u32 16, %s19
      %p185 = scmp.lt.s32.totalorder %s18, 1
      %s186 = scalar_select %p185, %s18, 1
      %p187 = scmp.lt.s32.totalorder %s184, 31
      %s188 = scalar_select %p187, %s184, 31
      %s189 = smul.addr %s186, 32
      %s190 = sadd.s32 %s188, %s189
      %s191 = smul.addr %s190, 8
      %s192 = scalar_lea.vmem %s3, %s191
      %s193 = smul.u32 16, %s19
      %s195 = smul.u32 %s19, 8
      %s196 = smul.u32 %s195, 3
      %s197 = smul.addr %s196, 4
      %s198 = scalar_lea.vmem %s183, %s197
      %v199 = vld [vmem:[%s198] sm:$0xf]
      %v200 = vld [vmem:[%s198 + $0x4] sm:$0xf]
      %v203 = vunpack.c.l.b16 %v199
      %v204 = vunpack.c.l.b16 %v200
      %v205 = vpack.c.b16 %v204, %v203
      %vm207 = vcmask 31744
      %208 = vst.msk [vmem:[#allocation2] sm:$0xff] %vm207, %v205
      %s209 = sadd.s32 %s195, 1
      %s210 = smul.u32 %s209, 3
      %s211 = smul.addr %s210, 4
      %s212 = scalar_lea.vmem %s183, %s211
      %v213 = vld [vmem:[%s212] sm:$0xf]
      %v214 = vld [vmem:[%s212 + $0x4] sm:$0xf]
      %v217 = vunpack.c.l.b16 %v213
      %v218 = vunpack.c.l.b16 %v214
      %v219 = vpack.c.b16 %v218, %v217
      %221 = vst.msk [vmem:[#allocation2 + $0x8] sm:$0xff] %vm207, %v219
      %s222 = sadd.s32 %s195, 2
      %s223 = smul.u32 %s222, 3
      %s224 = smul.addr %s223, 4
      %s225 = scalar_lea.vmem %s183, %s224
      %v226 = vld [vmem:[%s225] sm:$0xf]
      %v227 = vld [vmem:[%s225 + $0x4] sm:$0xf]
      %v230 = vunpack.c.l.b16 %v226
      %v231 = vunpack.c.l.b16 %v227
      %v232 = vpack.c.b16 %v231, %v230
      %234 = vst.msk [vmem:[#allocation2 + $0x10] sm:$0xff] %vm207, %v232
      %s235 = sadd.s32 %s195, 3
      %s236 = smul.u32 %s235, 3
      %s237 = smul.addr %s236, 4
      %s238 = scalar_lea.vmem %s183, %s237
      %v239 = vld [vmem:[%s238] sm:$0xf]
      %v240 = vld [vmem:[%s238 + $0x4] sm:$0xf]
      %v243 = vunpack.c.l.b16 %v239
      %v244 = vunpack.c.l.b16 %v240
      %v245 = vpack.c.b16 %v244, %v243
      %247 = vst.msk [vmem:[#allocation2 + $0x18] sm:$0xff] %vm207, %v245
      %s248 = sadd.s32 %s195, 4
      %s249 = smul.u32 %s248, 3
      %s250 = smul.addr %s249, 4
      %s251 = scalar_lea.vmem %s183, %s250
      %v252 = vld [vmem:[%s251] sm:$0xf]
      %v253 = vld [vmem:[%s251 + $0x4] sm:$0xf]
      %v256 = vunpack.c.l.b16 %v252
      %v257 = vunpack.c.l.b16 %v253
      %v258 = vpack.c.b16 %v257, %v256
      %260 = vst.msk [vmem:[#allocation2 + $0x20] sm:$0xff] %vm207, %v258
      %s261 = sadd.s32 %s195, 5
      %s262 = smul.u32 %s261, 3
      %s263 = smul.addr %s262, 4
      %s264 = scalar_lea.vmem %s183, %s263
      %v265 = vld [vmem:[%s264] sm:$0xf]
      %v266 = vld [vmem:[%s264 + $0x4] sm:$0xf]
      %v269 = vunpack.c.l.b16 %v265
      %v270 = vunpack.c.l.b16 %v266
      %v271 = vpack.c.b16 %v270, %v269
      %273 = vst.msk [vmem:[#allocation2 + $0x28] sm:$0xff] %vm207, %v271
      %s274 = sadd.s32 %s195, 6
      %s275 = smul.u32 %s274, 3
      %s276 = smul.addr %s275, 4
      %s277 = scalar_lea.vmem %s183, %s276
      %v278 = vld [vmem:[%s277] sm:$0xf]
      %v279 = vld [vmem:[%s277 + $0x4] sm:$0xf]
      %v282 = vunpack.c.l.b16 %v278
      %v283 = vunpack.c.l.b16 %v279
      %v284 = vpack.c.b16 %v283, %v282
      %286 = vst.msk [vmem:[#allocation2 + $0x30] sm:$0xff] %vm207, %v284
      %s287 = sadd.s32 %s195, 7
      %s288 = smul.u32 %s287, 3
      %s289 = smul.addr %s288, 4
      %s290 = scalar_lea.vmem %s183, %s289
      %v291 = vld [vmem:[%s290] sm:$0xf]
      %v292 = vld [vmem:[%s290 + $0x4] sm:$0xf]
      %v295 = vunpack.c.l.b16 %v291
      %v296 = vunpack.c.l.b16 %v292
      %v297 = vpack.c.b16 %v296, %v295
      %299 = vst.msk [vmem:[#allocation2 + $0x38] sm:$0xff] %vm207, %v297
      %v300 = vld [vmem:[#allocation2] sm:$0xff]
      %v301 = vld [vmem:[#allocation2 + $0x8] sm:$0xff]
      %v302 = vld [vmem:[#allocation2 + $0x10] sm:$0xff]
      %v303 = vld [vmem:[#allocation2 + $0x18] sm:$0xff]
      %v304 = vld [vmem:[#allocation2 + $0x20] sm:$0xff]
      %v305 = vld [vmem:[#allocation2 + $0x28] sm:$0xff]
      %v306 = vld [vmem:[#allocation2 + $0x30] sm:$0xff]
      %v307 = vld [vmem:[#allocation2 + $0x38] sm:$0xff]
      %v308 = vld [vmem:[%s1] sm:$0x3]
      %v309 = vld [vmem:[%s198] sm:$0xf]
      %v310 = vld [vmem:[%s198 + $0x4] sm:$0xf]
      %v311 = vld [vmem:[%s198 + $0x8] sm:$0x1]
      %v315 = vunpack.c.l.b16 %v309
      %v316 = vunpack.c.l.b16 %v310
      %v317 = vunpack.c.l.b16 %v311
      %v318 = vpack.c.b16 %v316, %v315
      %v319 = vpack.c.b16 %v317, %v317
      %vm320 = vsmask.f32 7424
      %v322 = vshrl.u32 %v318, 16
      %v324 = vshll.u32 %v318, 16
      %v326 = vrot.slane %v324, 1
      %v327 = vor.u32 %v322, %v326
      %v329 = vshll.u32 %v319, 16
      %v331 = vrot.slane %v329, 1
      %v332 = vsel %vm320, %v327, %v331
      %334 = vst.msk [vmem:[#allocation2] sm:$0xff] %vm207, %v332
      %v335 = vld [vmem:[%s212] sm:$0xf]
      %v336 = vld [vmem:[%s212 + $0x4] sm:$0xf]
      %v337 = vld [vmem:[%s212 + $0x8] sm:$0x1]
      %v341 = vunpack.c.l.b16 %v335
      %v342 = vunpack.c.l.b16 %v336
      %v343 = vunpack.c.l.b16 %v337
      %v344 = vpack.c.b16 %v342, %v341
      %v345 = vpack.c.b16 %v343, %v343
      %v347 = vshrl.u32 %v344, 16
      %v349 = vshll.u32 %v344, 16
      %v351 = vrot.slane %v349, 1
      %v352 = vor.u32 %v347, %v351
      %v354 = vshll.u32 %v345, 16
      %v356 = vrot.slane %v354, 1
      %v357 = vsel %vm320, %v352, %v356
      %359 = vst.msk [vmem:[#allocation2 + $0x8] sm:$0xff] %vm207, %v357
      %v360 = vld [vmem:[%s225] sm:$0xf]
      %v361 = vld [vmem:[%s225 + $0x4] sm:$0xf]
      %v362 = vld [vmem:[%s225 + $0x8] sm:$0x1]
      %v366 = vunpack.c.l.b16 %v360
      %v367 = vunpack.c.l.b16 %v361
      %v368 = vunpack.c.l.b16 %v362
      %v369 = vpack.c.b16 %v367, %v366
      %v370 = vpack.c.b16 %v368, %v368
      %v372 = vshrl.u32 %v369, 16
      %v374 = vshll.u32 %v369, 16
      %v376 = vrot.slane %v374, 1
      %v377 = vor.u32 %v372, %v376
      %v379 = vshll.u32 %v370, 16
      %v381 = vrot.slane %v379, 1
      %v382 = vsel %vm320, %v377, %v381
      %384 = vst.msk [vmem:[#allocation2 + $0x10] sm:$0xff] %vm207, %v382
      %v385 = vld [vmem:[%s238] sm:$0xf]
      %v386 = vld [vmem:[%s238 + $0x4] sm:$0xf]
      %v387 = vld [vmem:[%s238 + $0x8] sm:$0x1]
      %v391 = vunpack.c.l.b16 %v385
      %v392 = vunpack.c.l.b16 %v386
      %v393 = vunpack.c.l.b16 %v387
      %v394 = vpack.c.b16 %v392, %v391
      %v395 = vpack.c.b16 %v393, %v393
      %v397 = vshrl.u32 %v394, 16
      %v399 = vshll.u32 %v394, 16
      %v401 = vrot.slane %v399, 1
      %v402 = vor.u32 %v397, %v401
      %v404 = vshll.u32 %v395, 16
      %v406 = vrot.slane %v404, 1
      %v407 = vsel %vm320, %v402, %v406
      %409 = vst.msk [vmem:[#allocation2 + $0x18] sm:$0xff] %vm207, %v407
      %v410 = vld [vmem:[%s251] sm:$0xf]
      %v411 = vld [vmem:[%s251 + $0x4] sm:$0xf]
      %v412 = vld [vmem:[%s251 + $0x8] sm:$0x1]
      %v416 = vunpack.c.l.b16 %v410
      %v417 = vunpack.c.l.b16 %v411
      %v418 = vunpack.c.l.b16 %v412
      %v419 = vpack.c.b16 %v417, %v416
      %v420 = vpack.c.b16 %v418, %v418
      %v422 = vshrl.u32 %v419, 16
      %v424 = vshll.u32 %v419, 16
      %v426 = vrot.slane %v424, 1
      %v427 = vor.u32 %v422, %v426
      %v429 = vshll.u32 %v420, 16
      %v431 = vrot.slane %v429, 1
      %v432 = vsel %vm320, %v427, %v431
      %434 = vst.msk [vmem:[#allocation2 + $0x20] sm:$0xff] %vm207, %v432
      %v435 = vld [vmem:[%s264] sm:$0xf]
      %v436 = vld [vmem:[%s264 + $0x4] sm:$0xf]
      %v437 = vld [vmem:[%s264 + $0x8] sm:$0x1]
      %v441 = vunpack.c.l.b16 %v435
      %v442 = vunpack.c.l.b16 %v436
      %v443 = vunpack.c.l.b16 %v437
      %v444 = vpack.c.b16 %v442, %v441
      %v445 = vpack.c.b16 %v443, %v443
      %v447 = vshrl.u32 %v444, 16
      %v449 = vshll.u32 %v444, 16
      %v451 = vrot.slane %v449, 1
      %v452 = vor.u32 %v447, %v451
      %v454 = vshll.u32 %v445, 16
      %v456 = vrot.slane %v454, 1
      %v457 = vsel %vm320, %v452, %v456
      %459 = vst.msk [vmem:[#allocation2 + $0x28] sm:$0xff] %vm207, %v457
      %v460 = vld [vmem:[%s277] sm:$0xf]
      %v461 = vld [vmem:[%s277 + $0x4] sm:$0xf]
      %v462 = vld [vmem:[%s277 + $0x8] sm:$0x1]
      %v466 = vunpack.c.l.b16 %v460
      %v467 = vunpack.c.l.b16 %v461
      %v468 = vunpack.c.l.b16 %v462
      %v469 = vpack.c.b16 %v467, %v466
      %v470 = vpack.c.b16 %v468, %v468
      %v472 = vshrl.u32 %v469, 16
      %v474 = vshll.u32 %v469, 16
      %v476 = vrot.slane %v474, 1
      %v477 = vor.u32 %v472, %v476
      %v479 = vshll.u32 %v470, 16
      %v481 = vrot.slane %v479, 1
      %v482 = vsel %vm320, %v477, %v481
      %484 = vst.msk [vmem:[#allocation2 + $0x30] sm:$0xff] %vm207, %v482
      %v485 = vld [vmem:[%s290] sm:$0xf]
      %v486 = vld [vmem:[%s290 + $0x4] sm:$0xf]
      %v487 = vld [vmem:[%s290 + $0x8] sm:$0x1]
      %v491 = vunpack.c.l.b16 %v485
      %v492 = vunpack.c.l.b16 %v486
      %v493 = vunpack.c.l.b16 %v487
      %v494 = vpack.c.b16 %v492, %v491
      %v495 = vpack.c.b16 %v493, %v493
      %v497 = vshrl.u32 %v494, 16
      %v499 = vshll.u32 %v494, 16
      %v501 = vrot.slane %v499, 1
      %v502 = vor.u32 %v497, %v501
      %v504 = vshll.u32 %v495, 16
      %v506 = vrot.slane %v504, 1
      %v507 = vsel %vm320, %v502, %v506
      %509 = vst.msk [vmem:[#allocation2 + $0x38] sm:$0xff] %vm207, %v507
      %v510 = vld [vmem:[#allocation2] sm:$0xff]
      %v511 = vld [vmem:[#allocation2 + $0x8] sm:$0xff]
      %v512 = vld [vmem:[#allocation2 + $0x10] sm:$0xff]
      %v513 = vld [vmem:[#allocation2 + $0x18] sm:$0xff]
      %v514 = vld [vmem:[#allocation2 + $0x20] sm:$0xff]
      %v515 = vld [vmem:[#allocation2 + $0x28] sm:$0xff]
      %v516 = vld [vmem:[#allocation2 + $0x30] sm:$0xff]
      %v517 = vld [vmem:[#allocation2 + $0x38] sm:$0xff]
      %s518 = scalar_lea.vmem %s1, 2
      %v519 = vld [vmem:[%s518] sm:$0x3]
      %v521 = vsel %vm207, %v510, 0
      %v524 = vsel %vm207, %v511, 0
      %v527 = vsel %vm207, %v512, 0
      %v530 = vsel %vm207, %v513, 0
      %v533 = vsel %vm207, %v514, 0
      %v536 = vsel %vm207, %v515, 0
      %v539 = vsel %vm207, %v516, 0
      %v542 = vsel %vm207, %v517, 0
      %vm544 = vcmask 1041408
      %v546 = vsel %vm544, %v519, 0
      %548 = vmatprep.subr.bf16.mxu0 0
      %549 = vmatpush1.bf16.msra.mxu0 %v546
      %550 = vmatprep.subr.bf16.mxu0 0
      %551 = vmatpush1.bf16.msra.mxu0 0
      %552 = vmatprep.subr.bf16.mxu0 0
      %553 = vmatpush1.bf16.msra.mxu0 0
      %554 = vmatprep.subr.bf16.mxu0 0
      %555 = vmatpush1.bf16.msra.mxu0 0
      %556 = vmatprep.subr.bf16.mxu0 0
      %557 = vmatpush1.bf16.msra.mxu0 0
      %558 = vmatprep.subr.bf16.mxu0 0
      %559 = vmatpush1.bf16.msra.mxu0 0
      %560 = vmatprep.subr.bf16.mxu0 0
      %561 = vmatpush1.bf16.msra.mxu0 0
      %562 = vmatprep.subr.bf16.mxu0 0
      %563 = vmatpush1.bf16.msra.mxu0 0
      %564 = vmatprep.subr.bf16.mxu0 0
      %565 = vmatpush1.bf16.msra.mxu0 0
      %566 = vmatprep.subr.bf16.mxu0 0
      %567 = vmatpush1.bf16.msra.mxu0 0
      %568 = vmatprep.subr.bf16.mxu0 0
      %569 = vmatpush1.bf16.msra.mxu0 0
      %570 = vmatprep.subr.bf16.mxu0 0
      %571 = vmatpush1.bf16.msra.mxu0 0
      %572 = vmatprep.subr.bf16.mxu0 0
      %573 = vmatpush1.bf16.msra.mxu0 0
      %574 = vmatprep.subr.bf16.mxu0 0
      %575 = vmatpush1.bf16.msra.mxu0 0
      %576 = vmatprep.subr.bf16.mxu0 0
      %577 = vmatpush1.bf16.msra.mxu0 0
      %578 = vmatprep.subr.bf16.mxu0 0
      %579 = vmatpush1.bf16.msra.mxu0 0
      %580 = vmatprep.mubr.bf16.mxu0 0
      %581 = vmatmul.mubr.bf16.gmra.mrb[0].mxu0 %v521
      %v582 = vpop.f32.mrb[0].mxu0
      %v583 = vadd.f32 0.0, %v582
      %v584 = vpop.f32.mrb[0].mxu0
      %v585 = vpop.f32.mrb[0].mxu0
      %v586 = vadd.f32 0.0, %v585
      %v587 = vpop.f32.mrb[0].mxu0
      %588 = vmatprep.mubr.bf16.mxu0 0
      %589 = vmatmul.mubr.bf16.gmra.mrb[0].mxu0 %v524
      %v590 = vpop.f32.mrb[0].mxu0
      %v591 = vadd.f32 0.0, %v590
      %v592 = vpop.f32.mrb[0].mxu0
      %v593 = vpop.f32.mrb[0].mxu0
      %v594 = vadd.f32 0.0, %v593
      %v595 = vpop.f32.mrb[0].mxu0
      %596 = vmatprep.mubr.bf16.mxu0 0
      %597 = vmatmul.mubr.bf16.gmra.mrb[0].mxu0 %v527
      %v598 = vpop.f32.mrb[0].mxu0
      %v599 = vadd.f32 0.0, %v598
      %v600 = vpop.f32.mrb[0].mxu0
      %v601 = vpop.f32.mrb[0].mxu0
      %v602 = vadd.f32 0.0, %v601
      %v603 = vpop.f32.mrb[0].mxu0
      %604 = vmatprep.mubr.bf16.mxu0 0
      %605 = vmatmul.mubr.bf16.gmra.mrb[0].mxu0 %v530
      %v606 = vpop.f32.mrb[0].mxu0
      %v607 = vadd.f32 0.0, %v606
      %v608 = vpop.f32.mrb[0].mxu0
      %v609 = vpop.f32.mrb[0].mxu0
      %v610 = vadd.f32 0.0, %v609
      %v611 = vpop.f32.mrb[0].mxu0
      %612 = vmatprep.mubr.bf16.mxu0 0
      %613 = vmatmul.mubr.bf16.gmra.mrb[0].mxu0 %v533
      %v614 = vpop.f32.mrb[0].mxu0
      %v615 = vadd.f32 0.0, %v614
      %v616 = vpop.f32.mrb[0].mxu0
      %v617 = vpop.f32.mrb[0].mxu0
      %v618 = vadd.f32 0.0, %v617
      %v619 = vpop.f32.mrb[0].mxu0
      %620 = vmatprep.mubr.bf16.mxu0 0
      %621 = vmatmul.mubr.bf16.gmra.mrb[0].mxu0 %v536
      %v622 = vpop.f32.mrb[0].mxu0
      %v623 = vadd.f32 0.0, %v622
      %v624 = vpop.f32.mrb[0].mxu0
      %v625 = vpop.f32.mrb[0].mxu0
      %v626 = vadd.f32 0.0, %v625
      %v627 = vpop.f32.mrb[0].mxu0
      %628 = vmatprep.mubr.bf16.mxu0 0
      %629 = vmatmul.mubr.bf16.gmra.mrb[0].mxu0 %v539
      %v630 = vpop.f32.mrb[0].mxu0
      %v631 = vadd.f32 0.0, %v630
      %v632 = vpop.f32.mrb[0].mxu0
      %v633 = vpop.f32.mrb[0].mxu0
      %v634 = vadd.f32 0.0, %v633
      %v635 = vpop.f32.mrb[0].mxu0
      %636 = vmatprep.mubr.bf16.mxu0 0
      %637 = vmatmul.mubr.bf16.gmra.mrb[0].mxu0 %v542
      %v638 = vpop.f32.mrb[0].mxu0
      %v639 = vadd.f32 0.0, %v638
      %v640 = vpop.f32.mrb[0].mxu0
      %v641 = vpop.f32.mrb[0].mxu0
      %v642 = vadd.f32 0.0, %v641
      %v643 = vpop.f32.mrb[0].mxu0
      %644 = vdwg.mxu0
      %v646 = vsel %vm207, %v300, 0
      %v649 = vsel %vm207, %v301, 0
      %v652 = vsel %vm207, %v302, 0
      %v655 = vsel %vm207, %v303, 0
      %v658 = vsel %vm207, %v304, 0
      %v661 = vsel %vm207, %v305, 0
      %v664 = vsel %vm207, %v306, 0
      %v667 = vsel %vm207, %v307, 0
      %v670 = vsel %vm544, %v308, 0
      %672 = vmatprep.subr.bf16.mxu0 0
      %673 = vmatpush1.bf16.msra.mxu0 %v670
      %674 = vmatprep.subr.bf16.mxu0 0
      %675 = vmatpush1.bf16.msra.mxu0 0
      %676 = vmatprep.subr.bf16.mxu0 0
      %677 = vmatpush1.bf16.msra.mxu0 0
      %678 = vmatprep.subr.bf16.mxu0 0
      %679 = vmatpush1.bf16.msra.mxu0 0
      %680 = vmatprep.subr.bf16.mxu0 0
      %681 = vmatpush1.bf16.msra.mxu0 0
      %682 = vmatprep.subr.bf16.mxu0 0
      %683 = vmatpush1.bf16.msra.mxu0 0
      %684 = vmatprep.subr.bf16.mxu0 0
      %685 = vmatpush1.bf16.msra.mxu0 0
      %686 = vmatprep.subr.bf16.mxu0 0
      %687 = vmatpush1.bf16.msra.mxu0 0
      %688 = vmatprep.subr.bf16.mxu0 0
      %689 = vmatpush1.bf16.msra.mxu0 0
      %690 = vmatprep.subr.bf16.mxu0 0
      %691 = vmatpush1.bf16.msra.mxu0 0
      %692 = vmatprep.subr.bf16.mxu0 0
      %693 = vmatpush1.bf16.msra.mxu0 0
      %694 = vmatprep.subr.bf16.mxu0 0
      %695 = vmatpush1.bf16.msra.mxu0 0
      %696 = vmatprep.subr.bf16.mxu0 0
      %697 = vmatpush1.bf16.msra.mxu0 0
      %698 = vmatprep.subr.bf16.mxu0 0
      %699 = vmatpush1.bf16.msra.mxu0 0
      %700 = vmatprep.subr.bf16.mxu0 0
      %701 = vmatpush1.bf16.msra.mxu0 0
      %702 = vmatprep.subr.bf16.mxu0 0
      %703 = vmatpush1.bf16.msra.mxu0 0
      %704 = vmatprep.mubr.bf16.mxu0 0
      %705 = vmatmul.mubr.bf16.gmra.mrb[0].mxu0 %v646
      %v706 = vpop.f32.mrb[0].mxu0
      %v707 = vadd.f32 %v583, %v706
      %v708 = vpop.f32.mrb[0].mxu0
      %v709 = vpop.f32.mrb[0].mxu0
      %v710 = vadd.f32 %v586, %v709
      %v711 = vpop.f32.mrb[0].mxu0
      %712 = vmatprep.mubr.bf16.mxu0 0
      %713 = vmatmul.mubr.bf16.gmra.mrb[0].mxu0 %v649
      %v714 = vpop.f32.mrb[0].mxu0
      %v715 = vadd.f32 %v591, %v714
      %v716 = vpop.f32.mrb[0].mxu0
      %v717 = vpop.f32.mrb[0].mxu0
      %v718 = vadd.f32 %v594, %v717
      %v719 = vpop.f32.mrb[0].mxu0
      %720 = vmatprep.mubr.bf16.mxu0 0
      %721 = vmatmul.mubr.bf16.gmra.mrb[0].mxu0 %v652
      %v722 = vpop.f32.mrb[0].mxu0
      %v723 = vadd.f32 %v599, %v722
      %v724 = vpop.f32.mrb[0].mxu0
      %v725 = vpop.f32.mrb[0].mxu0
      %v726 = vadd.f32 %v602, %v725
      %v727 = vpop.f32.mrb[0].mxu0
      %728 = vmatprep.mubr.bf16.mxu0 0
      %729 = vmatmul.mubr.bf16.gmra.mrb[0].mxu0 %v655
      %v730 = vpop.f32.mrb[0].mxu0
      %v731 = vadd.f32 %v607, %v730
      %v732 = vpop.f32.mrb[0].mxu0
      %v733 = vpop.f32.mrb[0].mxu0
      %v734 = vadd.f32 %v610, %v733
      %v735 = vpop.f32.mrb[0].mxu0
      %736 = vmatprep.mubr.bf16.mxu0 0
      %737 = vmatmul.mubr.bf16.gmra.mrb[0].mxu0 %v658
      %v738 = vpop.f32.mrb[0].mxu0
      %v739 = vadd.f32 %v615, %v738
      %v740 = vpop.f32.mrb[0].mxu0
      %v741 = vpop.f32.mrb[0].mxu0
      %v742 = vadd.f32 %v618, %v741
      %v743 = vpop.f32.mrb[0].mxu0
      %744 = vmatprep.mubr.bf16.mxu0 0
      %745 = vmatmul.mubr.bf16.gmra.mrb[0].mxu0 %v661
      %v746 = vpop.f32.mrb[0].mxu0
      %v747 = vadd.f32 %v623, %v746
      %v748 = vpop.f32.mrb[0].mxu0
      %v749 = vpop.f32.mrb[0].mxu0
      %v750 = vadd.f32 %v626, %v749
      %v751 = vpop.f32.mrb[0].mxu0
      %752 = vmatprep.mubr.bf16.mxu0 0
      %753 = vmatmul.mubr.bf16.gmra.mrb[0].mxu0 %v664
      %v754 = vpop.f32.mrb[0].mxu0
      %v755 = vadd.f32 %v631, %v754
      %v756 = vpop.f32.mrb[0].mxu0
      %v757 = vpop.f32.mrb[0].mxu0
      %v758 = vadd.f32 %v634, %v757
      %v759 = vpop.f32.mrb[0].mxu0
      %760 = vmatprep.mubr.bf16.mxu0 0
      %761 = vmatmul.mubr.bf16.gmra.mrb[0].mxu0 %v667
      %v762 = vpop.f32.mrb[0].mxu0
      %v763 = vadd.f32 %v639, %v762
      %v764 = vpop.f32.mrb[0].mxu0
      %v765 = vpop.f32.mrb[0].mxu0
      %v766 = vadd.f32 %v642, %v765
      %v767 = vpop.f32.mrb[0].mxu0
      %768 = vdwg.mxu0
      %v769 = vld [vmem:[%s198] sm:$0xe]
      %v770 = vld [vmem:[%s198 + $0x4] sm:$0xf]
      %v771 = vld [vmem:[%s198 + $0x8] sm:$0x1]
      %v775 = vunpack.c.l.b16 %v769
      %v776 = vunpack.c.l.b16 %v770
      %v777 = vunpack.c.l.b16 %v771
      %v778 = vpack.c.b16 %v776, %v775
      %v779 = vpack.c.b16 %v777, %v777
      %vm780 = vcmask 1046528
      %v781 = vrot.slane %v778, 1
      %v782 = vrot.slane %v779, 1
      %v783 = vsel %vm780, %v781, %v782
      %785 = vst.msk [vmem:[#allocation2] sm:$0xff] %vm207, %v783
      %v786 = vld [vmem:[%s212] sm:$0xe]
      %v787 = vld [vmem:[%s212 + $0x4] sm:$0xf]
      %v788 = vld [vmem:[%s212 + $0x8] sm:$0x1]
      %v792 = vunpack.c.l.b16 %v786
      %v793 = vunpack.c.l.b16 %v787
      %v794 = vunpack.c.l.b16 %v788
      %v795 = vpack.c.b16 %v793, %v792
      %v796 = vpack.c.b16 %v794, %v794
      %v797 = vrot.slane %v795, 1
      %v798 = vrot.slane %v796, 1
      %v799 = vsel %vm780, %v797, %v798
      %801 = vst.msk [vmem:[#allocation2 + $0x8] sm:$0xff] %vm207, %v799
      %v802 = vld [vmem:[%s225] sm:$0xe]
      %v803 = vld [vmem:[%s225 + $0x4] sm:$0xf]
      %v804 = vld [vmem:[%s225 + $0x8] sm:$0x1]
      %v808 = vunpack.c.l.b16 %v802
      %v809 = vunpack.c.l.b16 %v803
      %v810 = vunpack.c.l.b16 %v804
      %v811 = vpack.c.b16 %v809, %v808
      %v812 = vpack.c.b16 %v810, %v810
      %v813 = vrot.slane %v811, 1
      %v814 = vrot.slane %v812, 1
      %v815 = vsel %vm780, %v813, %v814
      %817 = vst.msk [vmem:[#allocation2 + $0x10] sm:$0xff] %vm207, %v815
      %v818 = vld [vmem:[%s238] sm:$0xe]
      %v819 = vld [vmem:[%s238 + $0x4] sm:$0xf]
      %v820 = vld [vmem:[%s238 + $0x8] sm:$0x1]
      %v824 = vunpack.c.l.b16 %v818
      %v825 = vunpack.c.l.b16 %v819
      %v826 = vunpack.c.l.b16 %v820
      %v827 = vpack.c.b16 %v825, %v824
      %v828 = vpack.c.b16 %v826, %v826
      %v829 = vrot.slane %v827, 1
      %v830 = vrot.slane %v828, 1
      %v831 = vsel %vm780, %v829, %v830
      %833 = vst.msk [vmem:[#allocation2 + $0x18] sm:$0xff] %vm207, %v831
      %v834 = vld [vmem:[%s251] sm:$0xe]
      %v835 = vld [vmem:[%s251 + $0x4] sm:$0xf]
      %v836 = vld [vmem:[%s251 + $0x8] sm:$0x1]
      %v840 = vunpack.c.l.b16 %v834
      %v841 = vunpack.c.l.b16 %v835
      %v842 = vunpack.c.l.b16 %v836
      %v843 = vpack.c.b16 %v841, %v840
      %v844 = vpack.c.b16 %v842, %v842
      %v845 = vrot.slane %v843, 1
      %v846 = vrot.slane %v844, 1
      %v847 = vsel %vm780, %v845, %v846
      %849 = vst.msk [vmem:[#allocation2 + $0x20] sm:$0xff] %vm207, %v847
      %v850 = vld [vmem:[%s264] sm:$0xe]
      %v851 = vld [vmem:[%s264 + $0x4] sm:$0xf]
      %v852 = vld [vmem:[%s264 + $0x8] sm:$0x1]
      %v856 = vunpack.c.l.b16 %v850
      %v857 = vunpack.c.l.b16 %v851
      %v858 = vunpack.c.l.b16 %v852
      %v859 = vpack.c.b16 %v857, %v856
      %v860 = vpack.c.b16 %v858, %v858
      %v861 = vrot.slane %v859, 1
      %v862 = vrot.slane %v860, 1
      %v863 = vsel %vm780, %v861, %v862
      %865 = vst.msk [vmem:[#allocation2 + $0x28] sm:$0xff] %vm207, %v863
      %v866 = vld [vmem:[%s277] sm:$0xe]
      %v867 = vld [vmem:[%s277 + $0x4] sm:$0xf]
      %v868 = vld [vmem:[%s277 + $0x8] sm:$0x1]
      %v872 = vunpack.c.l.b16 %v866
      %v873 = vunpack.c.l.b16 %v867
      %v874 = vunpack.c.l.b16 %v868
      %v875 = vpack.c.b16 %v873, %v872
      %v876 = vpack.c.b16 %v874, %v874
      %v877 = vrot.slane %v875, 1
      %v878 = vrot.slane %v876, 1
      %v879 = vsel %vm780, %v877, %v878
      %881 = vst.msk [vmem:[#allocation2 + $0x30] sm:$0xff] %vm207, %v879
      %v882 = vld [vmem:[%s290] sm:$0xe]
      %v883 = vld [vmem:[%s290 + $0x4] sm:$0xf]
      %v884 = vld [vmem:[%s290 + $0x8] sm:$0x1]
      %v888 = vunpack.c.l.b16 %v882
      %v889 = vunpack.c.l.b16 %v883
      %v890 = vunpack.c.l.b16 %v884
      %v891 = vpack.c.b16 %v889, %v888
      %v892 = vpack.c.b16 %v890, %v890
      %v893 = vrot.slane %v891, 1
      %v894 = vrot.slane %v892, 1
      %v895 = vsel %vm780, %v893, %v894
      %897 = vst.msk [vmem:[#allocation2 + $0x38] sm:$0xff] %vm207, %v895
      %v898 = vld [vmem:[#allocation2] sm:$0xff]
      %v899 = vld [vmem:[#allocation2 + $0x8] sm:$0xff]
      %v900 = vld [vmem:[#allocation2 + $0x10] sm:$0xff]
      %v901 = vld [vmem:[#allocation2 + $0x18] sm:$0xff]
      %v902 = vld [vmem:[#allocation2 + $0x20] sm:$0xff]
      %v903 = vld [vmem:[#allocation2 + $0x28] sm:$0xff]
      %v904 = vld [vmem:[#allocation2 + $0x30] sm:$0xff]
      %v905 = vld [vmem:[#allocation2 + $0x38] sm:$0xff]
      %s906 = scalar_lea.vmem %s1, 4
      %v907 = vld [vmem:[%s906] sm:$0x3]
      %v909 = vsel %vm207, %v898, 0
      %v912 = vsel %vm207, %v899, 0
      %v915 = vsel %vm207, %v900, 0
      %v918 = vsel %vm207, %v901, 0
      %v921 = vsel %vm207, %v902, 0
      %v924 = vsel %vm207, %v903, 0
      %v927 = vsel %vm207, %v904, 0
      %v930 = vsel %vm207, %v905, 0
      %v933 = vsel %vm544, %v907, 0
      %935 = vmatprep.subr.bf16.mxu0 0
      %936 = vmatpush1.bf16.msra.mxu0 %v933
      %937 = vmatprep.subr.bf16.mxu0 0
      %938 = vmatpush1.bf16.msra.mxu0 0
      %939 = vmatprep.subr.bf16.mxu0 0
      %940 = vmatpush1.bf16.msra.mxu0 0
      %941 = vmatprep.subr.bf16.mxu0 0
      %942 = vmatpush1.bf16.msra.mxu0 0
      %943 = vmatprep.subr.bf16.mxu0 0
      %944 = vmatpush1.bf16.msra.mxu0 0
      %945 = vmatprep.subr.bf16.mxu0 0
      %946 = vmatpush1.bf16.msra.mxu0 0
      %947 = vmatprep.subr.bf16.mxu0 0
      %948 = vmatpush1.bf16.msra.mxu0 0
      %949 = vmatprep.subr.bf16.mxu0 0
      %950 = vmatpush1.bf16.msra.mxu0 0
      %951 = vmatprep.subr.bf16.mxu0 0
      %952 = vmatpush1.bf16.msra.mxu0 0
      %953 = vmatprep.subr.bf16.mxu0 0
      %954 = vmatpush1.bf16.msra.mxu0 0
      %955 = vmatprep.subr.bf16.mxu0 0
      %956 = vmatpush1.bf16.msra.mxu0 0
      %957 = vmatprep.subr.bf16.mxu0 0
      %958 = vmatpush1.bf16.msra.mxu0 0
      %959 = vmatprep.subr.bf16.mxu0 0
      %960 = vmatpush1.bf16.msra.mxu0 0
      %961 = vmatprep.subr.bf16.mxu0 0
      %962 = vmatpush1.bf16.msra.mxu0 0
      %963 = vmatprep.subr.bf16.mxu0 0
      %964 = vmatpush1.bf16.msra.mxu0 0
      %965 = vmatprep.subr.bf16.mxu0 0
      %966 = vmatpush1.bf16.msra.mxu0 0
      %967 = vmatprep.mubr.bf16.mxu0 0
      %968 = vmatmul.mubr.bf16.gmra.mrb[0].mxu0 %v909
      %v969 = vpop.f32.mrb[0].mxu0
      %v970 = vadd.f32 0.0, %v969
      %v971 = vpop.f32.mrb[0].mxu0
      %v972 = vpop.f32.mrb[0].mxu0
      %v973 = vadd.f32 0.0, %v972
      %v974 = vpop.f32.mrb[0].mxu0
      %975 = vmatprep.mubr.bf16.mxu0 0
      %976 = vmatmul.mubr.bf16.gmra.mrb[0].mxu0 %v912
      %v977 = vpop.f32.mrb[0].mxu0
      %v978 = vadd.f32 0.0, %v977
      %v979 = vpop.f32.mrb[0].mxu0
      %v980 = vpop.f32.mrb[0].mxu0
      %v981 = vadd.f32 0.0, %v980
      %v982 = vpop.f32.mrb[0].mxu0
      %983 = vmatprep.mubr.bf16.mxu0 0
      %984 = vmatmul.mubr.bf16.gmra.mrb[0].mxu0 %v915
      %v985 = vpop.f32.mrb[0].mxu0
      %v986 = vadd.f32 0.0, %v985
      %v987 = vpop.f32.mrb[0].mxu0
      %v988 = vpop.f32.mrb[0].mxu0
      %v989 = vadd.f32 0.0, %v988
      %v990 = vpop.f32.mrb[0].mxu0
      %991 = vmatprep.mubr.bf16.mxu0 0
      %992 = vmatmul.mubr.bf16.gmra.mrb[0].mxu0 %v918
      %v993 = vpop.f32.mrb[0].mxu0
      %v994 = vadd.f32 0.0, %v993
      %v995 = vpop.f32.mrb[0].mxu0
      %v996 = vpop.f32.mrb[0].mxu0
      %v997 = vadd.f32 0.0, %v996
      %v998 = vpop.f32.mrb[0].mxu0
      %999 = vmatprep.mubr.bf16.mxu0 0
      %1000 = vmatmul.mubr.bf16.gmra.mrb[0].mxu0 %v921
      %v1001 = vpop.f32.mrb[0].mxu0
      %v1002 = vadd.f32 0.0, %v1001
      %v1003 = vpop.f32.mrb[0].mxu0
      %v1004 = vpop.f32.mrb[0].mxu0
      %v1005 = vadd.f32 0.0, %v1004
      %v1006 = vpop.f32.mrb[0].mxu0
      %1007 = vmatprep.mubr.bf16.mxu0 0
      %1008 = vmatmul.mubr.bf16.gmra.mrb[0].mxu0 %v924
      %v1009 = vpop.f32.mrb[0].mxu0
      %v1010 = vadd.f32 0.0, %v1009
      %v1011 = vpop.f32.mrb[0].mxu0
      %v1012 = vpop.f32.mrb[0].mxu0
      %v1013 = vadd.f32 0.0, %v1012
      %v1014 = vpop.f32.mrb[0].mxu0
      %1015 = vmatprep.mubr.bf16.mxu0 0
      %1016 = vmatmul.mubr.bf16.gmra.mrb[0].mxu0 %v927
      %v1017 = vpop.f32.mrb[0].mxu0
      %v1018 = vadd.f32 0.0, %v1017
      %v1019 = vpop.f32.mrb[0].mxu0
      %v1020 = vpop.f32.mrb[0].mxu0
      %v1021 = vadd.f32 0.0, %v1020
      %v1022 = vpop.f32.mrb[0].mxu0
      %1023 = vmatprep.mubr.bf16.mxu0 0
      %1024 = vmatmul.mubr.bf16.gmra.mrb[0].mxu0 %v930
      %v1025 = vpop.f32.mrb[0].mxu0
      %v1026 = vadd.f32 0.0, %v1025
      %v1027 = vpop.f32.mrb[0].mxu0
      %v1028 = vpop.f32.mrb[0].mxu0
      %v1029 = vadd.f32 0.0, %v1028
      %v1030 = vpop.f32.mrb[0].mxu0
      %1031 = vdwg.mxu0
      %v1032 = vadd.f32 %v707, %v970
      %v1033 = vadd.f32 %v710, %v973
      %v1034 = vadd.f32 %v715, %v978
      %v1035 = vadd.f32 %v718, %v981
      %v1036 = vadd.f32 %v723, %v986
      %v1037 = vadd.f32 %v726, %v989
      %v1038 = vadd.f32 %v731, %v994
      %v1039 = vadd.f32 %v734, %v997
      %v1040 = vadd.f32 %v739, %v1002
      %v1041 = vadd.f32 %v742, %v1005
      %v1042 = vadd.f32 %v747, %v1010
      %v1043 = vadd.f32 %v750, %v1013
      %v1044 = vadd.f32 %v755, %v1018
      %v1045 = vadd.f32 %v758, %v1021
      %v1046 = vadd.f32 %v763, %v1026
      %v1047 = vadd.f32 %v766, %v1029
      %v1048 = vld [vmem:[%s212] sm:$0xf]
      %v1049 = vld [vmem:[%s212 + $0x4] sm:$0xf]
      %v1052 = vunpack.c.l.b16 %v1048
      %v1053 = vunpack.c.l.b16 %v1049
      %v1054 = vpack.c.b16 %v1053, %v1052
      %1056 = vst.msk [vmem:[#allocation2] sm:$0xff] %vm207, %v1054
      %v1057 = vld [vmem:[%s225] sm:$0xf]
      %v1058 = vld [vmem:[%s225 + $0x4] sm:$0xf]
      %v1061 = vunpack.c.l.b16 %v1057
      %v1062 = vunpack.c.l.b16 %v1058
      %v1063 = vpack.c.b16 %v1062, %v1061
      %1065 = vst.msk [vmem:[#allocation2 + $0x8] sm:$0xff] %vm207, %v1063
      %v1066 = vld [vmem:[%s238] sm:$0xf]
      %v1067 = vld [vmem:[%s238 + $0x4] sm:$0xf]
      %v1070 = vunpack.c.l.b16 %v1066
      %v1071 = vunpack.c.l.b16 %v1067
      %v1072 = vpack.c.b16 %v1071, %v1070
      %1074 = vst.msk [vmem:[#allocation2 + $0x10] sm:$0xff] %vm207, %v1072
      %v1075 = vld [vmem:[%s251] sm:$0xf]
      %v1076 = vld [vmem:[%s251 + $0x4] sm:$0xf]
      %v1079 = vunpack.c.l.b16 %v1075
      %v1080 = vunpack.c.l.b16 %v1076
      %v1081 = vpack.c.b16 %v1080, %v1079
      %1083 = vst.msk [vmem:[#allocation2 + $0x18] sm:$0xff] %vm207, %v1081
      %v1084 = vld [vmem:[%s264] sm:$0xf]
      %v1085 = vld [vmem:[%s264 + $0x4] sm:$0xf]
      %v1088 = vunpack.c.l.b16 %v1084
      %v1089 = vunpack.c.l.b16 %v1085
      %v1090 = vpack.c.b16 %v1089, %v1088
      %1092 = vst.msk [vmem:[#allocation2 + $0x20] sm:$0xff] %vm207, %v1090
      %v1093 = vld [vmem:[%s277] sm:$0xf]
      %v1094 = vld [vmem:[%s277 + $0x4] sm:$0xf]
      %v1097 = vunpack.c.l.b16 %v1093
      %v1098 = vunpack.c.l.b16 %v1094
      %v1099 = vpack.c.b16 %v1098, %v1097
      %1101 = vst.msk [vmem:[#allocation2 + $0x28] sm:$0xff] %vm207, %v1099
      %v1102 = vld [vmem:[%s290] sm:$0xf]
      %v1103 = vld [vmem:[%s290 + $0x4] sm:$0xf]
      %v1106 = vunpack.c.l.b16 %v1102
      %v1107 = vunpack.c.l.b16 %v1103
      %v1108 = vpack.c.b16 %v1107, %v1106
      %1110 = vst.msk [vmem:[#allocation2 + $0x30] sm:$0xff] %vm207, %v1108
      %s1111 = sadd.s32 %s195, 8
      %s1112 = smul.u32 %s1111, 3
      %s1113 = smul.addr %s1112, 4
      %s1114 = scalar_lea.vmem %s183, %s1113
      %v1115 = vld [vmem:[%s1114] sm:$0xf]
      %v1116 = vld [vmem:[%s1114 + $0x4] sm:$0xf]
      %v1119 = vunpack.c.l.b16 %v1115
      %v1120 = vunpack.c.l.b16 %v1116
      %v1121 = vpack.c.b16 %v1120, %v1119
      %1123 = vst.msk [vmem:[#allocation2 + $0x38] sm:$0xff] %vm207, %v1121
      %v1124 = vld [vmem:[#allocation2] sm:$0xff]
      %v1125 = vld [vmem:[#allocation2 + $0x8] sm:$0xff]
      %v1126 = vld [vmem:[#allocation2 + $0x10] sm:$0xff]
      %v1127 = vld [vmem:[#allocation2 + $0x18] sm:$0xff]
      %v1128 = vld [vmem:[#allocation2 + $0x20] sm:$0xff]
      %v1129 = vld [vmem:[#allocation2 + $0x28] sm:$0xff]
      %v1130 = vld [vmem:[#allocation2 + $0x30] sm:$0xff]
      %v1131 = vld [vmem:[#allocation2 + $0x38] sm:$0xff]
      %s1132 = scalar_lea.vmem %s1, 6
      %v1133 = vld [vmem:[%s1132] sm:$0x3]
      %v1135 = vsel %vm207, %v1124, 0
      %v1138 = vsel %vm207, %v1125, 0
      %v1141 = vsel %vm207, %v1126, 0
      %v1144 = vsel %vm207, %v1127, 0
      %v1147 = vsel %vm207, %v1128, 0
      %v1150 = vsel %vm207, %v1129, 0
      %v1153 = vsel %vm207, %v1130, 0
      %v1156 = vsel %vm207, %v1131, 0
      %v1159 = vsel %vm544, %v1133, 0
      %1161 = vmatprep.subr.bf16.mxu0 0
      %1162 = vmatpush1.bf16.msra.mxu0 %v1159
      %1163 = vmatprep.subr.bf16.mxu0 0
      %1164 = vmatpush1.bf16.msra.mxu0 0
      %1165 = vmatprep.subr.bf16.mxu0 0
      %1166 = vmatpush1.bf16.msra.mxu0 0
      %1167 = vmatprep.subr.bf16.mxu0 0
      %1168 = vmatpush1.bf16.msra.mxu0 0
      %1169 = vmatprep.subr.bf16.mxu0 0
      %1170 = vmatpush1.bf16.msra.mxu0 0
      %1171 = vmatprep.subr.bf16.mxu0 0
      %1172 = vmatpush1.bf16.msra.mxu0 0
      %1173 = vmatprep.subr.bf16.mxu0 0
      %1174 = vmatpush1.bf16.msra.mxu0 0
      %1175 = vmatprep.subr.bf16.mxu0 0
      %1176 = vmatpush1.bf16.msra.mxu0 0
      %1177 = vmatprep.subr.bf16.mxu0 0
      %1178 = vmatpush1.bf16.msra.mxu0 0
      %1179 = vmatprep.subr.bf16.mxu0 0
      %1180 = vmatpush1.bf16.msra.mxu0 0
      %1181 = vmatprep.subr.bf16.mxu0 0
      %1182 = vmatpush1.bf16.msra.mxu0 0
      %1183 = vmatprep.subr.bf16.mxu0 0
      %1184 = vmatpush1.bf16.msra.mxu0 0
      %1185 = vmatprep.subr.bf16.mxu0 0
      %1186 = vmatpush1.bf16.msra.mxu0 0
      %1187 = vmatprep.subr.bf16.mxu0 0
      %1188 = vmatpush1.bf16.msra.mxu0 0
      %1189 = vmatprep.subr.bf16.mxu0 0
      %1190 = vmatpush1.bf16.msra.mxu0 0
      %1191 = vmatprep.subr.bf16.mxu0 0
      %1192 = vmatpush1.bf16.msra.mxu0 0
      %1193 = vmatprep.mubr.bf16.mxu0 0
      %1194 = vmatmul.mubr.bf16.gmra.mrb[0].mxu0 %v1135
      %v1195 = vpop.f32.mrb[0].mxu0
      %v1196 = vadd.f32 0.0, %v1195
      %v1197 = vpop.f32.mrb[0].mxu0
      %v1198 = vpop.f32.mrb[0].mxu0
      %v1199 = vadd.f32 0.0, %v1198
      %v1200 = vpop.f32.mrb[0].mxu0
      %1201 = vmatprep.mubr.bf16.mxu0 0
      %1202 = vmatmul.mubr.bf16.gmra.mrb[0].mxu0 %v1138
      %v1203 = vpop.f32.mrb[0].mxu0
      %v1204 = vadd.f32 0.0, %v1203
      %v1205 = vpop.f32.mrb[0].mxu0
      %v1206 = vpop.f32.mrb[0].mxu0
      %v1207 = vadd.f32 0.0, %v1206
      %v1208 = vpop.f32.mrb[0].mxu0
      %1209 = vmatprep.mubr.bf16.mxu0 0
      %1210 = vmatmul.mubr.bf16.gmra.mrb[0].mxu0 %v1141
      %v1211 = vpop.f32.mrb[0].mxu0
      %v1212 = vadd.f32 0.0, %v1211
      %v1213 = vpop.f32.mrb[0].mxu0
      %v1214 = vpop.f32.mrb[0].mxu0
      %v1215 = vadd.f32 0.0, %v1214
      %v1216 = vpop.f32.mrb[0].mxu0
      %1217 = vmatprep.mubr.bf16.mxu0 0
      %1218 = vmatmul.mubr.bf16.gmra.mrb[0].mxu0 %v1144
      %v1219 = vpop.f32.mrb[0].mxu0
      %v1220 = vadd.f32 0.0, %v1219
      %v1221 = vpop.f32.mrb[0].mxu0
      %v1222 = vpop.f32.mrb[0].mxu0
      %v1223 = vadd.f32 0.0, %v1222
      %v1224 = vpop.f32.mrb[0].mxu0
      %1225 = vmatprep.mubr.bf16.mxu0 0
      %1226 = vmatmul.mubr.bf16.gmra.mrb[0].mxu0 %v1147
      %v1227 = vpop.f32.mrb[0].mxu0
      %v1228 = vadd.f32 0.0, %v1227
      %v1229 = vpop.f32.mrb[0].mxu0
      %v1230 = vpop.f32.mrb[0].mxu0
      %v1231 = vadd.f32 0.0, %v1230
      %v1232 = vpop.f32.mrb[0].mxu0
      %1233 = vmatprep.mubr.bf16.mxu0 0
      %1234 = vmatmul.mubr.bf16.gmra.mrb[0].mxu0 %v1150
      %v1235 = vpop.f32.mrb[0].mxu0
      %v1236 = vadd.f32 0.0, %v1235
      %v1237 = vpop.f32.mrb[0].mxu0
      %v1238 = vpop.f32.mrb[0].mxu0
      %v1239 = vadd.f32 0.0, %v1238
      %v1240 = vpop.f32.mrb[0].mxu0
      %1241 = vmatprep.mubr.bf16.mxu0 0
      %1242 = vmatmul.mubr.bf16.gmra.mrb[0].mxu0 %v1153
      %v1243 = vpop.f32.mrb[0].mxu0
      %v1244 = vadd.f32 0.0, %v1243
      %v1245 = vpop.f32.mrb[0].mxu0
      %v1246 = vpop.f32.mrb[0].mxu0
      %v1247 = vadd.f32 0.0, %v1246
      %v1248 = vpop.f32.mrb[0].mxu0
      %1249 = vmatprep.mubr.bf16.mxu0 0
      %1250 = vmatmul.mubr.bf16.gmra.mrb[0].mxu0 %v1156
      %v1251 = vpop.f32.mrb[0].mxu0
      %v1252 = vadd.f32 0.0, %v1251
      %v1253 = vpop.f32.mrb[0].mxu0
      %v1254 = vpop.f32.mrb[0].mxu0
      %v1255 = vadd.f32 0.0, %v1254
      %v1256 = vpop.f32.mrb[0].mxu0
      %1257 = vdwg.mxu0
      %v1258 = vadd.f32 %v1032, %v1196
      %v1259 = vadd.f32 %v1033, %v1199
      %v1260 = vadd.f32 %v1034, %v1204
      %v1261 = vadd.f32 %v1035, %v1207
      %v1262 = vadd.f32 %v1036, %v1212
      %v1263 = vadd.f32 %v1037, %v1215
      %v1264 = vadd.f32 %v1038, %v1220
      %v1265 = vadd.f32 %v1039, %v1223
      %v1266 = vadd.f32 %v1040, %v1228
      %v1267 = vadd.f32 %v1041, %v1231
      %v1268 = vadd.f32 %v1042, %v1236
      %v1269 = vadd.f32 %v1043, %v1239
      %v1270 = vadd.f32 %v1044, %v1244
      %v1271 = vadd.f32 %v1045, %v1247
      %v1272 = vadd.f32 %v1046, %v1252
      %v1273 = vadd.f32 %v1047, %v1255
      %v1274 = vld [vmem:[%s212] sm:$0xf]
      %v1275 = vld [vmem:[%s212 + $0x4] sm:$0xf]
      %v1276 = vld [vmem:[%s212 + $0x8] sm:$0x1]
      %v1280 = vunpack.c.l.b16 %v1274
      %v1281 = vunpack.c.l.b16 %v1275
      %v1282 = vunpack.c.l.b16 %v1276
      %v1283 = vpack.c.b16 %v1281, %v1280
      %v1284 = vpack.c.b16 %v1282, %v1282
      %v1286 = vshrl.u32 %v1283, 16
      %v1288 = vshll.u32 %v1283, 16
      %v1290 = vrot.slane %v1288, 1
      %v1291 = vor.u32 %v1286, %v1290
      %v1293 = vshll.u32 %v1284, 16
      %v1295 = vrot.slane %v1293, 1
      %v1296 = vsel %vm320, %v1291, %v1295
      %1298 = vst.msk [vmem:[#allocation2] sm:$0xff] %vm207, %v1296
      %v1299 = vld [vmem:[%s225] sm:$0xf]
      %v1300 = vld [vmem:[%s225 + $0x4] sm:$0xf]
      %v1301 = vld [vmem:[%s225 + $0x8] sm:$0x1]
      %v1305 = vunpack.c.l.b16 %v1299
      %v1306 = vunpack.c.l.b16 %v1300
      %v1307 = vunpack.c.l.b16 %v1301
      %v1308 = vpack.c.b16 %v1306, %v1305
      %v1309 = vpack.c.b16 %v1307, %v1307
      %v1311 = vshrl.u32 %v1308, 16
      %v1313 = vshll.u32 %v1308, 16
      %v1315 = vrot.slane %v1313, 1
      %v1316 = vor.u32 %v1311, %v1315
      %v1318 = vshll.u32 %v1309, 16
      %v1320 = vrot.slane %v1318, 1
      %v1321 = vsel %vm320, %v1316, %v1320
      %1323 = vst.msk [vmem:[#allocation2 + $0x8] sm:$0xff] %vm207, %v1321
      %v1324 = vld [vmem:[%s238] sm:$0xf]
      %v1325 = vld [vmem:[%s238 + $0x4] sm:$0xf]
      %v1326 = vld [vmem:[%s238 + $0x8] sm:$0x1]
      %v1330 = vunpack.c.l.b16 %v1324
      %v1331 = vunpack.c.l.b16 %v1325
      %v1332 = vunpack.c.l.b16 %v1326
      %v1333 = vpack.c.b16 %v1331, %v1330
      %v1334 = vpack.c.b16 %v1332, %v1332
      %v1336 = vshrl.u32 %v1333, 16
      %v1338 = vshll.u32 %v1333, 16
      %v1340 = vrot.slane %v1338, 1
      %v1341 = vor.u32 %v1336, %v1340
      %v1343 = vshll.u32 %v1334, 16
      %v1345 = vrot.slane %v1343, 1
      %v1346 = vsel %vm320, %v1341, %v1345
      %1348 = vst.msk [vmem:[#allocation2 + $0x10] sm:$0xff] %vm207, %v1346
      %v1349 = vld [vmem:[%s251] sm:$0xf]
      %v1350 = vld [vmem:[%s251 + $0x4] sm:$0xf]
      %v1351 = vld [vmem:[%s251 + $0x8] sm:$0x1]
      %v1355 = vunpack.c.l.b16 %v1349
      %v1356 = vunpack.c.l.b16 %v1350
      %v1357 = vunpack.c.l.b16 %v1351
      %v1358 = vpack.c.b16 %v1356, %v1355
      %v1359 = vpack.c.b16 %v1357, %v1357
      %v1361 = vshrl.u32 %v1358, 16
      %v1363 = vshll.u32 %v1358, 16
      %v1365 = vrot.slane %v1363, 1
      %v1366 = vor.u32 %v1361, %v1365
      %v1368 = vshll.u32 %v1359, 16
      %v1370 = vrot.slane %v1368, 1
      %v1371 = vsel %vm320, %v1366, %v1370
      %1373 = vst.msk [vmem:[#allocation2 + $0x18] sm:$0xff] %vm207, %v1371
      %v1374 = vld [vmem:[%s264] sm:$0xf]
      %v1375 = vld [vmem:[%s264 + $0x4] sm:$0xf]
      %v1376 = vld [vmem:[%s264 + $0x8] sm:$0x1]
      %v1380 = vunpack.c.l.b16 %v1374
      %v1381 = vunpack.c.l.b16 %v1375
      %v1382 = vunpack.c.l.b16 %v1376
      %v1383 = vpack.c.b16 %v1381, %v1380
      %v1384 = vpack.c.b16 %v1382, %v1382
      %v1386 = vshrl.u32 %v1383, 16
      %v1388 = vshll.u32 %v1383, 16
      %v1390 = vrot.slane %v1388, 1
      %v1391 = vor.u32 %v1386, %v1390
      %v1393 = vshll.u32 %v1384, 16
      %v1395 = vrot.slane %v1393, 1
      %v1396 = vsel %vm320, %v1391, %v1395
      %1398 = vst.msk [vmem:[#allocation2 + $0x20] sm:$0xff] %vm207, %v1396
      %v1399 = vld [vmem:[%s277] sm:$0xf]
      %v1400 = vld [vmem:[%s277 + $0x4] sm:$0xf]
      %v1401 = vld [vmem:[%s277 + $0x8] sm:$0x1]
      %v1405 = vunpack.c.l.b16 %v1399
      %v1406 = vunpack.c.l.b16 %v1400
      %v1407 = vunpack.c.l.b16 %v1401
      %v1408 = vpack.c.b16 %v1406, %v1405
      %v1409 = vpack.c.b16 %v1407, %v1407
      %v1411 = vshrl.u32 %v1408, 16
      %v1413 = vshll.u32 %v1408, 16
      %v1415 = vrot.slane %v1413, 1
      %v1416 = vor.u32 %v1411, %v1415
      %v1418 = vshll.u32 %v1409, 16
      %v1420 = vrot.slane %v1418, 1
      %v1421 = vsel %vm320, %v1416, %v1420
      %1423 = vst.msk [vmem:[#allocation2 + $0x28] sm:$0xff] %vm207, %v1421
      %v1424 = vld [vmem:[%s290] sm:$0xf]
      %v1425 = vld [vmem:[%s290 + $0x4] sm:$0xf]
      %v1426 = vld [vmem:[%s290 + $0x8] sm:$0x1]
      %v1430 = vunpack.c.l.b16 %v1424
      %v1431 = vunpack.c.l.b16 %v1425
      %v1432 = vunpack.c.l.b16 %v1426
      %v1433 = vpack.c.b16 %v1431, %v1430
      %v1434 = vpack.c.b16 %v1432, %v1432
      %v1436 = vshrl.u32 %v1433, 16
      %v1438 = vshll.u32 %v1433, 16
      %v1440 = vrot.slane %v1438, 1
      %v1441 = vor.u32 %v1436, %v1440
      %v1443 = vshll.u32 %v1434, 16
      %v1445 = vrot.slane %v1443, 1
      %v1446 = vsel %vm320, %v1441, %v1445
      %1448 = vst.msk [vmem:[#allocation2 + $0x30] sm:$0xff] %vm207, %v1446
      %v1449 = vld [vmem:[%s1114] sm:$0xf]
      %v1450 = vld [vmem:[%s1114 + $0x4] sm:$0xf]
      %v1451 = vld [vmem:[%s1114 + $0x8] sm:$0x1]
      %v1455 = vunpack.c.l.b16 %v1449
      %v1456 = vunpack.c.l.b16 %v1450
      %v1457 = vunpack.c.l.b16 %v1451
      %v1458 = vpack.c.b16 %v1456, %v1455
      %v1459 = vpack.c.b16 %v1457, %v1457
      %v1461 = vshrl.u32 %v1458, 16
      %v1463 = vshll.u32 %v1458, 16
      %v1465 = vrot.slane %v1463, 1
      %v1466 = vor.u32 %v1461, %v1465
      %v1468 = vshll.u32 %v1459, 16
      %v1470 = vrot.slane %v1468, 1
      %v1471 = vsel %vm320, %v1466, %v1470
      %1473 = vst.msk [vmem:[#allocation2 + $0x38] sm:$0xff] %vm207, %v1471
      %v1474 = vld [vmem:[#allocation2] sm:$0xff]
      %v1475 = vld [vmem:[#allocation2 + $0x8] sm:$0xff]
      %v1476 = vld [vmem:[#allocation2 + $0x10] sm:$0xff]
      %v1477 = vld [vmem:[#allocation2 + $0x18] sm:$0xff]
      %v1478 = vld [vmem:[#allocation2 + $0x20] sm:$0xff]
      %v1479 = vld [vmem:[#allocation2 + $0x28] sm:$0xff]
      %v1480 = vld [vmem:[#allocation2 + $0x30] sm:$0xff]
      %v1481 = vld [vmem:[#allocation2 + $0x38] sm:$0xff]
      %s1482 = scalar_lea.vmem %s1, 8
      %v1483 = vld [vmem:[%s1482] sm:$0x3]
      %v1485 = vsel %vm207, %v1474, 0
      %v1488 = vsel %vm207, %v1475, 0
      %v1491 = vsel %vm207, %v1476, 0
      %v1494 = vsel %vm207, %v1477, 0
      %v1497 = vsel %vm207, %v1478, 0
      %v1500 = vsel %vm207, %v1479, 0
      %v1503 = vsel %vm207, %v1480, 0
      %v1506 = vsel %vm207, %v1481, 0
      %v1509 = vsel %vm544, %v1483, 0
      %1511 = vmatprep.subr.bf16.mxu0 0
      %1512 = vmatpush1.bf16.msra.mxu0 %v1509
      %1513 = vmatprep.subr.bf16.mxu0 0
      %1514 = vmatpush1.bf16.msra.mxu0 0
      %1515 = vmatprep.subr.bf16.mxu0 0
      %1516 = vmatpush1.bf16.msra.mxu0 0
      %1517 = vmatprep.subr.bf16.mxu0 0
      %1518 = vmatpush1.bf16.msra.mxu0 0
      %1519 = vmatprep.subr.bf16.mxu0 0
      %1520 = vmatpush1.bf16.msra.mxu0 0
      %1521 = vmatprep.subr.bf16.mxu0 0
      %1522 = vmatpush1.bf16.msra.mxu0 0
      %1523 = vmatprep.subr.bf16.mxu0 0
      %1524 = vmatpush1.bf16.msra.mxu0 0
      %1525 = vmatprep.subr.bf16.mxu0 0
      %1526 = vmatpush1.bf16.msra.mxu0 0
      %1527 = vmatprep.subr.bf16.mxu0 0
      %1528 = vmatpush1.bf16.msra.mxu0 0
      %1529 = vmatprep.subr.bf16.mxu0 0
      %1530 = vmatpush1.bf16.msra.mxu0 0
      %1531 = vmatprep.subr.bf16.mxu0 0
      %1532 = vmatpush1.bf16.msra.mxu0 0
      %1533 = vmatprep.subr.bf16.mxu0 0
      %1534 = vmatpush1.bf16.msra.mxu0 0
      %1535 = vmatprep.subr.bf16.mxu0 0
      %1536 = vmatpush1.bf16.msra.mxu0 0
      %1537 = vmatprep.subr.bf16.mxu0 0
      %1538 = vmatpush1.bf16.msra.mxu0 0
      %1539 = vmatprep.subr.bf16.mxu0 0
      %1540 = vmatpush1.bf16.msra.mxu0 0
      %1541 = vmatprep.subr.bf16.mxu0 0
      %1542 = vmatpush1.bf16.msra.mxu0 0
      %1543 = vmatprep.mubr.bf16.mxu0 0
      %1544 = vmatmul.mubr.bf16.gmra.mrb[0].mxu0 %v1485
      %v1545 = vpop.f32.mrb[0].mxu0
      %v1546 = vadd.f32 0.0, %v1545
      %v1547 = vpop.f32.mrb[0].mxu0
      %v1548 = vpop.f32.mrb[0].mxu0
      %v1549 = vadd.f32 0.0, %v1548
      %v1550 = vpop.f32.mrb[0].mxu0
      %1551 = vmatprep.mubr.bf16.mxu0 0
      %1552 = vmatmul.mubr.bf16.gmra.mrb[0].mxu0 %v1488
      %v1553 = vpop.f32.mrb[0].mxu0
      %v1554 = vadd.f32 0.0, %v1553
      %v1555 = vpop.f32.mrb[0].mxu0
      %v1556 = vpop.f32.mrb[0].mxu0
      %v1557 = vadd.f32 0.0, %v1556
      %v1558 = vpop.f32.mrb[0].mxu0
      %1559 = vmatprep.mubr.bf16.mxu0 0
      %1560 = vmatmul.mubr.bf16.gmra.mrb[0].mxu0 %v1491
      %v1561 = vpop.f32.mrb[0].mxu0
      %v1562 = vadd.f32 0.0, %v1561
      %v1563 = vpop.f32.mrb[0].mxu0
      %v1564 = vpop.f32.mrb[0].mxu0
      %v1565 = vadd.f32 0.0, %v1564
      %v1566 = vpop.f32.mrb[0].mxu0
      %1567 = vmatprep.mubr.bf16.mxu0 0
      %1568 = vmatmul.mubr.bf16.gmra.mrb[0].mxu0 %v1494
      %v1569 = vpop.f32.mrb[0].mxu0
      %v1570 = vadd.f32 0.0, %v1569
      %v1571 = vpop.f32.mrb[0].mxu0
      %v1572 = vpop.f32.mrb[0].mxu0
      %v1573 = vadd.f32 0.0, %v1572
      %v1574 = vpop.f32.mrb[0].mxu0
      %1575 = vmatprep.mubr.bf16.mxu0 0
      %1576 = vmatmul.mubr.bf16.gmra.mrb[0].mxu0 %v1497
      %v1577 = vpop.f32.mrb[0].mxu0
      %v1578 = vadd.f32 0.0, %v1577
      %v1579 = vpop.f32.mrb[0].mxu0
      %v1580 = vpop.f32.mrb[0].mxu0
      %v1581 = vadd.f32 0.0, %v1580
      %v1582 = vpop.f32.mrb[0].mxu0
      %1583 = vmatprep.mubr.bf16.mxu0 0
      %1584 = vmatmul.mubr.bf16.gmra.mrb[0].mxu0 %v1500
      %v1585 = vpop.f32.mrb[0].mxu0
      %v1586 = vadd.f32 0.0, %v1585
      %v1587 = vpop.f32.mrb[0].mxu0
      %v1588 = vpop.f32.mrb[0].mxu0
      %v1589 = vadd.f32 0.0, %v1588
      %v1590 = vpop.f32.mrb[0].mxu0
      %1591 = vmatprep.mubr.bf16.mxu0 0
      %1592 = vmatmul.mubr.bf16.gmra.mrb[0].mxu0 %v1503
      %v1593 = vpop.f32.mrb[0].mxu0
      %v1594 = vadd.f32 0.0, %v1593
      %v1595 = vpop.f32.mrb[0].mxu0
      %v1596 = vpop.f32.mrb[0].mxu0
      %v1597 = vadd.f32 0.0, %v1596
      %v1598 = vpop.f32.mrb[0].mxu0
      %1599 = vmatprep.mubr.bf16.mxu0 0
      %1600 = vmatmul.mubr.bf16.gmra.mrb[0].mxu0 %v1506
      %v1601 = vpop.f32.mrb[0].mxu0
      %v1602 = vadd.f32 0.0, %v1601
      %v1603 = vpop.f32.mrb[0].mxu0
      %v1604 = vpop.f32.mrb[0].mxu0
      %v1605 = vadd.f32 0.0, %v1604
      %v1606 = vpop.f32.mrb[0].mxu0
      %1607 = vdwg.mxu0
      %v1608 = vadd.f32 %v1258, %v1546
      %v1609 = vadd.f32 %v1259, %v1549
      %v1610 = vadd.f32 %v1260, %v1554
      %v1611 = vadd.f32 %v1261, %v1557
      %v1612 = vadd.f32 %v1262, %v1562
      %v1613 = vadd.f32 %v1263, %v1565
      %v1614 = vadd.f32 %v1264, %v1570
      %v1615 = vadd.f32 %v1265, %v1573
      %v1616 = vadd.f32 %v1266, %v1578
      %v1617 = vadd.f32 %v1267, %v1581
      %v1618 = vadd.f32 %v1268, %v1586
      %v1619 = vadd.f32 %v1269, %v1589
      %v1620 = vadd.f32 %v1270, %v1594
      %v1621 = vadd.f32 %v1271, %v1597
      %v1622 = vadd.f32 %v1272, %v1602
      %v1623 = vadd.f32 %v1273, %v1605
      %v1624 = vld [vmem:[%s212] sm:$0xe]
      %v1625 = vld [vmem:[%s212 + $0x4] sm:$0xf]
      %v1626 = vld [vmem:[%s212 + $0x8] sm:$0x1]
      %v1630 = vunpack.c.l.b16 %v1624
      %v1631 = vunpack.c.l.b16 %v1625
      %v1632 = vunpack.c.l.b16 %v1626
      %v1633 = vpack.c.b16 %v1631, %v1630
      %v1634 = vpack.c.b16 %v1632, %v1632
      %v1635 = vrot.slane %v1633, 1
      %v1636 = vrot.slane %v1634, 1
      %v1637 = vsel %vm780, %v1635, %v1636
      %1639 = vst.msk [vmem:[#allocation2] sm:$0xff] %vm207, %v1637
      %v1640 = vld [vmem:[%s225] sm:$0xe]
      %v1641 = vld [vmem:[%s225 + $0x4] sm:$0xf]
      %v1642 = vld [vmem:[%s225 + $0x8] sm:$0x1]
      %v1646 = vunpack.c.l.b16 %v1640
      %v1647 = vunpack.c.l.b16 %v1641
      %v1648 = vunpack.c.l.b16 %v1642
      %v1649 = vpack.c.b16 %v1647, %v1646
      %v1650 = vpack.c.b16 %v1648, %v1648
      %v1651 = vrot.slane %v1649, 1
      %v1652 = vrot.slane %v1650, 1
      %v1653 = vsel %vm780, %v1651, %v1652
      %1655 = vst.msk [vmem:[#allocation2 + $0x8] sm:$0xff] %vm207, %v1653
      %v1656 = vld [vmem:[%s238] sm:$0xe]
      %v1657 = vld [vmem:[%s238 + $0x4] sm:$0xf]
      %v1658 = vld [vmem:[%s238 + $0x8] sm:$0x1]
      %v1662 = vunpack.c.l.b16 %v1656
      %v1663 = vunpack.c.l.b16 %v1657
      %v1664 = vunpack.c.l.b16 %v1658
      %v1665 = vpack.c.b16 %v1663, %v1662
      %v1666 = vpack.c.b16 %v1664, %v1664
      %v1667 = vrot.slane %v1665, 1
      %v1668 = vrot.slane %v1666, 1
      %v1669 = vsel %vm780, %v1667, %v1668
      %1671 = vst.msk [vmem:[#allocation2 + $0x10] sm:$0xff] %vm207, %v1669
      %v1672 = vld [vmem:[%s251] sm:$0xe]
      %v1673 = vld [vmem:[%s251 + $0x4] sm:$0xf]
      %v1674 = vld [vmem:[%s251 + $0x8] sm:$0x1]
      %v1678 = vunpack.c.l.b16 %v1672
      %v1679 = vunpack.c.l.b16 %v1673
      %v1680 = vunpack.c.l.b16 %v1674
      %v1681 = vpack.c.b16 %v1679, %v1678
      %v1682 = vpack.c.b16 %v1680, %v1680
      %v1683 = vrot.slane %v1681, 1
      %v1684 = vrot.slane %v1682, 1
      %v1685 = vsel %vm780, %v1683, %v1684
      %1687 = vst.msk [vmem:[#allocation2 + $0x18] sm:$0xff] %vm207, %v1685
      %v1688 = vld [vmem:[%s264] sm:$0xe]
      %v1689 = vld [vmem:[%s264 + $0x4] sm:$0xf]
      %v1690 = vld [vmem:[%s264 + $0x8] sm:$0x1]
      %v1694 = vunpack.c.l.b16 %v1688
      %v1695 = vunpack.c.l.b16 %v1689
      %v1696 = vunpack.c.l.b16 %v1690
      %v1697 = vpack.c.b16 %v1695, %v1694
      %v1698 = vpack.c.b16 %v1696, %v1696
      %v1699 = vrot.slane %v1697, 1
      %v1700 = vrot.slane %v1698, 1
      %v1701 = vsel %vm780, %v1699, %v1700
      %1703 = vst.msk [vmem:[#allocation2 + $0x20] sm:$0xff] %vm207, %v1701
      %v1704 = vld [vmem:[%s277] sm:$0xe]
      %v1705 = vld [vmem:[%s277 + $0x4] sm:$0xf]
      %v1706 = vld [vmem:[%s277 + $0x8] sm:$0x1]
      %v1710 = vunpack.c.l.b16 %v1704
      %v1711 = vunpack.c.l.b16 %v1705
      %v1712 = vunpack.c.l.b16 %v1706
      %v1713 = vpack.c.b16 %v1711, %v1710
      %v1714 = vpack.c.b16 %v1712, %v1712
      %v1715 = vrot.slane %v1713, 1
      %v1716 = vrot.slane %v1714, 1
      %v1717 = vsel %vm780, %v1715, %v1716
      %1719 = vst.msk [vmem:[#allocation2 + $0x28] sm:$0xff] %vm207, %v1717
      %v1720 = vld [vmem:[%s290] sm:$0xe]
      %v1721 = vld [vmem:[%s290 + $0x4] sm:$0xf]
      %v1722 = vld [vmem:[%s290 + $0x8] sm:$0x1]
      %v1726 = vunpack.c.l.b16 %v1720
      %v1727 = vunpack.c.l.b16 %v1721
      %v1728 = vunpack.c.l.b16 %v1722
      %v1729 = vpack.c.b16 %v1727, %v1726
      %v1730 = vpack.c.b16 %v1728, %v1728
      %v1731 = vrot.slane %v1729, 1
      %v1732 = vrot.slane %v1730, 1
      %v1733 = vsel %vm780, %v1731, %v1732
      %1735 = vst.msk [vmem:[#allocation2 + $0x30] sm:$0xff] %vm207, %v1733
      %v1736 = vld [vmem:[%s1114] sm:$0xe]
      %v1737 = vld [vmem:[%s1114 + $0x4] sm:$0xf]
      %v1738 = vld [vmem:[%s1114 + $0x8] sm:$0x1]
      %v1742 = vunpack.c.l.b16 %v1736
      %v1743 = vunpack.c.l.b16 %v1737
      %v1744 = vunpack.c.l.b16 %v1738
      %v1745 = vpack.c.b16 %v1743, %v1742
      %v1746 = vpack.c.b16 %v1744, %v1744
      %v1747 = vrot.slane %v1745, 1
      %v1748 = vrot.slane %v1746, 1
      %v1749 = vsel %vm780, %v1747, %v1748
      %1751 = vst.msk [vmem:[#allocation2 + $0x38] sm:$0xff] %vm207, %v1749
      %v1752 = vld [vmem:[#allocation2] sm:$0xff]
      %v1753 = vld [vmem:[#allocation2 + $0x8] sm:$0xff]
      %v1754 = vld [vmem:[#allocation2 + $0x10] sm:$0xff]
      %v1755 = vld [vmem:[#allocation2 + $0x18] sm:$0xff]
      %v1756 = vld [vmem:[#allocation2 + $0x20] sm:$0xff]
      %v1757 = vld [vmem:[#allocation2 + $0x28] sm:$0xff]
      %v1758 = vld [vmem:[#allocation2 + $0x30] sm:$0xff]
      %v1759 = vld [vmem:[#allocation2 + $0x38] sm:$0xff]
      %s1760 = scalar_lea.vmem %s1, 10
      %v1761 = vld [vmem:[%s1760] sm:$0x3]
      %v1763 = vsel %vm207, %v1752, 0
      %v1766 = vsel %vm207, %v1753, 0
      %v1769 = vsel %vm207, %v1754, 0
      %v1772 = vsel %vm207, %v1755, 0
      %v1775 = vsel %vm207, %v1756, 0
      %v1778 = vsel %vm207, %v1757, 0
      %v1781 = vsel %vm207, %v1758, 0
      %v1784 = vsel %vm207, %v1759, 0
      %v1787 = vsel %vm544, %v1761, 0
      %1789 = vmatprep.subr.bf16.mxu0 0
      %1790 = vmatpush1.bf16.msra.mxu0 %v1787
      %1791 = vmatprep.subr.bf16.mxu0 0
      %1792 = vmatpush1.bf16.msra.mxu0 0
      %1793 = vmatprep.subr.bf16.mxu0 0
      %1794 = vmatpush1.bf16.msra.mxu0 0
      %1795 = vmatprep.subr.bf16.mxu0 0
      %1796 = vmatpush1.bf16.msra.mxu0 0
      %1797 = vmatprep.subr.bf16.mxu0 0
      %1798 = vmatpush1.bf16.msra.mxu0 0
      %1799 = vmatprep.subr.bf16.mxu0 0
      %1800 = vmatpush1.bf16.msra.mxu0 0
      %1801 = vmatprep.subr.bf16.mxu0 0
      %1802 = vmatpush1.bf16.msra.mxu0 0
      %1803 = vmatprep.subr.bf16.mxu0 0
      %1804 = vmatpush1.bf16.msra.mxu0 0
      %1805 = vmatprep.subr.bf16.mxu0 0
      %1806 = vmatpush1.bf16.msra.mxu0 0
      %1807 = vmatprep.subr.bf16.mxu0 0
      %1808 = vmatpush1.bf16.msra.mxu0 0
      %1809 = vmatprep.subr.bf16.mxu0 0
      %1810 = vmatpush1.bf16.msra.mxu0 0
      %1811 = vmatprep.subr.bf16.mxu0 0
      %1812 = vmatpush1.bf16.msra.mxu0 0
      %1813 = vmatprep.subr.bf16.mxu0 0
      %1814 = vmatpush1.bf16.msra.mxu0 0
      %1815 = vmatprep.subr.bf16.mxu0 0
      %1816 = vmatpush1.bf16.msra.mxu0 0
      %1817 = vmatprep.subr.bf16.mxu0 0
      %1818 = vmatpush1.bf16.msra.mxu0 0
      %1819 = vmatprep.subr.bf16.mxu0 0
      %1820 = vmatpush1.bf16.msra.mxu0 0
      %1821 = vmatprep.mubr.bf16.mxu0 0
      %1822 = vmatmul.mubr.bf16.gmra.mrb[0].mxu0 %v1763
      %v1823 = vpop.f32.mrb[0].mxu0
      %v1824 = vadd.f32 0.0, %v1823
      %v1825 = vpop.f32.mrb[0].mxu0
      %v1826 = vpop.f32.mrb[0].mxu0
      %v1827 = vadd.f32 0.0, %v1826
      %v1828 = vpop.f32.mrb[0].mxu0
      %1829 = vmatprep.mubr.bf16.mxu0 0
      %1830 = vmatmul.mubr.bf16.gmra.mrb[0].mxu0 %v1766
      %v1831 = vpop.f32.mrb[0].mxu0
      %v1832 = vadd.f32 0.0, %v1831
      %v1833 = vpop.f32.mrb[0].mxu0
      %v1834 = vpop.f32.mrb[0].mxu0
      %v1835 = vadd.f32 0.0, %v1834
      %v1836 = vpop.f32.mrb[0].mxu0
      %1837 = vmatprep.mubr.bf16.mxu0 0
      %1838 = vmatmul.mubr.bf16.gmra.mrb[0].mxu0 %v1769
      %v1839 = vpop.f32.mrb[0].mxu0
      %v1840 = vadd.f32 0.0, %v1839
      %v1841 = vpop.f32.mrb[0].mxu0
      %v1842 = vpop.f32.mrb[0].mxu0
      %v1843 = vadd.f32 0.0, %v1842
      %v1844 = vpop.f32.mrb[0].mxu0
      %1845 = vmatprep.mubr.bf16.mxu0 0
      %1846 = vmatmul.mubr.bf16.gmra.mrb[0].mxu0 %v1772
      %v1847 = vpop.f32.mrb[0].mxu0
      %v1848 = vadd.f32 0.0, %v1847
      %v1849 = vpop.f32.mrb[0].mxu0
      %v1850 = vpop.f32.mrb[0].mxu0
      %v1851 = vadd.f32 0.0, %v1850
      %v1852 = vpop.f32.mrb[0].mxu0
      %1853 = vmatprep.mubr.bf16.mxu0 0
      %1854 = vmatmul.mubr.bf16.gmra.mrb[0].mxu0 %v1775
      %v1855 = vpop.f32.mrb[0].mxu0
      %v1856 = vadd.f32 0.0, %v1855
      %v1857 = vpop.f32.mrb[0].mxu0
      %v1858 = vpop.f32.mrb[0].mxu0
      %v1859 = vadd.f32 0.0, %v1858
      %v1860 = vpop.f32.mrb[0].mxu0
      %1861 = vmatprep.mubr.bf16.mxu0 0
      %1862 = vmatmul.mubr.bf16.gmra.mrb[0].mxu0 %v1778
      %v1863 = vpop.f32.mrb[0].mxu0
      %v1864 = vadd.f32 0.0, %v1863
      %v1865 = vpop.f32.mrb[0].mxu0
      %v1866 = vpop.f32.mrb[0].mxu0
      %v1867 = vadd.f32 0.0, %v1866
      %v1868 = vpop.f32.mrb[0].mxu0
      %1869 = vmatprep.mubr.bf16.mxu0 0
      %1870 = vmatmul.mubr.bf16.gmra.mrb[0].mxu0 %v1781
      %v1871 = vpop.f32.mrb[0].mxu0
      %v1872 = vadd.f32 0.0, %v1871
      %v1873 = vpop.f32.mrb[0].mxu0
      %v1874 = vpop.f32.mrb[0].mxu0
      %v1875 = vadd.f32 0.0, %v1874
      %v1876 = vpop.f32.mrb[0].mxu0
      %1877 = vmatprep.mubr.bf16.mxu0 0
      %1878 = vmatmul.mubr.bf16.gmra.mrb[0].mxu0 %v1784
      %v1879 = vpop.f32.mrb[0].mxu0
      %v1880 = vadd.f32 0.0, %v1879
      %v1881 = vpop.f32.mrb[0].mxu0
      %v1882 = vpop.f32.mrb[0].mxu0
      %v1883 = vadd.f32 0.0, %v1882
      %v1884 = vpop.f32.mrb[0].mxu0
      %1885 = vdwg.mxu0
      %v1886 = vadd.f32 %v1608, %v1824
      %v1887 = vadd.f32 %v1609, %v1827
      %v1888 = vadd.f32 %v1610, %v1832
      %v1889 = vadd.f32 %v1611, %v1835
      %v1890 = vadd.f32 %v1612, %v1840
      %v1891 = vadd.f32 %v1613, %v1843
      %v1892 = vadd.f32 %v1614, %v1848
      %v1893 = vadd.f32 %v1615, %v1851
      %v1894 = vadd.f32 %v1616, %v1856
      %v1895 = vadd.f32 %v1617, %v1859
      %v1896 = vadd.f32 %v1618, %v1864
      %v1897 = vadd.f32 %v1619, %v1867
      %v1898 = vadd.f32 %v1620, %v1872
      %v1899 = vadd.f32 %v1621, %v1875
      %v1900 = vadd.f32 %v1622, %v1880
      %v1901 = vadd.f32 %v1623, %v1883
      %v1902 = vld [vmem:[%s225] sm:$0xf]
      %v1903 = vld [vmem:[%s225 + $0x4] sm:$0xf]
      %v1906 = vunpack.c.l.b16 %v1902
      %v1907 = vunpack.c.l.b16 %v1903
      %v1908 = vpack.c.b16 %v1907, %v1906
      %1910 = vst.msk [vmem:[#allocation2] sm:$0xff] %vm207, %v1908
      %v1911 = vld [vmem:[%s238] sm:$0xf]
      %v1912 = vld [vmem:[%s238 + $0x4] sm:$0xf]
      %v1915 = vunpack.c.l.b16 %v1911
      %v1916 = vunpack.c.l.b16 %v1912
      %v1917 = vpack.c.b16 %v1916, %v1915
      %1919 = vst.msk [vmem:[#allocation2 + $0x8] sm:$0xff] %vm207, %v1917
      %v1920 = vld [vmem:[%s251] sm:$0xf]
      %v1921 = vld [vmem:[%s251 + $0x4] sm:$0xf]
      %v1924 = vunpack.c.l.b16 %v1920
      %v1925 = vunpack.c.l.b16 %v1921
      %v1926 = vpack.c.b16 %v1925, %v1924
      %1928 = vst.msk [vmem:[#allocation2 + $0x10] sm:$0xff] %vm207, %v1926
      %v1929 = vld [vmem:[%s264] sm:$0xf]
      %v1930 = vld [vmem:[%s264 + $0x4] sm:$0xf]
      %v1933 = vunpack.c.l.b16 %v1929
      %v1934 = vunpack.c.l.b16 %v1930
      %v1935 = vpack.c.b16 %v1934, %v1933
      %1937 = vst.msk [vmem:[#allocation2 + $0x18] sm:$0xff] %vm207, %v1935
      %v1938 = vld [vmem:[%s277] sm:$0xf]
      %v1939 = vld [vmem:[%s277 + $0x4] sm:$0xf]
      %v1942 = vunpack.c.l.b16 %v1938
      %v1943 = vunpack.c.l.b16 %v1939
      %v1944 = vpack.c.b16 %v1943, %v1942
      %1946 = vst.msk [vmem:[#allocation2 + $0x20] sm:$0xff] %vm207, %v1944
      %v1947 = vld [vmem:[%s290] sm:$0xf]
      %v1948 = vld [vmem:[%s290 + $0x4] sm:$0xf]
      %v1951 = vunpack.c.l.b16 %v1947
      %v1952 = vunpack.c.l.b16 %v1948
      %v1953 = vpack.c.b16 %v1952, %v1951
      %1955 = vst.msk [vmem:[#allocation2 + $0x28] sm:$0xff] %vm207, %v1953
      %v1956 = vld [vmem:[%s1114] sm:$0xf]
      %v1957 = vld [vmem:[%s1114 + $0x4] sm:$0xf]
      %v1960 = vunpack.c.l.b16 %v1956
      %v1961 = vunpack.c.l.b16 %v1957
      %v1962 = vpack.c.b16 %v1961, %v1960
      %1964 = vst.msk [vmem:[#allocation2 + $0x30] sm:$0xff] %vm207, %v1962
      %s1965 = sadd.s32 %s195, 9
      %s1966 = smul.u32 %s1965, 3
      %s1967 = smul.addr %s1966, 4
      %s1968 = scalar_lea.vmem %s183, %s1967
      %v1969 = vld [vmem:[%s1968] sm:$0xf]
      %v1970 = vld [vmem:[%s1968 + $0x4] sm:$0xf]
      %v1973 = vunpack.c.l.b16 %v1969
      %v1974 = vunpack.c.l.b16 %v1970
      %v1975 = vpack.c.b16 %v1974, %v1973
      %1977 = vst.msk [vmem:[#allocation2 + $0x38] sm:$0xff] %vm207, %v1975
      %v1978 = vld [vmem:[#allocation2] sm:$0xff]
      %v1979 = vld [vmem:[#allocation2 + $0x8] sm:$0xff]
      %v1980 = vld [vmem:[#allocation2 + $0x10] sm:$0xff]
      %v1981 = vld [vmem:[#allocation2 + $0x18] sm:$0xff]
      %v1982 = vld [vmem:[#allocation2 + $0x20] sm:$0xff]
      %v1983 = vld [vmem:[#allocation2 + $0x28] sm:$0xff]
      %v1984 = vld [vmem:[#allocation2 + $0x30] sm:$0xff]
      %v1985 = vld [vmem:[#allocation2 + $0x38] sm:$0xff]
      %s1986 = scalar_lea.vmem %s1, 12
      %v1987 = vld [vmem:[%s1986] sm:$0x3]
      %v1989 = vsel %vm207, %v1978, 0
      %v1992 = vsel %vm207, %v1979, 0
      %v1995 = vsel %vm207, %v1980, 0
      %v1998 = vsel %vm207, %v1981, 0
      %v2001 = vsel %vm207, %v1982, 0
      %v2004 = vsel %vm207, %v1983, 0
      %v2007 = vsel %vm207, %v1984, 0
      %v2010 = vsel %vm207, %v1985, 0
      %v2013 = vsel %vm544, %v1987, 0
      %2015 = vmatprep.subr.bf16.mxu0 0
      %2016 = vmatpush1.bf16.msra.mxu0 %v2013
      %2017 = vmatprep.subr.bf16.mxu0 0
      %2018 = vmatpush1.bf16.msra.mxu0 0
      %2019 = vmatprep.subr.bf16.mxu0 0
      %2020 = vmatpush1.bf16.msra.mxu0 0
      %2021 = vmatprep.subr.bf16.mxu0 0
      %2022 = vmatpush1.bf16.msra.mxu0 0
      %2023 = vmatprep.subr.bf16.mxu0 0
      %2024 = vmatpush1.bf16.msra.mxu0 0
      %2025 = vmatprep.subr.bf16.mxu0 0
      %2026 = vmatpush1.bf16.msra.mxu0 0
      %2027 = vmatprep.subr.bf16.mxu0 0
      %2028 = vmatpush1.bf16.msra.mxu0 0
      %2029 = vmatprep.subr.bf16.mxu0 0
      %2030 = vmatpush1.bf16.msra.mxu0 0
      %2031 = vmatprep.subr.bf16.mxu0 0
      %2032 = vmatpush1.bf16.msra.mxu0 0
      %2033 = vmatprep.subr.bf16.mxu0 0
      %2034 = vmatpush1.bf16.msra.mxu0 0
      %2035 = vmatprep.subr.bf16.mxu0 0
      %2036 = vmatpush1.bf16.msra.mxu0 0
      %2037 = vmatprep.subr.bf16.mxu0 0
      %2038 = vmatpush1.bf16.msra.mxu0 0
      %2039 = vmatprep.subr.bf16.mxu0 0
      %2040 = vmatpush1.bf16.msra.mxu0 0
      %2041 = vmatprep.subr.bf16.mxu0 0
      %2042 = vmatpush1.bf16.msra.mxu0 0
      %2043 = vmatprep.subr.bf16.mxu0 0
      %2044 = vmatpush1.bf16.msra.mxu0 0
      %2045 = vmatprep.subr.bf16.mxu0 0
      %2046 = vmatpush1.bf16.msra.mxu0 0
      %2047 = vmatprep.mubr.bf16.mxu0 0
      %2048 = vmatmul.mubr.bf16.gmra.mrb[0].mxu0 %v1989
      %v2049 = vpop.f32.mrb[0].mxu0
      %v2050 = vadd.f32 0.0, %v2049
      %v2051 = vpop.f32.mrb[0].mxu0
      %v2052 = vpop.f32.mrb[0].mxu0
      %v2053 = vadd.f32 0.0, %v2052
      %v2054 = vpop.f32.mrb[0].mxu0
      %2055 = vmatprep.mubr.bf16.mxu0 0
      %2056 = vmatmul.mubr.bf16.gmra.mrb[0].mxu0 %v1992
      %v2057 = vpop.f32.mrb[0].mxu0
      %v2058 = vadd.f32 0.0, %v2057
      %v2059 = vpop.f32.mrb[0].mxu0
      %v2060 = vpop.f32.mrb[0].mxu0
      %v2061 = vadd.f32 0.0, %v2060
      %v2062 = vpop.f32.mrb[0].mxu0
      %2063 = vmatprep.mubr.bf16.mxu0 0
      %2064 = vmatmul.mubr.bf16.gmra.mrb[0].mxu0 %v1995
      %v2065 = vpop.f32.mrb[0].mxu0
      %v2066 = vadd.f32 0.0, %v2065
      %v2067 = vpop.f32.mrb[0].mxu0
      %v2068 = vpop.f32.mrb[0].mxu0
      %v2069 = vadd.f32 0.0, %v2068
      %v2070 = vpop.f32.mrb[0].mxu0
      %2071 = vmatprep.mubr.bf16.mxu0 0
      %2072 = vmatmul.mubr.bf16.gmra.mrb[0].mxu0 %v1998
      %v2073 = vpop.f32.mrb[0].mxu0
      %v2074 = vadd.f32 0.0, %v2073
      %v2075 = vpop.f32.mrb[0].mxu0
      %v2076 = vpop.f32.mrb[0].mxu0
      %v2077 = vadd.f32 0.0, %v2076
      %v2078 = vpop.f32.mrb[0].mxu0
      %2079 = vmatprep.mubr.bf16.mxu0 0
      %2080 = vmatmul.mubr.bf16.gmra.mrb[0].mxu0 %v2001
      %v2081 = vpop.f32.mrb[0].mxu0
      %v2082 = vadd.f32 0.0, %v2081
      %v2083 = vpop.f32.mrb[0].mxu0
      %v2084 = vpop.f32.mrb[0].mxu0
      %v2085 = vadd.f32 0.0, %v2084
      %v2086 = vpop.f32.mrb[0].mxu0
      %2087 = vmatprep.mubr.bf16.mxu0 0
      %2088 = vmatmul.mubr.bf16.gmra.mrb[0].mxu0 %v2004
      %v2089 = vpop.f32.mrb[0].mxu0
      %v2090 = vadd.f32 0.0, %v2089
      %v2091 = vpop.f32.mrb[0].mxu0
      %v2092 = vpop.f32.mrb[0].mxu0
      %v2093 = vadd.f32 0.0, %v2092
      %v2094 = vpop.f32.mrb[0].mxu0
      %2095 = vmatprep.mubr.bf16.mxu0 0
      %2096 = vmatmul.mubr.bf16.gmra.mrb[0].mxu0 %v2007
      %v2097 = vpop.f32.mrb[0].mxu0
      %v2098 = vadd.f32 0.0, %v2097
      %v2099 = vpop.f32.mrb[0].mxu0
      %v2100 = vpop.f32.mrb[0].mxu0
      %v2101 = vadd.f32 0.0, %v2100
      %v2102 = vpop.f32.mrb[0].mxu0
      %2103 = vmatprep.mubr.bf16.mxu0 0
      %2104 = vmatmul.mubr.bf16.gmra.mrb[0].mxu0 %v2010
      %v2105 = vpop.f32.mrb[0].mxu0
      %v2106 = vadd.f32 0.0, %v2105
      %v2107 = vpop.f32.mrb[0].mxu0
      %v2108 = vpop.f32.mrb[0].mxu0
      %v2109 = vadd.f32 0.0, %v2108
      %v2110 = vpop.f32.mrb[0].mxu0
      %2111 = vdwg.mxu0
      %v2112 = vadd.f32 %v1886, %v2050
      %v2113 = vadd.f32 %v1887, %v2053
      %v2114 = vadd.f32 %v1888, %v2058
      %v2115 = vadd.f32 %v1889, %v2061
      %v2116 = vadd.f32 %v1890, %v2066
      %v2117 = vadd.f32 %v1891, %v2069
      %v2118 = vadd.f32 %v1892, %v2074
      %v2119 = vadd.f32 %v1893, %v2077
      %v2120 = vadd.f32 %v1894, %v2082
      %v2121 = vadd.f32 %v1895, %v2085
      %v2122 = vadd.f32 %v1896, %v2090
      %v2123 = vadd.f32 %v1897, %v2093
      %v2124 = vadd.f32 %v1898, %v2098
      %v2125 = vadd.f32 %v1899, %v2101
      %v2126 = vadd.f32 %v1900, %v2106
      %v2127 = vadd.f32 %v1901, %v2109
      %v2128 = vld [vmem:[%s225] sm:$0xf]
      %v2129 = vld [vmem:[%s225 + $0x4] sm:$0xf]
      %v2130 = vld [vmem:[%s225 + $0x8] sm:$0x1]
      %v2134 = vunpack.c.l.b16 %v2128
      %v2135 = vunpack.c.l.b16 %v2129
      %v2136 = vunpack.c.l.b16 %v2130
      %v2137 = vpack.c.b16 %v2135, %v2134
      %v2138 = vpack.c.b16 %v2136, %v2136
      %v2140 = vshrl.u32 %v2137, 16
      %v2142 = vshll.u32 %v2137, 16
      %v2144 = vrot.slane %v2142, 1
      %v2145 = vor.u32 %v2140, %v2144
      %v2147 = vshll.u32 %v2138, 16
      %v2149 = vrot.slane %v2147, 1
      %v2150 = vsel %vm320, %v2145, %v2149
      %2152 = vst.msk [vmem:[#allocation2] sm:$0xff] %vm207, %v2150
      %v2153 = vld [vmem:[%s238] sm:$0xf]
      %v2154 = vld [vmem:[%s238 + $0x4] sm:$0xf]
      %v2155 = vld [vmem:[%s238 + $0x8] sm:$0x1]
      %v2159 = vunpack.c.l.b16 %v2153
      %v2160 = vunpack.c.l.b16 %v2154
      %v2161 = vunpack.c.l.b16 %v2155
      %v2162 = vpack.c.b16 %v2160, %v2159
      %v2163 = vpack.c.b16 %v2161, %v2161
      %v2165 = vshrl.u32 %v2162, 16
      %v2167 = vshll.u32 %v2162, 16
      %v2169 = vrot.slane %v2167, 1
      %v2170 = vor.u32 %v2165, %v2169
      %v2172 = vshll.u32 %v2163, 16
      %v2174 = vrot.slane %v2172, 1
      %v2175 = vsel %vm320, %v2170, %v2174
      %2177 = vst.msk [vmem:[#allocation2 + $0x8] sm:$0xff] %vm207, %v2175
      %v2178 = vld [vmem:[%s251] sm:$0xf]
      %v2179 = vld [vmem:[%s251 + $0x4] sm:$0xf]
      %v2180 = vld [vmem:[%s251 + $0x8] sm:$0x1]
      %v2184 = vunpack.c.l.b16 %v2178
      %v2185 = vunpack.c.l.b16 %v2179
      %v2186 = vunpack.c.l.b16 %v2180
      %v2187 = vpack.c.b16 %v2185, %v2184
      %v2188 = vpack.c.b16 %v2186, %v2186
      %v2190 = vshrl.u32 %v2187, 16
      %v2192 = vshll.u32 %v2187, 16
      %v2194 = vrot.slane %v2192, 1
      %v2195 = vor.u32 %v2190, %v2194
      %v2197 = vshll.u32 %v2188, 16
      %v2199 = vrot.slane %v2197, 1
      %v2200 = vsel %vm320, %v2195, %v2199
      %2202 = vst.msk [vmem:[#allocation2 + $0x10] sm:$0xff] %vm207, %v2200
      %v2203 = vld [vmem:[%s264] sm:$0xf]
      %v2204 = vld [vmem:[%s264 + $0x4] sm:$0xf]
      %v2205 = vld [vmem:[%s264 + $0x8] sm:$0x1]
      %v2209 = vunpack.c.l.b16 %v2203
      %v2210 = vunpack.c.l.b16 %v2204
      %v2211 = vunpack.c.l.b16 %v2205
      %v2212 = vpack.c.b16 %v2210, %v2209
      %v2213 = vpack.c.b16 %v2211, %v2211
      %v2215 = vshrl.u32 %v2212, 16
      %v2217 = vshll.u32 %v2212, 16
      %v2219 = vrot.slane %v2217, 1
      %v2220 = vor.u32 %v2215, %v2219
      %v2222 = vshll.u32 %v2213, 16
      %v2224 = vrot.slane %v2222, 1
      %v2225 = vsel %vm320, %v2220, %v2224
      %2227 = vst.msk [vmem:[#allocation2 + $0x18] sm:$0xff] %vm207, %v2225
      %v2228 = vld [vmem:[%s277] sm:$0xf]
      %v2229 = vld [vmem:[%s277 + $0x4] sm:$0xf]
      %v2230 = vld [vmem:[%s277 + $0x8] sm:$0x1]
      %v2234 = vunpack.c.l.b16 %v2228
      %v2235 = vunpack.c.l.b16 %v2229
      %v2236 = vunpack.c.l.b16 %v2230
      %v2237 = vpack.c.b16 %v2235, %v2234
      %v2238 = vpack.c.b16 %v2236, %v2236
      %v2240 = vshrl.u32 %v2237, 16
      %v2242 = vshll.u32 %v2237, 16
      %v2244 = vrot.slane %v2242, 1
      %v2245 = vor.u32 %v2240, %v2244
      %v2247 = vshll.u32 %v2238, 16
      %v2249 = vrot.slane %v2247, 1
      %v2250 = vsel %vm320, %v2245, %v2249
      %2252 = vst.msk [vmem:[#allocation2 + $0x20] sm:$0xff] %vm207, %v2250
      %v2253 = vld [vmem:[%s290] sm:$0xf]
      %v2254 = vld [vmem:[%s290 + $0x4] sm:$0xf]
      %v2255 = vld [vmem:[%s290 + $0x8] sm:$0x1]
      %v2259 = vunpack.c.l.b16 %v2253
      %v2260 = vunpack.c.l.b16 %v2254
      %v2261 = vunpack.c.l.b16 %v2255
      %v2262 = vpack.c.b16 %v2260, %v2259
      %v2263 = vpack.c.b16 %v2261, %v2261
      %v2265 = vshrl.u32 %v2262, 16
      %v2267 = vshll.u32 %v2262, 16
      %v2269 = vrot.slane %v2267, 1
      %v2270 = vor.u32 %v2265, %v2269
      %v2272 = vshll.u32 %v2263, 16
      %v2274 = vrot.slane %v2272, 1
      %v2275 = vsel %vm320, %v2270, %v2274
      %2277 = vst.msk [vmem:[#allocation2 + $0x28] sm:$0xff] %vm207, %v2275
      %v2278 = vld [vmem:[%s1114] sm:$0xf]
      %v2279 = vld [vmem:[%s1114 + $0x4] sm:$0xf]
      %v2280 = vld [vmem:[%s1114 + $0x8] sm:$0x1]
      %v2284 = vunpack.c.l.b16 %v2278
      %v2285 = vunpack.c.l.b16 %v2279
      %v2286 = vunpack.c.l.b16 %v2280
      %v2287 = vpack.c.b16 %v2285, %v2284
      %v2288 = vpack.c.b16 %v2286, %v2286
      %v2290 = vshrl.u32 %v2287, 16
      %v2292 = vshll.u32 %v2287, 16
      %v2294 = vrot.slane %v2292, 1
      %v2295 = vor.u32 %v2290, %v2294
      %v2297 = vshll.u32 %v2288, 16
      %v2299 = vrot.slane %v2297, 1
      %v2300 = vsel %vm320, %v2295, %v2299
      %2302 = vst.msk [vmem:[#allocation2 + $0x30] sm:$0xff] %vm207, %v2300
      %v2303 = vld [vmem:[%s1968] sm:$0xf]
      %v2304 = vld [vmem:[%s1968 + $0x4] sm:$0xf]
      %v2305 = vld [vmem:[%s1968 + $0x8] sm:$0x1]
      %v2309 = vunpack.c.l.b16 %v2303
      %v2310 = vunpack.c.l.b16 %v2304
      %v2311 = vunpack.c.l.b16 %v2305
      %v2312 = vpack.c.b16 %v2310, %v2309
      %v2313 = vpack.c.b16 %v2311, %v2311
      %v2315 = vshrl.u32 %v2312, 16
      %v2317 = vshll.u32 %v2312, 16
      %v2319 = vrot.slane %v2317, 1
      %v2320 = vor.u32 %v2315, %v2319
      %v2322 = vshll.u32 %v2313, 16
      %v2324 = vrot.slane %v2322, 1
      %v2325 = vsel %vm320, %v2320, %v2324
      %2327 = vst.msk [vmem:[#allocation2 + $0x38] sm:$0xff] %vm207, %v2325
      %v2328 = vld [vmem:[#allocation2] sm:$0xff]
      %v2329 = vld [vmem:[#allocation2 + $0x8] sm:$0xff]
      %v2330 = vld [vmem:[#allocation2 + $0x10] sm:$0xff]
      %v2331 = vld [vmem:[#allocation2 + $0x18] sm:$0xff]
      %v2332 = vld [vmem:[#allocation2 + $0x20] sm:$0xff]
      %v2333 = vld [vmem:[#allocation2 + $0x28] sm:$0xff]
      %v2334 = vld [vmem:[#allocation2 + $0x30] sm:$0xff]
      %v2335 = vld [vmem:[#allocation2 + $0x38] sm:$0xff]
      %s2336 = scalar_lea.vmem %s1, 14
      %v2337 = vld [vmem:[%s2336] sm:$0x3]
      %v2339 = vsel %vm207, %v2328, 0
      %v2342 = vsel %vm207, %v2329, 0
      %v2345 = vsel %vm207, %v2330, 0
      %v2348 = vsel %vm207, %v2331, 0
      %v2351 = vsel %vm207, %v2332, 0
      %v2354 = vsel %vm207, %v2333, 0
      %v2357 = vsel %vm207, %v2334, 0
      %v2360 = vsel %vm207, %v2335, 0
      %v2363 = vsel %vm544, %v2337, 0
      %2365 = vmatprep.subr.bf16.mxu0 0
      %2366 = vmatpush1.bf16.msra.mxu0 %v2363
      %2367 = vmatprep.subr.bf16.mxu0 0
      %2368 = vmatpush1.bf16.msra.mxu0 0
      %2369 = vmatprep.subr.bf16.mxu0 0
      %2370 = vmatpush1.bf16.msra.mxu0 0
      %2371 = vmatprep.subr.bf16.mxu0 0
      %2372 = vmatpush1.bf16.msra.mxu0 0
      %2373 = vmatprep.subr.bf16.mxu0 0
      %2374 = vmatpush1.bf16.msra.mxu0 0
      %2375 = vmatprep.subr.bf16.mxu0 0
      %2376 = vmatpush1.bf16.msra.mxu0 0
      %2377 = vmatprep.subr.bf16.mxu0 0
      %2378 = vmatpush1.bf16.msra.mxu0 0
      %2379 = vmatprep.subr.bf16.mxu0 0
      %2380 = vmatpush1.bf16.msra.mxu0 0
      %2381 = vmatprep.subr.bf16.mxu0 0
      %2382 = vmatpush1.bf16.msra.mxu0 0
      %2383 = vmatprep.subr.bf16.mxu0 0
      %2384 = vmatpush1.bf16.msra.mxu0 0
      %2385 = vmatprep.subr.bf16.mxu0 0
      %2386 = vmatpush1.bf16.msra.mxu0 0
      %2387 = vmatprep.subr.bf16.mxu0 0
      %2388 = vmatpush1.bf16.msra.mxu0 0
      %2389 = vmatprep.subr.bf16.mxu0 0
      %2390 = vmatpush1.bf16.msra.mxu0 0
      %2391 = vmatprep.subr.bf16.mxu0 0
      %2392 = vmatpush1.bf16.msra.mxu0 0
      %2393 = vmatprep.subr.bf16.mxu0 0
      %2394 = vmatpush1.bf16.msra.mxu0 0
      %2395 = vmatprep.subr.bf16.mxu0 0
      %2396 = vmatpush1.bf16.msra.mxu0 0
      %2397 = vmatprep.mubr.bf16.mxu0 0
      %2398 = vmatmul.mubr.bf16.gmra.mrb[0].mxu0 %v2339
      %v2399 = vpop.f32.mrb[0].mxu0
      %v2400 = vadd.f32 0.0, %v2399
      %v2401 = vpop.f32.mrb[0].mxu0
      %v2402 = vpop.f32.mrb[0].mxu0
      %v2403 = vadd.f32 0.0, %v2402
      %v2404 = vpop.f32.mrb[0].mxu0
      %2405 = vmatprep.mubr.bf16.mxu0 0
      %2406 = vmatmul.mubr.bf16.gmra.mrb[0].mxu0 %v2342
      %v2407 = vpop.f32.mrb[0].mxu0
      %v2408 = vadd.f32 0.0, %v2407
      %v2409 = vpop.f32.mrb[0].mxu0
      %v2410 = vpop.f32.mrb[0].mxu0
      %v2411 = vadd.f32 0.0, %v2410
      %v2412 = vpop.f32.mrb[0].mxu0
      %2413 = vmatprep.mubr.bf16.mxu0 0
      %2414 = vmatmul.mubr.bf16.gmra.mrb[0].mxu0 %v2345
      %v2415 = vpop.f32.mrb[0].mxu0
      %v2416 = vadd.f32 0.0, %v2415
      %v2417 = vpop.f32.mrb[0].mxu0
      %v2418 = vpop.f32.mrb[0].mxu0
      %v2419 = vadd.f32 0.0, %v2418
      %v2420 = vpop.f32.mrb[0].mxu0
      %2421 = vmatprep.mubr.bf16.mxu0 0
      %2422 = vmatmul.mubr.bf16.gmra.mrb[0].mxu0 %v2348
      %v2423 = vpop.f32.mrb[0].mxu0
      %v2424 = vadd.f32 0.0, %v2423
      %v2425 = vpop.f32.mrb[0].mxu0
      %v2426 = vpop.f32.mrb[0].mxu0
      %v2427 = vadd.f32 0.0, %v2426
      %v2428 = vpop.f32.mrb[0].mxu0
      %2429 = vmatprep.mubr.bf16.mxu0 0
      %2430 = vmatmul.mubr.bf16.gmra.mrb[0].mxu0 %v2351
      %v2431 = vpop.f32.mrb[0].mxu0
      %v2432 = vadd.f32 0.0, %v2431
      %v2433 = vpop.f32.mrb[0].mxu0
      %v2434 = vpop.f32.mrb[0].mxu0
      %v2435 = vadd.f32 0.0, %v2434
      %v2436 = vpop.f32.mrb[0].mxu0
      %2437 = vmatprep.mubr.bf16.mxu0 0
      %2438 = vmatmul.mubr.bf16.gmra.mrb[0].mxu0 %v2354
      %v2439 = vpop.f32.mrb[0].mxu0
      %v2440 = vadd.f32 0.0, %v2439
      %v2441 = vpop.f32.mrb[0].mxu0
      %v2442 = vpop.f32.mrb[0].mxu0
      %v2443 = vadd.f32 0.0, %v2442
      %v2444 = vpop.f32.mrb[0].mxu0
      %2445 = vmatprep.mubr.bf16.mxu0 0
      %2446 = vmatmul.mubr.bf16.gmra.mrb[0].mxu0 %v2357
      %v2447 = vpop.f32.mrb[0].mxu0
      %v2448 = vadd.f32 0.0, %v2447
      %v2449 = vpop.f32.mrb[0].mxu0
      %v2450 = vpop.f32.mrb[0].mxu0
      %v2451 = vadd.f32 0.0, %v2450
      %v2452 = vpop.f32.mrb[0].mxu0
      %2453 = vmatprep.mubr.bf16.mxu0 0
      %2454 = vmatmul.mubr.bf16.gmra.mrb[0].mxu0 %v2360
      %v2455 = vpop.f32.mrb[0].mxu0
      %v2456 = vadd.f32 0.0, %v2455
      %v2457 = vpop.f32.mrb[0].mxu0
      %v2458 = vpop.f32.mrb[0].mxu0
      %v2459 = vadd.f32 0.0, %v2458
      %v2460 = vpop.f32.mrb[0].mxu0
      %2461 = vdwg.mxu0
      %v2462 = vadd.f32 %v2112, %v2400
      %v2463 = vadd.f32 %v2113, %v2403
      %v2464 = vadd.f32 %v2114, %v2408
      %v2465 = vadd.f32 %v2115, %v2411
      %v2466 = vadd.f32 %v2116, %v2416
      %v2467 = vadd.f32 %v2117, %v2419
      %v2468 = vadd.f32 %v2118, %v2424
      %v2469 = vadd.f32 %v2119, %v2427
      %v2470 = vadd.f32 %v2120, %v2432
      %v2471 = vadd.f32 %v2121, %v2435
      %v2472 = vadd.f32 %v2122, %v2440
      %v2473 = vadd.f32 %v2123, %v2443
      %v2474 = vadd.f32 %v2124, %v2448
      %v2475 = vadd.f32 %v2125, %v2451
      %v2476 = vadd.f32 %v2126, %v2456
      %v2477 = vadd.f32 %v2127, %v2459
      %v2478 = vld [vmem:[%s225] sm:$0xe]
      %v2479 = vld [vmem:[%s225 + $0x4] sm:$0xf]
      %v2480 = vld [vmem:[%s225 + $0x8] sm:$0x1]
      %v2484 = vunpack.c.l.b16 %v2478
      %v2485 = vunpack.c.l.b16 %v2479
      %v2486 = vunpack.c.l.b16 %v2480
      %v2487 = vpack.c.b16 %v2485, %v2484
      %v2488 = vpack.c.b16 %v2486, %v2486
      %v2489 = vrot.slane %v2487, 1
      %v2490 = vrot.slane %v2488, 1
      %v2491 = vsel %vm780, %v2489, %v2490
      %2493 = vst.msk [vmem:[#allocation2] sm:$0xff] %vm207, %v2491
      %v2494 = vld [vmem:[%s238] sm:$0xe]
      %v2495 = vld [vmem:[%s238 + $0x4] sm:$0xf]
      %v2496 = vld [vmem:[%s238 + $0x8] sm:$0x1]
      %v2500 = vunpack.c.l.b16 %v2494
      %v2501 = vunpack.c.l.b16 %v2495
      %v2502 = vunpack.c.l.b16 %v2496
      %v2503 = vpack.c.b16 %v2501, %v2500
      %v2504 = vpack.c.b16 %v2502, %v2502
      %v2505 = vrot.slane %v2503, 1
      %v2506 = vrot.slane %v2504, 1
      %v2507 = vsel %vm780, %v2505, %v2506
      %2509 = vst.msk [vmem:[#allocation2 + $0x8] sm:$0xff] %vm207, %v2507
      %v2510 = vld [vmem:[%s251] sm:$0xe]
      %v2511 = vld [vmem:[%s251 + $0x4] sm:$0xf]
      %v2512 = vld [vmem:[%s251 + $0x8] sm:$0x1]
      %v2516 = vunpack.c.l.b16 %v2510
      %v2517 = vunpack.c.l.b16 %v2511
      %v2518 = vunpack.c.l.b16 %v2512
      %v2519 = vpack.c.b16 %v2517, %v2516
      %v2520 = vpack.c.b16 %v2518, %v2518
      %v2521 = vrot.slane %v2519, 1
      %v2522 = vrot.slane %v2520, 1
      %v2523 = vsel %vm780, %v2521, %v2522
      %2525 = vst.msk [vmem:[#allocation2 + $0x10] sm:$0xff] %vm207, %v2523
      %v2526 = vld [vmem:[%s264] sm:$0xe]
      %v2527 = vld [vmem:[%s264 + $0x4] sm:$0xf]
      %v2528 = vld [vmem:[%s264 + $0x8] sm:$0x1]
      %v2532 = vunpack.c.l.b16 %v2526
      %v2533 = vunpack.c.l.b16 %v2527
      %v2534 = vunpack.c.l.b16 %v2528
      %v2535 = vpack.c.b16 %v2533, %v2532
      %v2536 = vpack.c.b16 %v2534, %v2534
      %v2537 = vrot.slane %v2535, 1
      %v2538 = vrot.slane %v2536, 1
      %v2539 = vsel %vm780, %v2537, %v2538
      %2541 = vst.msk [vmem:[#allocation2 + $0x18] sm:$0xff] %vm207, %v2539
      %v2542 = vld [vmem:[%s277] sm:$0xe]
      %v2543 = vld [vmem:[%s277 + $0x4] sm:$0xf]
      %v2544 = vld [vmem:[%s277 + $0x8] sm:$0x1]
      %v2548 = vunpack.c.l.b16 %v2542
      %v2549 = vunpack.c.l.b16 %v2543
      %v2550 = vunpack.c.l.b16 %v2544
      %v2551 = vpack.c.b16 %v2549, %v2548
      %v2552 = vpack.c.b16 %v2550, %v2550
      %v2553 = vrot.slane %v2551, 1
      %v2554 = vrot.slane %v2552, 1
      %v2555 = vsel %vm780, %v2553, %v2554
      %2557 = vst.msk [vmem:[#allocation2 + $0x20] sm:$0xff] %vm207, %v2555
      %v2558 = vld [vmem:[%s290] sm:$0xe]
      %v2559 = vld [vmem:[%s290 + $0x4] sm:$0xf]
      %v2560 = vld [vmem:[%s290 + $0x8] sm:$0x1]
      %v2564 = vunpack.c.l.b16 %v2558
      %v2565 = vunpack.c.l.b16 %v2559
      %v2566 = vunpack.c.l.b16 %v2560
      %v2567 = vpack.c.b16 %v2565, %v2564
      %v2568 = vpack.c.b16 %v2566, %v2566
      %v2569 = vrot.slane %v2567, 1
      %v2570 = vrot.slane %v2568, 1
      %v2571 = vsel %vm780, %v2569, %v2570
      %2573 = vst.msk [vmem:[#allocation2 + $0x28] sm:$0xff] %vm207, %v2571
      %v2574 = vld [vmem:[%s1114] sm:$0xe]
      %v2575 = vld [vmem:[%s1114 + $0x4] sm:$0xf]
      %v2576 = vld [vmem:[%s1114 + $0x8] sm:$0x1]
      %v2580 = vunpack.c.l.b16 %v2574
      %v2581 = vunpack.c.l.b16 %v2575
      %v2582 = vunpack.c.l.b16 %v2576
      %v2583 = vpack.c.b16 %v2581, %v2580
      %v2584 = vpack.c.b16 %v2582, %v2582
      %v2585 = vrot.slane %v2583, 1
      %v2586 = vrot.slane %v2584, 1
      %v2587 = vsel %vm780, %v2585, %v2586
      %2589 = vst.msk [vmem:[#allocation2 + $0x30] sm:$0xff] %vm207, %v2587
      %v2590 = vld [vmem:[%s1968] sm:$0xe]
      %v2591 = vld [vmem:[%s1968 + $0x4] sm:$0xf]
      %v2592 = vld [vmem:[%s1968 + $0x8] sm:$0x1]
      %v2596 = vunpack.c.l.b16 %v2590
      %v2597 = vunpack.c.l.b16 %v2591
      %v2598 = vunpack.c.l.b16 %v2592
      %v2599 = vpack.c.b16 %v2597, %v2596
      %v2600 = vpack.c.b16 %v2598, %v2598
      %v2601 = vrot.slane %v2599, 1
      %v2602 = vrot.slane %v2600, 1
      %v2603 = vsel %vm780, %v2601, %v2602
      %2605 = vst.msk [vmem:[#allocation2 + $0x38] sm:$0xff] %vm207, %v2603
      %v2606 = vld [vmem:[#allocation2] sm:$0xff]
      %v2607 = vld [vmem:[#allocation2 + $0x8] sm:$0xff]
      %v2608 = vld [vmem:[#allocation2 + $0x10] sm:$0xff]
      %v2609 = vld [vmem:[#allocation2 + $0x18] sm:$0xff]
      %v2610 = vld [vmem:[#allocation2 + $0x20] sm:$0xff]
      %v2611 = vld [vmem:[#allocation2 + $0x28] sm:$0xff]
      %v2612 = vld [vmem:[#allocation2 + $0x30] sm:$0xff]
      %v2613 = vld [vmem:[#allocation2 + $0x38] sm:$0xff]
      %s2614 = scalar_lea.vmem %s1, 16
      %v2615 = vld [vmem:[%s2614] sm:$0x3]
      %v2617 = vsel %vm207, %v2606, 0
      %v2620 = vsel %vm207, %v2607, 0
      %v2623 = vsel %vm207, %v2608, 0
      %v2626 = vsel %vm207, %v2609, 0
      %v2629 = vsel %vm207, %v2610, 0
      %v2632 = vsel %vm207, %v2611, 0
      %v2635 = vsel %vm207, %v2612, 0
      %v2638 = vsel %vm207, %v2613, 0
      %v2641 = vsel %vm544, %v2615, 0
      %2643 = vmatprep.subr.bf16.mxu0 0
      %2644 = vmatpush1.bf16.msra.mxu0 %v2641
      %2645 = vmatprep.subr.bf16.mxu0 0
      %2646 = vmatpush1.bf16.msra.mxu0 0
      %2647 = vmatprep.subr.bf16.mxu0 0
      %2648 = vmatpush1.bf16.msra.mxu0 0
      %2649 = vmatprep.subr.bf16.mxu0 0
      %2650 = vmatpush1.bf16.msra.mxu0 0
      %2651 = vmatprep.subr.bf16.mxu0 0
      %2652 = vmatpush1.bf16.msra.mxu0 0
      %2653 = vmatprep.subr.bf16.mxu0 0
      %2654 = vmatpush1.bf16.msra.mxu0 0
      %2655 = vmatprep.subr.bf16.mxu0 0
      %2656 = vmatpush1.bf16.msra.mxu0 0
      %2657 = vmatprep.subr.bf16.mxu0 0
      %2658 = vmatpush1.bf16.msra.mxu0 0
      %2659 = vmatprep.subr.bf16.mxu0 0
      %2660 = vmatpush1.bf16.msra.mxu0 0
      %2661 = vmatprep.subr.bf16.mxu0 0
      %2662 = vmatpush1.bf16.msra.mxu0 0
      %2663 = vmatprep.subr.bf16.mxu0 0
      %2664 = vmatpush1.bf16.msra.mxu0 0
      %2665 = vmatprep.subr.bf16.mxu0 0
      %2666 = vmatpush1.bf16.msra.mxu0 0
      %2667 = vmatprep.subr.bf16.mxu0 0
      %2668 = vmatpush1.bf16.msra.mxu0 0
      %2669 = vmatprep.subr.bf16.mxu0 0
      %2670 = vmatpush1.bf16.msra.mxu0 0
      %2671 = vmatprep.subr.bf16.mxu0 0
      %2672 = vmatpush1.bf16.msra.mxu0 0
      %2673 = vmatprep.subr.bf16.mxu0 0
      %2674 = vmatpush1.bf16.msra.mxu0 0
      %2675 = vmatprep.mubr.bf16.mxu0 0
      %2676 = vmatmul.mubr.bf16.gmra.mrb[0].mxu0 %v2617
      %v2677 = vpop.f32.mrb[0].mxu0
      %v2678 = vadd.f32 0.0, %v2677
      %v2679 = vpop.f32.mrb[0].mxu0
      %v2680 = vpop.f32.mrb[0].mxu0
      %v2681 = vadd.f32 0.0, %v2680
      %v2682 = vpop.f32.mrb[0].mxu0
      %2683 = vmatprep.mubr.bf16.mxu0 0
      %2684 = vmatmul.mubr.bf16.gmra.mrb[0].mxu0 %v2620
      %v2685 = vpop.f32.mrb[0].mxu0
      %v2686 = vadd.f32 0.0, %v2685
      %v2687 = vpop.f32.mrb[0].mxu0
      %v2688 = vpop.f32.mrb[0].mxu0
      %v2689 = vadd.f32 0.0, %v2688
      %v2690 = vpop.f32.mrb[0].mxu0
      %2691 = vmatprep.mubr.bf16.mxu0 0
      %2692 = vmatmul.mubr.bf16.gmra.mrb[0].mxu0 %v2623
      %v2693 = vpop.f32.mrb[0].mxu0
      %v2694 = vadd.f32 0.0, %v2693
      %v2695 = vpop.f32.mrb[0].mxu0
      %v2696 = vpop.f32.mrb[0].mxu0
      %v2697 = vadd.f32 0.0, %v2696
      %v2698 = vpop.f32.mrb[0].mxu0
      %2699 = vmatprep.mubr.bf16.mxu0 0
      %2700 = vmatmul.mubr.bf16.gmra.mrb[0].mxu0 %v2626
      %v2701 = vpop.f32.mrb[0].mxu0
      %v2702 = vadd.f32 0.0, %v2701
      %v2703 = vpop.f32.mrb[0].mxu0
      %v2704 = vpop.f32.mrb[0].mxu0
      %v2705 = vadd.f32 0.0, %v2704
      %v2706 = vpop.f32.mrb[0].mxu0
      %2707 = vmatprep.mubr.bf16.mxu0 0
      %2708 = vmatmul.mubr.bf16.gmra.mrb[0].mxu0 %v2629
      %v2709 = vpop.f32.mrb[0].mxu0
      %v2710 = vadd.f32 0.0, %v2709
      %v2711 = vpop.f32.mrb[0].mxu0
      %v2712 = vpop.f32.mrb[0].mxu0
      %v2713 = vadd.f32 0.0, %v2712
      %v2714 = vpop.f32.mrb[0].mxu0
      %2715 = vmatprep.mubr.bf16.mxu0 0
      %2716 = vmatmul.mubr.bf16.gmra.mrb[0].mxu0 %v2632
      %v2717 = vpop.f32.mrb[0].mxu0
      %v2718 = vadd.f32 0.0, %v2717
      %v2719 = vpop.f32.mrb[0].mxu0
      %v2720 = vpop.f32.mrb[0].mxu0
      %v2721 = vadd.f32 0.0, %v2720
      %v2722 = vpop.f32.mrb[0].mxu0
      %2723 = vmatprep.mubr.bf16.mxu0 0
      %2724 = vmatmul.mubr.bf16.gmra.mrb[0].mxu0 %v2635
      %v2725 = vpop.f32.mrb[0].mxu0
      %v2726 = vadd.f32 0.0, %v2725
      %v2727 = vpop.f32.mrb[0].mxu0
      %v2728 = vpop.f32.mrb[0].mxu0
      %v2729 = vadd.f32 0.0, %v2728
      %v2730 = vpop.f32.mrb[0].mxu0
      %2731 = vmatprep.mubr.bf16.mxu0 0
      %2732 = vmatmul.mubr.bf16.gmra.mrb[0].mxu0 %v2638
      %v2733 = vpop.f32.mrb[0].mxu0
      %v2734 = vadd.f32 0.0, %v2733
      %v2735 = vpop.f32.mrb[0].mxu0
      %v2736 = vpop.f32.mrb[0].mxu0
      %v2737 = vadd.f32 0.0, %v2736
      %v2738 = vpop.f32.mrb[0].mxu0
      %2739 = vdwg.mxu0
      %v2740 = vadd.f32 %v2462, %v2678
      %v2741 = vadd.f32 %v2463, %v2681
      %v2742 = vadd.f32 %v2464, %v2686
      %v2743 = vadd.f32 %v2465, %v2689
      %v2744 = vadd.f32 %v2466, %v2694
      %v2745 = vadd.f32 %v2467, %v2697
      %v2746 = vadd.f32 %v2468, %v2702
      %v2747 = vadd.f32 %v2469, %v2705
      %v2748 = vadd.f32 %v2470, %v2710
      %v2749 = vadd.f32 %v2471, %v2713
      %v2750 = vadd.f32 %v2472, %v2718
      %v2751 = vadd.f32 %v2473, %v2721
      %v2752 = vadd.f32 %v2474, %v2726
      %v2753 = vadd.f32 %v2475, %v2729
      %v2754 = vadd.f32 %v2476, %v2734
      %v2755 = vadd.f32 %v2477, %v2737
      %v2756 = vld [vmem:[%s2] sm:$0x1]
      %v2758 = vlaneseq
      %v2759 = vshrl.u32 %v2758, 7
      %v2760 = vsub.s32 0, %v2759
      %v2761 = vrot.slane %v2756, %v2760
      %v2763 = vadd.f32 %v2740, %v2761
      %v2764 = vadd.f32 %v2741, %v2761
      %v2765 = vadd.f32 %v2742, %v2761
      %v2766 = vadd.f32 %v2743, %v2761
      %v2767 = vadd.f32 %v2744, %v2761
      %v2768 = vadd.f32 %v2745, %v2761
      %v2769 = vadd.f32 %v2746, %v2761
      %v2770 = vadd.f32 %v2747, %v2761
      %v2771 = vadd.f32 %v2748, %v2761
      %v2772 = vadd.f32 %v2749, %v2761
      %v2773 = vadd.f32 %v2750, %v2761
      %v2774 = vadd.f32 %v2751, %v2761
      %v2775 = vadd.f32 %v2752, %v2761
      %v2776 = vadd.f32 %v2753, %v2761
      %v2777 = vadd.f32 %v2754, %v2761
      %v2778 = vadd.f32 %v2755, %v2761
      %v2779 = vmax.f32 %v2763, 0.0
      %v2780 = vmax.f32 %v2764, 0.0
      %v2781 = vmax.f32 %v2765, 0.0
      %v2782 = vmax.f32 %v2766, 0.0
      %v2783 = vmax.f32 %v2767, 0.0
      %v2784 = vmax.f32 %v2768, 0.0
      %v2785 = vmax.f32 %v2769, 0.0
      %v2786 = vmax.f32 %v2770, 0.0
      %v2787 = vmax.f32 %v2771, 0.0
      %v2788 = vmax.f32 %v2772, 0.0
      %v2789 = vmax.f32 %v2773, 0.0
      %v2790 = vmax.f32 %v2774, 0.0
      %v2791 = vmax.f32 %v2775, 0.0
      %v2792 = vmax.f32 %v2776, 0.0
      %v2793 = vmax.f32 %v2777, 0.0
      %v2794 = vmax.f32 %v2778, 0.0
      %vm2795 = vcmask 64512
      %2796 = vst.msk [vmem:[%s192] sm:$0xff] %vm2795, %v2779
      %2797 = vst.msk [vmem:[%s192 + $0x8] sm:$0xff] %vm2795, %v2780
      %2798 = vst.msk [vmem:[%s192 + $0x10] sm:$0xff] %vm2795, %v2781
      %2799 = vst.msk [vmem:[%s192 + $0x18] sm:$0xff] %vm2795, %v2782
      %2800 = vst.msk [vmem:[%s192 + $0x20] sm:$0xff] %vm2795, %v2783
      %2801 = vst.msk [vmem:[%s192 + $0x28] sm:$0xff] %vm2795, %v2784
      %2802 = vst.msk [vmem:[%s192 + $0x30] sm:$0xff] %vm2795, %v2785
      %2803 = vst.msk [vmem:[%s192 + $0x38] sm:$0xff] %vm2795, %v2786
      %2804 = vst.msk [vmem:[%s192 + $0x40] sm:$0xff] %vm2795, %v2787
      %2805 = vst.msk [vmem:[%s192 + $0x48] sm:$0xff] %vm2795, %v2788
      %2806 = vst.msk [vmem:[%s192 + $0x50] sm:$0xff] %vm2795, %v2789
      %2807 = vst.msk [vmem:[%s192 + $0x58] sm:$0xff] %vm2795, %v2790
      %2808 = vst.msk [vmem:[%s192 + $0x60] sm:$0xff] %vm2795, %v2791
      %2809 = vst.msk [vmem:[%s192 + $0x68] sm:$0xff] %vm2795, %v2792
      %2810 = vst.msk [vmem:[%s192 + $0x70] sm:$0xff] %vm2795, %v2793
      %2811 = vst.msk [vmem:[%s192 + $0x78] sm:$0xff] %vm2795, %v2794
      %s2812 = smul.u32 16, %s19
      %p2813 = scmp.lt.s32.totalorder %s18, 1
      %s2814 = scalar_select %p2813, %s18, 1
      %p2815 = scmp.lt.s32.totalorder %s2812, 31
      %s2816 = scalar_select %p2815, %s2812, 31
      %s2817 = smul.addr %s2814, 32
      %s2818 = sadd.s32 %s2816, %s2817
      %s2819 = smul.addr %s2818, 8
      %s2820 = scalar_lea.vmem %s3, %s2819
      // Predicated region
      $region33: #{tpu_custom_call.1} parent=31 // pred_check
        %p2821 = pneg %p114
      $region34: #{tpu_custom_call.1} parent=31 // pred_check_branch
        %2823 = sbr.rel (%p2821) target = $region36
      $region35: #{tpu_custom_call.1} parent=31 // pred_region
        %s2824 = smul.u32 16, %s19
      $region36: #{tpu_custom_call.1} parent=31 // pred_fallthru
        _
    $region32: #{tpu_custom_call.1} parent=5 // pred_fallthru
      _
    %p2825 = scmp.le.s32.totalorder 2, %s9
    // Predicated region
    $region37: #{tpu_custom_call.1} parent=5 // pred_check
      %p2826 = pneg %p2825
    $region38: #{tpu_custom_call.1} parent=5 // pred_check_branch
      %2828 = sbr.rel (%p2826) target = $region40
    $region39: #{tpu_custom_call.1} parent=5 // pred_region
      %s2829 = ssub.s32 %s9, 2
      // Predicated region
      $region41: #{tpu_custom_call.1} parent=39 // pred_check
        %p2830 = pneg %p120
      $region42: #{tpu_custom_call.1} parent=39 // pred_check_branch
        %2832 = sbr.rel (%p2830) target = $region44
      $region43: #{tpu_custom_call.1} parent=39 // pred_region
        %s2833 = smul.u32 16, %s21
        %p2834 = scmp.lt.s32.totalorder %s20, 1
        %s2835 = scalar_select %p2834, %s20, 1
        %p2836 = scmp.lt.s32.totalorder %s2833, 31
        %s2837 = scalar_select %p2836, %s2833, 31
        %s2838 = smul.addr %s2835, 32
        %s2839 = sadd.s32 %s2837, %s2838
        %s2840 = smul.addr %s2839, 8
        %s2841 = scalar_lea.vmem %s3, %s2840
      $region44: #{tpu_custom_call.1} parent=39 // pred_fallthru
        _
    $region40: #{tpu_custom_call.1} parent=5 // pred_fallthru
      _
  $region6: #{tpu_custom_call.1} parent=0 // loop_footer
    %s13 = sadd.s32 1, %s9
  $region7: #{tpu_custom_call.1} parent=0 // loop_footer_branch
    %8 = sbr.rel target = $region3
  $region8: #{tpu_custom_call.1} parent=0 // loop_exit
    _

</llo_original>
